<compile_context>
chip_gen: v7x
topology: tpu7x:2x2x1
jax: 0.10.0
libtpu: 0.0.40
codegen_flags: <defaults>
</compile_context>

<pallas_src>
import functools

import jax
import jax.numpy as jnp
from jax.experimental import pallas as pl
from jax.experimental.pallas import tpu as pltpu

LANE = 128


def _round_up(x, m):
    return ((x + m - 1) // m) * m


# ------------------------------ Pallas kernel ------------------------------ #
def _fcn_kernel(x_ref, *refs, num_layers, shift_slices):
    """refs = (wt_0, ..., wt_{L-1}, shifts, o_ref).

    wt_l         : (F_l, F_{l+1}) bf16, BN scale already folded in
    shifts       : (1, sum_l F_{l+1}) f32, per-layer folded BN shift / bias,
                   concatenated along lanes (every F_{l+1} is a lane multiple)
    shift_slices : static (offset, size) per layer into `shifts`
    """
    o_ref = refs[-1]
    shifts_ref = refs[-2]
    h = x_ref[...]                                       # (TM, F0) bf16
    for l in range(num_layers):
        wt = refs[l][...]
        off, sz = shift_slices[l]
        shift = shifts_ref[:, off:off + sz]              # static lane-aligned slice
        acc = jnp.dot(h, wt, preferred_element_type=jnp.float32) + shift
        if l < num_layers - 1:
            # hidden layer: fused ReLU; Dropout is identity at inference.
            h = jnp.maximum(acc, 0.0).astype(jnp.bfloat16)
        else:
            o_ref[...] = acc.astype(o_ref.dtype)         # final logits (padded)


# --------------------------------- wrapper ---------------------------------- #
def fcn_fused(x_bf16, layers, n_classes, *, tm=128):
    """Fused FCN forward. Weights stay VMEM-resident across batch-row tiles.

    Returns (M, n_classes) f32 logits (padding removed here, not by caller).
    """
    num_layers = len(layers)
    M, F0 = x_bf16.shape
    n_pad = layers[-1][0].shape[1]

    # --- batch tiling: keep bf16 min (16,128) tiles, pad rows as needed ----- #
    tm_eff = min(tm, _round_up(M, 16))
    m_pad = _round_up(M, tm_eff)
    if m_pad != M:
        x_bf16 = jnp.zeros((m_pad, F0), x_bf16.dtype).at[:M].set(x_bf16)
    grid = (m_pad // tm_eff,)

    # --- flatten params: weights as-is, all shifts concatenated into one ----- #
    weights = [wt for wt, _ in layers]
    shift_slices = []
    off = 0
    for wt, _ in layers:
        sz = wt.shape[1]
        shift_slices.append((off, sz))
        off += sz
    shifts = jnp.concatenate([s for _, s in layers], axis=1)   # (1, sum_F) f32

    # --- VMEM budget guard (whole-network-resident strategy) ---------------- #
    weight_bytes = sum(w.size * w.dtype.itemsize for w in weights)
    act_bytes = 2 * tm_eff * max(F0, max(w.shape[1] for w in weights)) * 2
    est_vmem = weight_bytes + shifts.size * 4 + 2 * (tm_eff * F0 * 2) \
        + 2 * (tm_eff * n_pad * 4) + act_bytes
    default_scoped = 32 << 20
    vmem_limit = None
    if est_vmem > (default_scoped * 3) // 4:
        # Bump scoped VMEM explicitly; beyond ~this an N/K-tiled grid is needed
        # (v7x hits the wall at roughly half the hidden width of v5e/v6e).
        vmem_limit = min(int(est_vmem * 2), 100 << 20)

    # --- cost estimate for XLA scheduling ------------------------------------ #
    flops = 2 * m_pad * sum(w.shape[0] * w.shape[1] for w in weights)
    bytes_accessed = (x_bf16.size * 2 + weight_bytes + shifts.size * 4
                      + m_pad * n_pad * 4)
    cost = pl.CostEstimate(flops=flops, transcendentals=0,
                           bytes_accessed=bytes_accessed)

    kernel = functools.partial(_fcn_kernel, num_layers=num_layers,
                               shift_slices=tuple(shift_slices))

    # x / out tiled over the grid; weights & shifts use a constant index_map so
    # they are DMA'd once and reused across every grid step.
    in_specs = [pl.BlockSpec((tm_eff, F0), lambda i: (i, 0))]
    in_specs += [pl.BlockSpec(w.shape, lambda i: (0, 0)) for w in weights]
    in_specs += [pl.BlockSpec(shifts.shape, lambda i: (0, 0))]
    out_spec = pl.BlockSpec((tm_eff, n_pad), lambda i: (i, 0))

    out_padded = pl.pallas_call(
        kernel,
        out_shape=jax.ShapeDtypeStruct((m_pad, n_pad), jnp.float32),
        grid=grid,
        in_specs=in_specs,
        out_specs=out_spec,
        compiler_params=pltpu.CompilerParams(
            dimension_semantics=("parallel",),
            vmem_limit_bytes=vmem_limit),
        cost_estimate=cost,
    )(x_bf16, *weights, shifts)

    return out_padded[:M, :n_classes]


# -------------------------- parameter construction -------------------------- #
def init_fcn_params(key, in_features, hidden_sizes, n_classes, lane=LANE):
    """Deterministic synthetic params. Each entry: (Wt_folded_bf16, shift_f32).

    BN (eval) is folded into the weight matrix:
        scale = gamma / sqrt(running_var + eps)
        Wt_folded = W.T * scale
        shift = beta + (bias - running_mean) * scale
    Final Linear: shift = bias, no ReLU; its output dim is zero-padded to a
    lane multiple (fcn_fused slices back to n_classes).
    """
    eps = 1e-5
    layers = []
    prev = in_features
    for h in hidden_sizes:
        key, kw, kb, kg, kbeta, km, kv = jax.random.split(key, 7)
        bound = 1.0 / jnp.sqrt(prev)
        W = jax.random.uniform(kw, (h, prev), jnp.float32, -bound, bound)
        b = jax.random.uniform(kb, (h,), jnp.float32, -bound, bound)
        gamma = 1.0 + 0.1 * jax.random.normal(kg, (h,), jnp.float32)
        beta = 0.1 * jax.random.normal(kbeta, (h,), jnp.float32)
        r_mean = 0.1 * jax.random.normal(km, (h,), jnp.float32)
        r_var = 1.0 + 0.1 * jax.random.uniform(kv, (h,), jnp.float32)
        scale = gamma / jnp.sqrt(r_var + eps)
        shift = beta + (b - r_mean) * scale
        wt_folded = (W.T * scale[None, :]).astype(jnp.bfloat16)
        layers.append((wt_folded, shift[None, :].astype(jnp.float32)))
        prev = h
        # Dropout(p) is identity at inference time (no-op).

    # final classifier, zero-padded on the output dim to a lane multiple
    key, kw, kb = jax.random.split(key, 3)
    bound = 1.0 / jnp.sqrt(prev)
    W = jax.random.uniform(kw, (n_classes, prev), jnp.float32, -bound, bound)
    b = jax.random.uniform(kb, (n_classes,), jnp.float32, -bound, bound)
    n_pad = _round_up(n_classes, lane)
    Wt_p = jnp.zeros((prev, n_pad), jnp.float32).at[:, :n_classes].set(W.T)
    b_p = jnp.zeros((n_pad,), jnp.float32).at[:n_classes].set(b)
    layers.append((Wt_p.astype(jnp.bfloat16), b_p[None, :].astype(jnp.float32)))
    return layers


# --------------------------------- reference -------------------------------- #
def fcn_forward_ref(x_bf16, layers, n_classes):
    """Pure-JAX reference computing the identical (bf16-weight, f32-acc) math."""
    h = x_bf16
    out = None
    for i, (wt, shift) in enumerate(layers):
        acc = jnp.dot(h, wt, preferred_element_type=jnp.float32) + shift
        if i < len(layers) - 1:
            h = jnp.maximum(acc, 0.0).astype(jnp.bfloat16)
        else:
            out = acc
    return out[:, :n_classes]


# ----------------------------------- main ----------------------------------- #
if __name__ == "__main__":
    # module-default hidden sizes; batch raised to 256 so the MXU rows are
    # filled (TM=128) and the weight DMA is amortized across 2 grid steps.
    batch = 256
    in_features = 256
    hidden_sizes = [1024, 512, 256, 128]
    n_classes = 10

    key = jax.random.PRNGKey(0)
    key, kx = jax.random.split(key)
    x = jax.random.normal(kx, (batch, in_features), jnp.float32)
    x_bf16 = x.astype(jnp.bfloat16)

    layers = init_fcn_params(key, in_features, hidden_sizes, n_classes)

    out = fcn_fused(x_bf16, layers, n_classes, tm=128)
    out = jax.block_until_ready(out)

    ref = fcn_forward_ref(x_bf16, layers, n_classes)
    assert out.shape == (batch, n_classes)
    assert jnp.allclose(out, ref, atol=2e-3, rtol=2e-3), float(
        jnp.max(jnp.abs(out - ref)))

    print("KERNEL_OK")
</pallas_src>

<mosaic_0001>
module attributes {stable_mosaic.version = 11 : i64} {
  func.func @_fcn_kernel(%arg0: i32, %arg1: memref<128x256xbf16, #tpu.memory_space<vmem>>, %arg2: memref<256x1024xbf16, #tpu.memory_space<vmem>>, %arg3: memref<1024x512xbf16, #tpu.memory_space<vmem>>, %arg4: memref<512x256xbf16, #tpu.memory_space<vmem>>, %arg5: memref<256x128xbf16, #tpu.memory_space<vmem>>, %arg6: memref<128x128xbf16, #tpu.memory_space<vmem>>, %arg7: memref<1x2048xf32, #tpu.memory_space<vmem>>, %arg8: memref<128x128xf32, #tpu.memory_space<vmem>>) attributes {dimension_semantics = [#tpu.dimension_semantics<parallel>], iteration_bounds = array<i64: 2>, scalar_prefetch = 0 : i64, scratch_operands = 0 : i64, tpu.core_type = #tpu.core_type<tc>, window_params = [{transform_indices = @transform_0, window_bounds = array<i64: 128, 256>}, {pipeline_mode = #tpu.pipeline_mode<synchronous>, transform_indices = @transform_1, window_bounds = array<i64: 256, 1024>}, {pipeline_mode = #tpu.pipeline_mode<synchronous>, transform_indices = @transform_2, window_bounds = array<i64: 1024, 512>}, {pipeline_mode = #tpu.pipeline_mode<synchronous>, transform_indices = @transform_3, window_bounds = array<i64: 512, 256>}, {pipeline_mode = #tpu.pipeline_mode<synchronous>, transform_indices = @transform_4, window_bounds = array<i64: 256, 128>}, {pipeline_mode = #tpu.pipeline_mode<synchronous>, transform_indices = @transform_5, window_bounds = array<i64: 128, 128>}, {pipeline_mode = #tpu.pipeline_mode<synchronous>, transform_indices = @transform_6, window_bounds = array<i64: 1, 2048>}, {transform_indices = @transform_7, window_bounds = array<i64: 128, 128>}]} {
    %c0 = arith.constant 0 : index
    %c0_0 = arith.constant 0 : index
    %0 = vector.load %arg1[%c0, %c0_0] : memref<128x256xbf16, #tpu.memory_space<vmem>>, vector<128x256xbf16>
    %c0_1 = arith.constant 0 : index
    %c0_2 = arith.constant 0 : index
    %1 = vector.load %arg2[%c0_1, %c0_2] : memref<256x1024xbf16, #tpu.memory_space<vmem>>, vector<256x1024xbf16>
    %c0_3 = arith.constant 0 : index
    %c0_4 = arith.constant 0 : index
    %2 = vector.load %arg7[%c0_3, %c0_4] : memref<1x2048xf32, #tpu.memory_space<vmem>>, vector<1x1024xf32>
    %cst = arith.constant dense<0.000000e+00> : vector<128x1024xf32>
    %3 = tpu.matmul %0, %1, %cst {dimension_numbers = #tpu.dot_dimension_numbers<[1], [0], [0], [1], [0, 0, 1, 1], [], []>} : vector<128x256xbf16>, vector<256x1024xbf16>, vector<128x1024xf32> -> vector<128x1024xf32>
    %4 = vector.broadcast %2 : vector<1x1024xf32> to vector<128x1024xf32>
    %5 = arith.addf %3, %4 : vector<128x1024xf32>
    %cst_5 = arith.constant 0.000000e+00 : f32
    %6 = vector.broadcast %cst_5 : f32 to vector<128x1024xf32>
    %7 = arith.maximumf %5, %6 : vector<128x1024xf32>
    %8 = arith.truncf %7 : vector<128x1024xf32> to vector<128x1024xbf16>
    %c0_6 = arith.constant 0 : index
    %c0_7 = arith.constant 0 : index
    %9 = vector.load %arg3[%c0_6, %c0_7] : memref<1024x512xbf16, #tpu.memory_space<vmem>>, vector<1024x512xbf16>
    %c0_8 = arith.constant 0 : index
    %c1024 = arith.constant 1024 : index
    %10 = vector.load %arg7[%c0_8, %c1024] : memref<1x2048xf32, #tpu.memory_space<vmem>>, vector<1x512xf32>
    %cst_9 = arith.constant dense<0.000000e+00> : vector<128x512xf32>
    %11 = tpu.matmul %8, %9, %cst_9 {dimension_numbers = #tpu.dot_dimension_numbers<[1], [0], [0], [1], [0, 0, 1, 1], [], []>} : vector<128x1024xbf16>, vector<1024x512xbf16>, vector<128x512xf32> -> vector<128x512xf32>
    %12 = vector.broadcast %10 : vector<1x512xf32> to vector<128x512xf32>
    %13 = arith.addf %11, %12 : vector<128x512xf32>
    %cst_10 = arith.constant 0.000000e+00 : f32
    %14 = vector.broadcast %cst_10 : f32 to vector<128x512xf32>
    %15 = arith.maximumf %13, %14 : vector<128x512xf32>
    %16 = arith.truncf %15 : vector<128x512xf32> to vector<128x512xbf16>
    %c0_11 = arith.constant 0 : index
    %c0_12 = arith.constant 0 : index
    %17 = vector.load %arg4[%c0_11, %c0_12] : memref<512x256xbf16, #tpu.memory_space<vmem>>, vector<512x256xbf16>
    %c0_13 = arith.constant 0 : index
    %c1536 = arith.constant 1536 : index
    %18 = vector.load %arg7[%c0_13, %c1536] : memref<1x2048xf32, #tpu.memory_space<vmem>>, vector<1x256xf32>
    %cst_14 = arith.constant dense<0.000000e+00> : vector<128x256xf32>
    %19 = tpu.matmul %16, %17, %cst_14 {dimension_numbers = #tpu.dot_dimension_numbers<[1], [0], [0], [1], [0, 0, 1, 1], [], []>} : vector<128x512xbf16>, vector<512x256xbf16>, vector<128x256xf32> -> vector<128x256xf32>
    %20 = vector.broadcast %18 : vector<1x256xf32> to vector<128x256xf32>
    %21 = arith.addf %19, %20 : vector<128x256xf32>
    %cst_15 = arith.constant 0.000000e+00 : f32
    %22 = vector.broadcast %cst_15 : f32 to vector<128x256xf32>
    %23 = arith.maximumf %21, %22 : vector<128x256xf32>
    %24 = arith.truncf %23 : vector<128x256xf32> to vector<128x256xbf16>
    %c0_16 = arith.constant 0 : index
    %c0_17 = arith.constant 0 : index
    %25 = vector.load %arg5[%c0_16, %c0_17] : memref<256x128xbf16, #tpu.memory_space<vmem>>, vector<256x128xbf16>
    %c0_18 = arith.constant 0 : index
    %c1792 = arith.constant 1792 : index
    %26 = vector.load %arg7[%c0_18, %c1792] : memref<1x2048xf32, #tpu.memory_space<vmem>>, vector<1x128xf32>
    %cst_19 = arith.constant dense<0.000000e+00> : vector<128x128xf32>
    %27 = tpu.matmul %24, %25, %cst_19 {dimension_numbers = #tpu.dot_dimension_numbers<[1], [0], [0], [1], [0, 0, 1, 1], [], []>} : vector<128x256xbf16>, vector<256x128xbf16>, vector<128x128xf32> -> vector<128x128xf32>
    %28 = vector.broadcast %26 : vector<1x128xf32> to vector<128x128xf32>
    %29 = arith.addf %27, %28 : vector<128x128xf32>
    %cst_20 = arith.constant 0.000000e+00 : f32
    %30 = vector.broadcast %cst_20 : f32 to vector<128x128xf32>
    %31 = arith.maximumf %29, %30 : vector<128x128xf32>
    %32 = arith.truncf %31 : vector<128x128xf32> to vector<128x128xbf16>
    %c0_21 = arith.constant 0 : index
    %c0_22 = arith.constant 0 : index
    %33 = vector.load %arg6[%c0_21, %c0_22] : memref<128x128xbf16, #tpu.memory_space<vmem>>, vector<128x128xbf16>
    %c0_23 = arith.constant 0 : index
    %c1920 = arith.constant 1920 : index
    %34 = vector.load %arg7[%c0_23, %c1920] : memref<1x2048xf32, #tpu.memory_space<vmem>>, vector<1x128xf32>
    %cst_24 = arith.constant dense<0.000000e+00> : vector<128x128xf32>
    %35 = tpu.matmul %32, %33, %cst_24 {dimension_numbers = #tpu.dot_dimension_numbers<[1], [0], [0], [1], [0, 0, 1, 1], [], []>} : vector<128x128xbf16>, vector<128x128xbf16>, vector<128x128xf32> -> vector<128x128xf32>
    %36 = vector.broadcast %34 : vector<1x128xf32> to vector<128x128xf32>
    %37 = arith.addf %35, %36 : vector<128x128xf32>
    %c0_25 = arith.constant 0 : index
    %c0_26 = arith.constant 0 : index
    %38 = vector.load %arg8[%c0_25, %c0_26] : memref<128x128xf32, #tpu.memory_space<vmem>>, vector<128x128xf32>
    tpu.vector_store %arg8[%c0_25, %c0_26], %37 {strides = array<i32>} : memref<128x128xf32, #tpu.memory_space<vmem>>, vector<128x128xf32>,
    return
  }
  func.func @transform_0(%arg0: i32) -> (i32, i32) {
    %c0_i32 = arith.constant 0 : i32
    %c0_i32_0 = arith.constant 0 : i32
    return %arg0, %c0_i32 : i32, i32
  }
  func.func @transform_1(%arg0: i32) -> (i32, i32) {
    %c0_i32 = arith.constant 0 : i32
    %c0_i32_0 = arith.constant 0 : i32
    %c0_i32_1 = arith.constant 0 : i32
    return %c0_i32, %c0_i32_0 : i32, i32
  }
  func.func @transform_2(%arg0: i32) -> (i32, i32) {
    %c0_i32 = arith.constant 0 : i32
    %c0_i32_0 = arith.constant 0 : i32
    %c0_i32_1 = arith.constant 0 : i32
    return %c0_i32, %c0_i32_0 : i32, i32
  }
  func.func @transform_3(%arg0: i32) -> (i32, i32) {
    %c0_i32 = arith.constant 0 : i32
    %c0_i32_0 = arith.constant 0 : i32
    %c0_i32_1 = arith.constant 0 : i32
    return %c0_i32, %c0_i32_0 : i32, i32
  }
  func.func @transform_4(%arg0: i32) -> (i32, i32) {
    %c0_i32 = arith.constant 0 : i32
    %c0_i32_0 = arith.constant 0 : i32
    %c0_i32_1 = arith.constant 0 : i32
    return %c0_i32, %c0_i32_0 : i32, i32
  }
  func.func @transform_5(%arg0: i32) -> (i32, i32) {
    %c0_i32 = arith.constant 0 : i32
    %c0_i32_0 = arith.constant 0 : i32
    %c0_i32_1 = arith.constant 0 : i32
    return %c0_i32, %c0_i32_0 : i32, i32
  }
  func.func @transform_6(%arg0: i32) -> (i32, i32) {
    %c0_i32 = arith.constant 0 : i32
    %c0_i32_0 = arith.constant 0 : i32
    %c0_i32_1 = arith.constant 0 : i32
    return %c0_i32, %c0_i32_0 : i32, i32
  }
  func.func @transform_7(%arg0: i32) -> (i32, i32) {
    %c0_i32 = arith.constant 0 : i32
    %c0_i32_0 = arith.constant 0 : i32
    return %arg0, %c0_i32 : i32, i32
  }
}

</mosaic_0001>

<llo_original>
// kernel: tpu_custom_call.1
$region0: #{tpu_custom_call.1}
  #allocation0 [shape = 'u32[]', space=smem, size = 0x4, offset = 0x4, fixed_abs, tag = 'smem constant byte address 0x4 - core index']
  #allocation1 [shape = 'u32[144,128]{1,0:T(1,128)}', space=vmem, size = 0x12000, scoped, tag = 'internal scratch']
  %s0 = inlined_call_operand.hbm [shape: bf16[256,256], index: 0, kind: input, shape index: {}]
  %s1 = inlined_call_operand.hbm [shape: bf16[256,1024], index: 1, kind: input, shape index: {}]
  %s2 = inlined_call_operand.hbm [shape: bf16[1024,512], index: 2, kind: input, shape index: {}]
  %s3 = inlined_call_operand.hbm [shape: bf16[512,256], index: 3, kind: input, shape index: {}]
  %s4 = inlined_call_operand.hbm [shape: bf16[256,128], index: 4, kind: input, shape index: {}]
  %s5 = inlined_call_operand.hbm [shape: bf16[128,128], index: 5, kind: input, shape index: {}]
  %s6 = inlined_call_operand.vmem [shape: f32[1,2048], index: 6, kind: input, shape index: {}]
  %s7 = inlined_call_operand.hbm [shape: f32[256,128], index: 7, kind: output, shape index: {}]
  %s8 = sld [smem:[#allocation0]]
  $region85: #{tpu_custom_call.1} parent=0
    _
  %s10 = ssub.s32 1, %s8
  %s11 = scalar_select 0, %s10, %s8
  $region1: #{tpu_custom_call.1} parent=0
    #allocation2 [shape = 'u8[131072]{0}', space=vmem, size = 0x20000, scoped, tag = 'input window, operand 0']
    #allocation3 [shape = 's32[2]{0}', space=sflag, size = 0x8, scoped, tag = 'scoped memory for tpu_custom_call.1']
    #allocation4 [shape = 's32[2]{0}', space=sflag, size = 0x8, scoped, tag = 'scoped memory for tpu_custom_call.1']
    #allocation5 [shape = 'u8[524288]{0}', space=vmem, size = 0x80000, scoped, tag = 'input window, operand 1, single buffered']
    #allocation6 [shape = 's32[1]{0}', space=sflag, size = 0x4, scoped, tag = 'scoped memory for tpu_custom_call.1']
    #allocation7 [shape = 'u8[1048576]{0}', space=vmem, size = 0x100000, scoped, tag = 'input window, operand 2, single buffered']
    #allocation8 [shape = 'u8[262144]{0}', space=vmem, size = 0x40000, scoped, tag = 'input window, operand 3, single buffered']
    #allocation9 [shape = 's32[1]{0}', space=sflag, size = 0x4, scoped, tag = 'scoped memory for tpu_custom_call.1']
    #allocation10 [shape = 'u8[65536]{0}', space=vmem, size = 0x10000, scoped, tag = 'input window, operand 4, single buffered']
    #allocation11 [shape = 'u8[32768]{0}', space=vmem, size = 0x8000, scoped, tag = 'input window, operand 5, single buffered']
    #allocation12 [shape = 's32[1]{0}', space=sflag, size = 0x4, scoped, tag = 'scoped memory for tpu_custom_call.1']
    #allocation13 [shape = 'u8[131072]{0}', space=vmem, size = 0x20000, scoped, tag = 'output window, operand 0']
    %12 = vsyncpa [#allocation3], 0
    %s13 = scalar_lea.sflag [#allocation3], 1
    %14 = vsyncpa %s13, 0
    %15 = vsyncpa [#allocation6], 0
    %16 = vsyncpa [#allocation9], 0
    %17 = vsyncpa [#allocation12], 0
    %18 = vsyncpa [#allocation4], 0
    %s19 = scalar_lea.sflag [#allocation4], 1
    %20 = vsyncpa %s19, 0
    loop: start=0, step=1, limit=4
    $region2: #{tpu_custom_call.1} parent=1 // loop_pre_header
      _
    $region3: #{tpu_custom_call.1} parent=1 // loop_header
      %s22 = sphi 0, %s26
      %p23 = scmp.ge.s32.totalorder %s22, 4
      %s32 = sphi 0, %s34
      %s35 = sphi 0, %s32
      %s36 = sphi 0, %s35
      %s52 = sphi 0, %s36
      %s56 = sphi 0, %s56
      %s58 = sphi 0, %s56
      %s59 = sphi 0, %s58
      %s73 = sphi 0, %s59
      %s77 = sphi 0, %s77
      %s79 = sphi 0, %s77
      %s80 = sphi 0, %s79
      %s94 = sphi 0, %s80
      %s98 = sphi 0, %s98
      %s100 = sphi 0, %s98
      %s101 = sphi 0, %s100
      %s115 = sphi 0, %s101
      %s119 = sphi 0, %s119
      %s121 = sphi 0, %s119
      %s122 = sphi 0, %s121
      %s136 = sphi 0, %s122
      %s140 = sphi 0, %s140
      %s142 = sphi 0, %s140
      %s143 = sphi 0, %s142
      %s157 = sphi 0, %s143
      %s161 = sphi 0, %s161
      %s163 = sphi 0, %s161
      %s164 = sphi 0, %s163
      %s178 = sphi 0, %s164
      %s184 = sphi 0, %s186
      %s187 = sphi 0, %s184
      %s188 = sphi 0, %s187
      %s204 = sphi 0, %s188
    $region4: #{tpu_custom_call.1} parent=1 // loop_header_branch
      %25 = sbr.rel (%p23) target = $region8
    $region5: #{tpu_custom_call.1} parent=1 // loop_body
      %s27 = ssub.s32 %s22, 1
      %s28 = ssub.s32 %s22, 2
      %s29 = sadd.s32 %s22, 1
      %s30 = ssub.s32 %s22, %s29
      %p31 = scmp.eq.s32.totalorder %s30, 0
      %s33 = sadd.s32 %s32, 1
      %s34 = scalar_select %p31, %s32, %s33
      %p37 = pneg %p31
      %p38 = scmp.eq.s32.totalorder %s22, 1
      %p39 = por %p37, %p38
      %p40 = scmp.ne.s32.totalorder %s32, %s35
      %p41 = scmp.eq.s32.totalorder %s22, 0
      %p42 = por %p40, %p41
      %p43 = scmp.ne.s32.totalorder %s32, %s35
      %p44 = scmp.eq.s32.totalorder %s27, 1
      %p45 = por %p43, %p44
      %p46 = scmp.ne.s32.totalorder %s35, %s36
      %p47 = scmp.eq.s32.totalorder %s27, 0
      %p48 = por %p46, %p47
      %p49 = scmp.ne.s32.totalorder %s35, %s36
      %p50 = scmp.eq.s32.totalorder %s28, 1
      %p51 = por %p49, %p50
      %p53 = scmp.ne.s32.totalorder %s36, %s52
      %p54 = scmp.eq.s32.totalorder %s28, 0
      %p55 = por %p53, %p54
      %s57 = sadd.s32 %s56, 1
      %p60 = scmp.eq.s32.totalorder %s22, 1
      %p61 = scmp.ne.s32.totalorder %s56, %s58
      %p62 = scmp.eq.s32.totalorder %s22, 0
      %p63 = por %p61, %p62
      %p64 = scmp.ne.s32.totalorder %s56, %s58
      %p65 = scmp.eq.s32.totalorder %s27, 1
      %p66 = por %p64, %p65
      %p67 = scmp.ne.s32.totalorder %s58, %s59
      %p68 = scmp.eq.s32.totalorder %s27, 0
      %p69 = por %p67, %p68
      %p70 = scmp.ne.s32.totalorder %s58, %s59
      %p71 = scmp.eq.s32.totalorder %s28, 1
      %p72 = por %p70, %p71
      %p74 = scmp.ne.s32.totalorder %s59, %s73
      %p75 = scmp.eq.s32.totalorder %s28, 0
      %p76 = por %p74, %p75
      %s78 = sadd.s32 %s77, 1
      %p81 = scmp.eq.s32.totalorder %s22, 1
      %p82 = scmp.ne.s32.totalorder %s77, %s79
      %p83 = scmp.eq.s32.totalorder %s22, 0
      %p84 = por %p82, %p83
      %p85 = scmp.ne.s32.totalorder %s77, %s79
      %p86 = scmp.eq.s32.totalorder %s27, 1
      %p87 = por %p85, %p86
      %p88 = scmp.ne.s32.totalorder %s79, %s80
      %p89 = scmp.eq.s32.totalorder %s27, 0
      %p90 = por %p88, %p89
      %p91 = scmp.ne.s32.totalorder %s79, %s80
      %p92 = scmp.eq.s32.totalorder %s28, 1
      %p93 = por %p91, %p92
      %p95 = scmp.ne.s32.totalorder %s80, %s94
      %p96 = scmp.eq.s32.totalorder %s28, 0
      %p97 = por %p95, %p96
      %s99 = sadd.s32 %s98, 1
      %p102 = scmp.eq.s32.totalorder %s22, 1
      %p103 = scmp.ne.s32.totalorder %s98, %s100
      %p104 = scmp.eq.s32.totalorder %s22, 0
      %p105 = por %p103, %p104
      %p106 = scmp.ne.s32.totalorder %s98, %s100
      %p107 = scmp.eq.s32.totalorder %s27, 1
      %p108 = por %p106, %p107
      %p109 = scmp.ne.s32.totalorder %s100, %s101
      %p110 = scmp.eq.s32.totalorder %s27, 0
      %p111 = por %p109, %p110
      %p112 = scmp.ne.s32.totalorder %s100, %s101
      %p113 = scmp.eq.s32.totalorder %s28, 1
      %p114 = por %p112, %p113
      %p116 = scmp.ne.s32.totalorder %s101, %s115
      %p117 = scmp.eq.s32.totalorder %s28, 0
      %p118 = por %p116, %p117
      %s120 = sadd.s32 %s119, 1
      %p123 = scmp.eq.s32.totalorder %s22, 1
      %p124 = scmp.ne.s32.totalorder %s119, %s121
      %p125 = scmp.eq.s32.totalorder %s22, 0
      %p126 = por %p124, %p125
      %p127 = scmp.ne.s32.totalorder %s119, %s121
      %p128 = scmp.eq.s32.totalorder %s27, 1
      %p129 = por %p127, %p128
      %p130 = scmp.ne.s32.totalorder %s121, %s122
      %p131 = scmp.eq.s32.totalorder %s27, 0
      %p132 = por %p130, %p131
      %p133 = scmp.ne.s32.totalorder %s121, %s122
      %p134 = scmp.eq.s32.totalorder %s28, 1
      %p135 = por %p133, %p134
      %p137 = scmp.ne.s32.totalorder %s122, %s136
      %p138 = scmp.eq.s32.totalorder %s28, 0
      %p139 = por %p137, %p138
      %s141 = sadd.s32 %s140, 1
      %p144 = scmp.eq.s32.totalorder %s22, 1
      %p145 = scmp.ne.s32.totalorder %s140, %s142
      %p146 = scmp.eq.s32.totalorder %s22, 0
      %p147 = por %p145, %p146
      %p148 = scmp.ne.s32.totalorder %s140, %s142
      %p149 = scmp.eq.s32.totalorder %s27, 1
      %p150 = por %p148, %p149
      %p151 = scmp.ne.s32.totalorder %s142, %s143
      %p152 = scmp.eq.s32.totalorder %s27, 0
      %p153 = por %p151, %p152
      %p154 = scmp.ne.s32.totalorder %s142, %s143
      %p155 = scmp.eq.s32.totalorder %s28, 1
      %p156 = por %p154, %p155
      %p158 = scmp.ne.s32.totalorder %s143, %s157
      %p159 = scmp.eq.s32.totalorder %s28, 0
      %p160 = por %p158, %p159
      %s162 = sadd.s32 %s161, 1
      %p165 = scmp.eq.s32.totalorder %s22, 1
      %p166 = scmp.ne.s32.totalorder %s161, %s163
      %p167 = scmp.eq.s32.totalorder %s22, 0
      %p168 = por %p166, %p167
      %p169 = scmp.ne.s32.totalorder %s161, %s163
      %p170 = scmp.eq.s32.totalorder %s27, 1
      %p171 = por %p169, %p170
      %p172 = scmp.ne.s32.totalorder %s163, %s164
      %p173 = scmp.eq.s32.totalorder %s27, 0
      %p174 = por %p172, %p173
      %p175 = scmp.ne.s32.totalorder %s163, %s164
      %p176 = scmp.eq.s32.totalorder %s28, 1
      %p177 = por %p175, %p176
      %p179 = scmp.ne.s32.totalorder %s164, %s178
      %p180 = scmp.eq.s32.totalorder %s28, 0
      %p181 = por %p179, %p180
      %s182 = ssub.s32 %s22, %s29
      %p183 = scmp.eq.s32.totalorder %s182, 0
      %s185 = sadd.s32 %s184, 1
      %s186 = scalar_select %p183, %s184, %s185
      %p189 = pneg %p183
      %p190 = scmp.eq.s32.totalorder %s22, 1
      %p191 = por %p189, %p190
      %p192 = scmp.ne.s32.totalorder %s184, %s187
      %p193 = scmp.eq.s32.totalorder %s22, 0
      %p194 = por %p192, %p193
      %p195 = scmp.ne.s32.totalorder %s184, %s187
      %p196 = scmp.eq.s32.totalorder %s27, 1
      %p197 = por %p195, %p196
      %p198 = scmp.ne.s32.totalorder %s187, %s188
      %p199 = scmp.eq.s32.totalorder %s27, 0
      %p200 = por %p198, %p199
      %p201 = scmp.ne.s32.totalorder %s187, %s188
      %p202 = scmp.eq.s32.totalorder %s28, 1
      %p203 = por %p201, %p202
      %p205 = scmp.ne.s32.totalorder %s188, %s204
      %p206 = scmp.eq.s32.totalorder %s28, 0
      %p207 = por %p205, %p206
      %p208 = scmp.le.s32.totalorder 1, %s22
      %p209 = scmp.lt.s32.totalorder %s22, 3
      %p210 = pnand %p208, %p209
      %p211 = pneg %p210
      // Predicated region
      $region9: #{tpu_custom_call.1} parent=5 // pred_check
        _
      $region10: #{tpu_custom_call.1} parent=5 // pred_check_branch
        %213 = sbr.rel (%p210) target = $region12
      $region11: #{tpu_custom_call.1} parent=5 // pred_region
        %s214 = ssub.s32 %s22, 1
        // Predicated region
        $region13: #{tpu_custom_call.1} parent=11 // pred_check
          %p215 = pneg %p69
        $region14: #{tpu_custom_call.1} parent=11 // pred_check_branch
          %217 = sbr.rel (%p215) target = $region16
        $region15: #{tpu_custom_call.1} parent=11 // pred_region
          %s219 = ssub.s32 16384, 16384
          %220 = vsyncadd [#allocation6], %s219
          %s221 = sshll.u32 [#allocation5], 4
          %s222 = int_to_ptr.vmem [resolvable:$true] %s221
          %227 = dma.hbm_to_vmem [thread:$0]  %s1, 16384, %s222, [#allocation6], 512, 512, 32
        $region16: #{tpu_custom_call.1} parent=11 // pred_fallthru
          _
        // Predicated region
        $region17: #{tpu_custom_call.1} parent=11 // pred_check
          %p228 = pneg %p90
        $region18: #{tpu_custom_call.1} parent=11 // pred_check_branch
          %230 = sbr.rel (%p228) target = $region20
        $region19: #{tpu_custom_call.1} parent=11 // pred_region
          %s232 = ssub.s32 32768, 32768
          %233 = vsyncadd [#allocation6], %s232
          %s234 = sshll.u32 [#allocation7], 4
          %s235 = int_to_ptr.vmem [resolvable:$true] %s234
          %240 = dma.hbm_to_vmem [thread:$0]  %s2, 32768, %s235, [#allocation6], 256, 256, 16
        $region20: #{tpu_custom_call.1} parent=11 // pred_fallthru
          _
        // Predicated region
        $region21: #{tpu_custom_call.1} parent=11 // pred_check
          %p241 = pneg %p111
        $region22: #{tpu_custom_call.1} parent=11 // pred_check_branch
          %243 = sbr.rel (%p241) target = $region24
        $region23: #{tpu_custom_call.1} parent=11 // pred_region
          %s245 = ssub.s32 8192, 8192
          %246 = vsyncadd [#allocation9], %s245
          %s247 = sshll.u32 [#allocation8], 4
          %s248 = int_to_ptr.vmem [resolvable:$true] %s247
          %253 = dma.hbm_to_vmem [thread:$0]  %s3, 8192, %s248, [#allocation9], 128, 128, 8
        $region24: #{tpu_custom_call.1} parent=11 // pred_fallthru
          _
        // Predicated region
        $region25: #{tpu_custom_call.1} parent=11 // pred_check
          %p254 = pneg %p132
        $region26: #{tpu_custom_call.1} parent=11 // pred_check_branch
          %256 = sbr.rel (%p254) target = $region28
        $region27: #{tpu_custom_call.1} parent=11 // pred_region
          %s258 = ssub.s32 2048, 2048
          %259 = vsyncadd [#allocation9], %s258
          %s260 = sshll.u32 [#allocation10], 4
          %s261 = int_to_ptr.vmem [resolvable:$true] %s260
          %266 = dma.hbm_to_vmem [thread:$0]  %s4, 2048, %s261, [#allocation9], 64, 64, 4
        $region28: #{tpu_custom_call.1} parent=11 // pred_fallthru
          _
        // Predicated region
        $region29: #{tpu_custom_call.1} parent=11 // pred_check
          %p267 = pneg %p153
        $region30: #{tpu_custom_call.1} parent=11 // pred_check_branch
          %269 = sbr.rel (%p267) target = $region32
        $region31: #{tpu_custom_call.1} parent=11 // pred_region
          %s271 = ssub.s32 1024, 1024
          %272 = vsyncadd [#allocation12], %s271
          %s273 = sshll.u32 [#allocation11], 4
          %s274 = int_to_ptr.vmem [resolvable:$true] %s273
          %279 = dma.hbm_to_vmem [thread:$0]  %s5, 1024, %s274, [#allocation12], 64, 64, 4
        $region32: #{tpu_custom_call.1} parent=11 // pred_fallthru
          _
        // Predicated region
        $region33: #{tpu_custom_call.1} parent=11 // pred_check
          %p280 = pneg %p174
        $region34: #{tpu_custom_call.1} parent=11 // pred_check_branch
          %282 = sbr.rel (%p280) target = $region36
        $region35: #{tpu_custom_call.1} parent=11 // pred_region
          _
        $region36: #{tpu_custom_call.1} parent=11 // pred_fallthru
          _
      $region12: #{tpu_custom_call.1} parent=5 // pred_fallthru
        _
      %p283 = scmp.lt.s32.totalorder %s22, 2
      // Predicated region
      $region37: #{tpu_custom_call.1} parent=5 // pred_check
        %p284 = pneg %p283
      $region38: #{tpu_custom_call.1} parent=5 // pred_check_branch
        %286 = sbr.rel (%p284) target = $region40
      $region39: #{tpu_custom_call.1} parent=5 // pred_region
        // Predicated region
        $region41: #{tpu_custom_call.1} parent=39 // pred_check
          %p287 = pneg %p42
        $region42: #{tpu_custom_call.1} parent=39 // pred_check_branch
          %289 = sbr.rel (%p287) target = $region44
        $region43: #{tpu_custom_call.1} parent=39 // pred_region
          %s290 = sand.u32 %s32, 1
          %s291 = scalar_lea.sflag [#allocation3], %s290
          %s292 = sand.u32 %s32, 1
          %s293 = smul.addr %s292, 128
          %s294 = scalar_lea.vmem [#allocation2], %s293
          %s295 = smul.u32 16, %s22
          %s297 = ssub.s32 2048, 2048
          %298 = vsyncadd %s291, %s297
          %s299 = smul.addr %s295, 2
          %s300 = smul.addr %s299, 64
          %s301 = scalar_lea.hbm %s0, %s300
          %s302 = sshll.u32 %s294, 4
          %s303 = int_to_ptr.vmem [resolvable:$true] %s302
          %308 = dma.hbm_to_vmem [thread:$0]  %s301, 2048, %s303, %s291, 128, 128, 8
        $region44: #{tpu_custom_call.1} parent=39 // pred_fallthru
          _
      $region40: #{tpu_custom_call.1} parent=5 // pred_fallthru
        _
      %p309 = scmp.le.s32.totalorder 1, %s22
      %p310 = scmp.lt.s32.totalorder %s22, 3
      %p311 = pnand %p309, %p310
      %p312 = pneg %p311
      // Predicated region
      $region45: #{tpu_custom_call.1} parent=5 // pred_check
        _
      $region46: #{tpu_custom_call.1} parent=5 // pred_check_branch
        %314 = sbr.rel (%p311) target = $region48
      $region47: #{tpu_custom_call.1} parent=5 // pred_region
        %s315 = ssub.s32 %s22, 1
        %s316 = sand.u32 %s35, 1
        %s317 = scalar_lea.sflag [#allocation3], %s316
        %s318 = sand.u32 %s35, 1
        %s319 = smul.addr %s318, 128
        %s320 = scalar_lea.vmem [#allocation2], %s319
        // Predicated region
        $region49: #{tpu_custom_call.1} parent=47 // pred_check
          %p321 = pneg %p48
        $region50: #{tpu_custom_call.1} parent=47 // pred_check_branch
          %323 = sbr.rel (%p321) target = $region52
        $region51: #{tpu_custom_call.1} parent=47 // pred_region
          %324 = dma.done %s317, 2048
        $region52: #{tpu_custom_call.1} parent=47 // pred_fallthru
          _
        // Predicated region
        $region53: #{tpu_custom_call.1} parent=47 // pred_check
          %p325 = pneg %p69
        $region54: #{tpu_custom_call.1} parent=47 // pred_check_branch
          %327 = sbr.rel (%p325) target = $region56
        $region55: #{tpu_custom_call.1} parent=47 // pred_region
          %328 = dma.done [#allocation6], 16384
        $region56: #{tpu_custom_call.1} parent=47 // pred_fallthru
          _
        // Predicated region
        $region57: #{tpu_custom_call.1} parent=47 // pred_check
          %p329 = pneg %p90
        $region58: #{tpu_custom_call.1} parent=47 // pred_check_branch
          %331 = sbr.rel (%p329) target = $region60
        $region59: #{tpu_custom_call.1} parent=47 // pred_region
          %332 = dma.done [#allocation6], 32768
        $region60: #{tpu_custom_call.1} parent=47 // pred_fallthru
          _
        // Predicated region
        $region61: #{tpu_custom_call.1} parent=47 // pred_check
          %p333 = pneg %p111
        $region62: #{tpu_custom_call.1} parent=47 // pred_check_branch
          %335 = sbr.rel (%p333) target = $region64
        $region63: #{tpu_custom_call.1} parent=47 // pred_region
          %336 = dma.done [#allocation9], 8192
        $region64: #{tpu_custom_call.1} parent=47 // pred_fallthru
          _
        // Predicated region
        $region65: #{tpu_custom_call.1} parent=47 // pred_check
          %p337 = pneg %p132
        $region66: #{tpu_custom_call.1} parent=47 // pred_check_branch
          %339 = sbr.rel (%p337) target = $region68
        $region67: #{tpu_custom_call.1} parent=47 // pred_region
          %340 = dma.done [#allocation9], 2048
        $region68: #{tpu_custom_call.1} parent=47 // pred_fallthru
          _
        // Predicated region
        $region69: #{tpu_custom_call.1} parent=47 // pred_check
          %p341 = pneg %p153
        $region70: #{tpu_custom_call.1} parent=47 // pred_check_branch
          %343 = sbr.rel (%p341) target = $region72
        $region71: #{tpu_custom_call.1} parent=47 // pred_region
          %344 = dma.done [#allocation12], 1024
        $region72: #{tpu_custom_call.1} parent=47 // pred_fallthru
          _
        %s345 = sand.u32 %s35, 1
        %s346 = scalar_lea.sflag [#allocation3], %s345
        %s347 = sand.u32 %s35, 1
        %s348 = smul.addr %s347, 128
        %s349 = scalar_lea.vmem [#allocation2], %s348
        %p350 = pneg %p48
        %p351 = pneg %p45
        %p352 = pneg %p69
        %p353 = pneg %p66
        %p354 = pneg %p90
        %p355 = pneg %p87
        %p356 = pneg %p111
        %p357 = pneg %p108
        %p358 = pneg %p132
        %p359 = pneg %p129
        %p360 = pneg %p153
        %p361 = pneg %p150
        %p362 = pneg %p174
        %p363 = pneg %p171
        %p364 = pneg %p200
        %p365 = pneg %p197
        %s366 = sand.u32 %s187, 1
        %s367 = scalar_lea.sflag [#allocation4], %s366
        %s368 = sand.u32 %s187, 1
        %s369 = smul.addr %s368, 128
        %s370 = scalar_lea.vmem [#allocation13], %s369
        %s371 = smul.u32 16, %s27
        %s372 = smul.u32 16, %s27
        %v374 = vld [vmem:[%s320] sm:$0xff]
        %v375 = vld [vmem:[%s320 + $0x8] sm:$0xff]
        %v376 = vld [vmem:[%s320 + $0x10] sm:$0xff]
        %v377 = vld [vmem:[%s320 + $0x18] sm:$0xff]
        %v378 = vld [vmem:[%s320 + $0x20] sm:$0xff]
        %v379 = vld [vmem:[%s320 + $0x28] sm:$0xff]
        %v380 = vld [vmem:[%s320 + $0x30] sm:$0xff]
        %v381 = vld [vmem:[%s320 + $0x38] sm:$0xff]
        %v382 = vld [vmem:[%s320 + $0x40] sm:$0xff]
        %v383 = vld [vmem:[%s320 + $0x48] sm:$0xff]
        %v384 = vld [vmem:[%s320 + $0x50] sm:$0xff]
        %v385 = vld [vmem:[%s320 + $0x58] sm:$0xff]
        %v386 = vld [vmem:[%s320 + $0x60] sm:$0xff]
        %v387 = vld [vmem:[%s320 + $0x68] sm:$0xff]
        %v388 = vld [vmem:[%s320 + $0x70] sm:$0xff]
        %v389 = vld [vmem:[%s320 + $0x78] sm:$0xff]
        %v390 = vld [vmem:[#allocation5] sm:$0xff]
        %v391 = vld [vmem:[#allocation5 + $0x8] sm:$0xff]
        %v392 = vld [vmem:[#allocation5 + $0x10] sm:$0xff]
        %v393 = vld [vmem:[#allocation5 + $0x18] sm:$0xff]
        %v394 = vld [vmem:[#allocation5 + $0x20] sm:$0xff]
        %v395 = vld [vmem:[#allocation5 + $0x28] sm:$0xff]
        %v396 = vld [vmem:[#allocation5 + $0x30] sm:$0xff]
        %v397 = vld [vmem:[#allocation5 + $0x38] sm:$0xff]
        %v398 = vld [vmem:[#allocation5 + $0x40] sm:$0xff]
        %v399 = vld [vmem:[#allocation5 + $0x48] sm:$0xff]
        %v400 = vld [vmem:[#allocation5 + $0x50] sm:$0xff]
        %v401 = vld [vmem:[#allocation5 + $0x58] sm:$0xff]
        %v402 = vld [vmem:[#allocation5 + $0x60] sm:$0xff]
        %v403 = vld [vmem:[#allocation5 + $0x68] sm:$0xff]
        %v404 = vld [vmem:[#allocation5 + $0x70] sm:$0xff]
        %v405 = vld [vmem:[#allocation5 + $0x78] sm:$0xff]
        %v406 = vld [vmem:[#allocation5 + $0x80] sm:$0xff]
        %v407 = vld [vmem:[#allocation5 + $0x88] sm:$0xff]
        %v408 = vld [vmem:[#allocation5 + $0x90] sm:$0xff]
        %v409 = vld [vmem:[#allocation5 + $0x98] sm:$0xff]
        %v410 = vld [vmem:[#allocation5 + $0xa0] sm:$0xff]
        %v411 = vld [vmem:[#allocation5 + $0xa8] sm:$0xff]
        %v412 = vld [vmem:[#allocation5 + $0xb0] sm:$0xff]
        %v413 = vld [vmem:[#allocation5 + $0xb8] sm:$0xff]
        %v414 = vld [vmem:[#allocation5 + $0xc0] sm:$0xff]
        %v415 = vld [vmem:[#allocation5 + $0xc8] sm:$0xff]
        %v416 = vld [vmem:[#allocation5 + $0xd0] sm:$0xff]
        %v417 = vld [vmem:[#allocation5 + $0xd8] sm:$0xff]
        %v418 = vld [vmem:[#allocation5 + $0xe0] sm:$0xff]
        %v419 = vld [vmem:[#allocation5 + $0xe8] sm:$0xff]
        %v420 = vld [vmem:[#allocation5 + $0xf0] sm:$0xff]
        %v421 = vld [vmem:[#allocation5 + $0xf8] sm:$0xff]
        %v422 = vld [vmem:[#allocation5 + $0x100] sm:$0xff]
        %v423 = vld [vmem:[#allocation5 + $0x108] sm:$0xff]
        %v424 = vld [vmem:[#allocation5 + $0x110] sm:$0xff]
        %v425 = vld [vmem:[#allocation5 + $0x118] sm:$0xff]
        %v426 = vld [vmem:[#allocation5 + $0x120] sm:$0xff]
        %v427 = vld [vmem:[#allocation5 + $0x128] sm:$0xff]
        %v428 = vld [vmem:[#allocation5 + $0x130] sm:$0xff]
        %v429 = vld [vmem:[#allocation5 + $0x138] sm:$0xff]
        %v430 = vld [vmem:[#allocation5 + $0x140] sm:$0xff]
        %v431 = vld [vmem:[#allocation5 + $0x148] sm:$0xff]
        %v432 = vld [vmem:[#allocation5 + $0x150] sm:$0xff]
        %v433 = vld [vmem:[#allocation5 + $0x158] sm:$0xff]
        %v434 = vld [vmem:[#allocation5 + $0x160] sm:$0xff]
        %v435 = vld [vmem:[#allocation5 + $0x168] sm:$0xff]
        %v436 = vld [vmem:[#allocation5 + $0x170] sm:$0xff]
        %v437 = vld [vmem:[#allocation5 + $0x178] sm:$0xff]
        %v438 = vld [vmem:[#allocation5 + $0x180] sm:$0xff]
        %v439 = vld [vmem:[#allocation5 + $0x188] sm:$0xff]
        %v440 = vld [vmem:[#allocation5 + $0x190] sm:$0xff]
        %v441 = vld [vmem:[#allocation5 + $0x198] sm:$0xff]
        %v442 = vld [vmem:[#allocation5 + $0x1a0] sm:$0xff]
        %v443 = vld [vmem:[#allocation5 + $0x1a8] sm:$0xff]
        %v444 = vld [vmem:[#allocation5 + $0x1b0] sm:$0xff]
        %v445 = vld [vmem:[#allocation5 + $0x1b8] sm:$0xff]
        %v446 = vld [vmem:[#allocation5 + $0x1c0] sm:$0xff]
        %v447 = vld [vmem:[#allocation5 + $0x1c8] sm:$0xff]
        %v448 = vld [vmem:[#allocation5 + $0x1d0] sm:$0xff]
        %v449 = vld [vmem:[#allocation5 + $0x1d8] sm:$0xff]
        %v450 = vld [vmem:[#allocation5 + $0x1e0] sm:$0xff]
        %v451 = vld [vmem:[#allocation5 + $0x1e8] sm:$0xff]
        %v452 = vld [vmem:[#allocation5 + $0x1f0] sm:$0xff]
        %v453 = vld [vmem:[#allocation5 + $0x1f8] sm:$0xff]
        %v454 = vld [vmem:[#allocation5 + $0x200] sm:$0xff]
        %v455 = vld [vmem:[#allocation5 + $0x208] sm:$0xff]
        %v456 = vld [vmem:[#allocation5 + $0x210] sm:$0xff]
        %v457 = vld [vmem:[#allocation5 + $0x218] sm:$0xff]
        %v458 = vld [vmem:[#allocation5 + $0x220] sm:$0xff]
        %v459 = vld [vmem:[#allocation5 + $0x228] sm:$0xff]
        %v460 = vld [vmem:[#allocation5 + $0x230] sm:$0xff]
        %v461 = vld [vmem:[#allocation5 + $0x238] sm:$0xff]
        %v462 = vld [vmem:[#allocation5 + $0x240] sm:$0xff]
        %v463 = vld [vmem:[#allocation5 + $0x248] sm:$0xff]
        %v464 = vld [vmem:[#allocation5 + $0x250] sm:$0xff]
        %v465 = vld [vmem:[#allocation5 + $0x258] sm:$0xff]
        %v466 = vld [vmem:[#allocation5 + $0x260] sm:$0xff]
        %v467 = vld [vmem:[#allocation5 + $0x268] sm:$0xff]
        %v468 = vld [vmem:[#allocation5 + $0x270] sm:$0xff]
        %v469 = vld [vmem:[#allocation5 + $0x278] sm:$0xff]
        %v470 = vld [vmem:[#allocation5 + $0x280] sm:$0xff]
        %v471 = vld [vmem:[#allocation5 + $0x288] sm:$0xff]
        %v472 = vld [vmem:[#allocation5 + $0x290] sm:$0xff]
        %v473 = vld [vmem:[#allocation5 + $0x298] sm:$0xff]
        %v474 = vld [vmem:[#allocation5 + $0x2a0] sm:$0xff]
        %v475 = vld [vmem:[#allocation5 + $0x2a8] sm:$0xff]
        %v476 = vld [vmem:[#allocation5 + $0x2b0] sm:$0xff]
        %v477 = vld [vmem:[#allocation5 + $0x2b8] sm:$0xff]
        %v478 = vld [vmem:[#allocation5 + $0x2c0] sm:$0xff]
        %v479 = vld [vmem:[#allocation5 + $0x2c8] sm:$0xff]
        %v480 = vld [vmem:[#allocation5 + $0x2d0] sm:$0xff]
        %v481 = vld [vmem:[#allocation5 + $0x2d8] sm:$0xff]
        %v482 = vld [vmem:[#allocation5 + $0x2e0] sm:$0xff]
        %v483 = vld [vmem:[#allocation5 + $0x2e8] sm:$0xff]
        %v484 = vld [vmem:[#allocation5 + $0x2f0] sm:$0xff]
        %v485 = vld [vmem:[#allocation5 + $0x2f8] sm:$0xff]
        %v486 = vld [vmem:[#allocation5 + $0x300] sm:$0xff]
        %v487 = vld [vmem:[#allocation5 + $0x308] sm:$0xff]
        %v488 = vld [vmem:[#allocation5 + $0x310] sm:$0xff]
        %v489 = vld [vmem:[#allocation5 + $0x318] sm:$0xff]
        %v490 = vld [vmem:[#allocation5 + $0x320] sm:$0xff]
        %v491 = vld [vmem:[#allocation5 + $0x328] sm:$0xff]
        %v492 = vld [vmem:[#allocation5 + $0x330] sm:$0xff]
        %v493 = vld [vmem:[#allocation5 + $0x338] sm:$0xff]
        %v494 = vld [vmem:[#allocation5 + $0x340] sm:$0xff]
        %v495 = vld [vmem:[#allocation5 + $0x348] sm:$0xff]
        %v496 = vld [vmem:[#allocation5 + $0x350] sm:$0xff]
        %v497 = vld [vmem:[#allocation5 + $0x358] sm:$0xff]
        %v498 = vld [vmem:[#allocation5 + $0x360] sm:$0xff]
        %v499 = vld [vmem:[#allocation5 + $0x368] sm:$0xff]
        %v500 = vld [vmem:[#allocation5 + $0x370] sm:$0xff]
        %v501 = vld [vmem:[#allocation5 + $0x378] sm:$0xff]
        %v502 = vld [vmem:[#allocation5 + $0x380] sm:$0xff]
        %v503 = vld [vmem:[#allocation5 + $0x388] sm:$0xff]
        %v504 = vld [vmem:[#allocation5 + $0x390] sm:$0xff]
        %v505 = vld [vmem:[#allocation5 + $0x398] sm:$0xff]
        %v506 = vld [vmem:[#allocation5 + $0x3a0] sm:$0xff]
        %v507 = vld [vmem:[#allocation5 + $0x3a8] sm:$0xff]
        %v508 = vld [vmem:[#allocation5 + $0x3b0] sm:$0xff]
        %v509 = vld [vmem:[#allocation5 + $0x3b8] sm:$0xff]
        %v510 = vld [vmem:[#allocation5 + $0x3c0] sm:$0xff]
        %v511 = vld [vmem:[#allocation5 + $0x3c8] sm:$0xff]
        %v512 = vld [vmem:[#allocation5 + $0x3d0] sm:$0xff]
        %v513 = vld [vmem:[#allocation5 + $0x3d8] sm:$0xff]
        %v514 = vld [vmem:[#allocation5 + $0x3e0] sm:$0xff]
        %v515 = vld [vmem:[#allocation5 + $0x3e8] sm:$0xff]
        %v516 = vld [vmem:[#allocation5 + $0x3f0] sm:$0xff]
        %v517 = vld [vmem:[#allocation5 + $0x3f8] sm:$0xff]
        %v518 = vld [vmem:[%s6] sm:$0xff]
        %v520 = vlaneseq
        %v521 = vshrl.u32 %v520, 7
        %v522 = vsub.s32 0, %v521
        %v523 = vrot.slane %v518, %v522
        %v524 = vlaneseq
        %v525 = vshrl.u32 %v524, 7
        %v526 = vsub.s32 1, %v525
        %v527 = vrot.slane %v518, %v526
        %v528 = vlaneseq
        %v529 = vshrl.u32 %v528, 7
        %v530 = vsub.s32 2, %v529
        %v531 = vrot.slane %v518, %v530
        %v532 = vlaneseq
        %v533 = vshrl.u32 %v532, 7
        %v534 = vsub.s32 3, %v533
        %v535 = vrot.slane %v518, %v534
        %v536 = vlaneseq
        %v537 = vshrl.u32 %v536, 7
        %v538 = vsub.s32 4, %v537
        %v539 = vrot.slane %v518, %v538
        %v540 = vlaneseq
        %v541 = vshrl.u32 %v540, 7
        %v542 = vsub.s32 5, %v541
        %v543 = vrot.slane %v518, %v542
        %v544 = vlaneseq
        %v545 = vshrl.u32 %v544, 7
        %v546 = vsub.s32 6, %v545
        %v547 = vrot.slane %v518, %v546
        %v548 = vlaneseq
        %v549 = vshrl.u32 %v548, 7
        %v550 = vsub.s32 7, %v549
        %v551 = vrot.slane %v518, %v550
        %v576 = vunpack.c.l.b16 %v374
        %v577 = vunpack.c.h.b16 %v374
        %v578 = vunpack.c.l.b16 %v375
        %v579 = vunpack.c.h.b16 %v375
        %v580 = vunpack.c.l.b16 %v376
        %v581 = vunpack.c.h.b16 %v376
        %v582 = vunpack.c.l.b16 %v377
        %v583 = vunpack.c.h.b16 %v377
        %v584 = vunpack.c.l.b16 %v378
        %v585 = vunpack.c.h.b16 %v378
        %v586 = vunpack.c.l.b16 %v379
        %v587 = vunpack.c.h.b16 %v379
        %v588 = vunpack.c.l.b16 %v380
        %v589 = vunpack.c.h.b16 %v380
        %v590 = vunpack.c.l.b16 %v381
        %v591 = vunpack.c.h.b16 %v381
        %v592 = vunpack.c.l.b16 %v382
        %v593 = vunpack.c.h.b16 %v382
        %v594 = vunpack.c.l.b16 %v383
        %v595 = vunpack.c.h.b16 %v383
        %v596 = vunpack.c.l.b16 %v384
        %v597 = vunpack.c.h.b16 %v384
        %v598 = vunpack.c.l.b16 %v385
        %v599 = vunpack.c.h.b16 %v385
        %v600 = vunpack.c.l.b16 %v386
        %v601 = vunpack.c.h.b16 %v386
        %v602 = vunpack.c.l.b16 %v387
        %v603 = vunpack.c.h.b16 %v387
        %v604 = vunpack.c.l.b16 %v388
        %v605 = vunpack.c.h.b16 %v388
        %v606 = vunpack.c.l.b16 %v389
        %v607 = vunpack.c.h.b16 %v389
        %v608 = vpack.c.b16 %v578, %v576
        %v609 = vpack.c.b16 %v579, %v577
        %v610 = vpack.c.b16 %v582, %v580
        %v611 = vpack.c.b16 %v583, %v581
        %v612 = vpack.c.b16 %v586, %v584
        %v613 = vpack.c.b16 %v587, %v585
        %v614 = vpack.c.b16 %v590, %v588
        %v615 = vpack.c.b16 %v591, %v589
        %v616 = vpack.c.b16 %v594, %v592
        %v617 = vpack.c.b16 %v595, %v593
        %v618 = vpack.c.b16 %v598, %v596
        %v619 = vpack.c.b16 %v599, %v597
        %v620 = vpack.c.b16 %v602, %v600
        %v621 = vpack.c.b16 %v603, %v601
        %v622 = vpack.c.b16 %v606, %v604
        %v623 = vpack.c.b16 %v607, %v605
        %v768 = vunpack.c.l.b16 %v390
        %v769 = vunpack.c.h.b16 %v390
        %v770 = vunpack.c.l.b16 %v391
        %v771 = vunpack.c.h.b16 %v391
        %v772 = vunpack.c.l.b16 %v392
        %v773 = vunpack.c.h.b16 %v392
        %v774 = vunpack.c.l.b16 %v393
        %v775 = vunpack.c.h.b16 %v393
        %v776 = vunpack.c.l.b16 %v394
        %v777 = vunpack.c.h.b16 %v394
        %v778 = vunpack.c.l.b16 %v395
        %v779 = vunpack.c.h.b16 %v395
        %v780 = vunpack.c.l.b16 %v396
        %v781 = vunpack.c.h.b16 %v396
        %v782 = vunpack.c.l.b16 %v397
        %v783 = vunpack.c.h.b16 %v397
        %v784 = vunpack.c.l.b16 %v398
        %v785 = vunpack.c.h.b16 %v398
        %v786 = vunpack.c.l.b16 %v399
        %v787 = vunpack.c.h.b16 %v399
        %v788 = vunpack.c.l.b16 %v400
        %v789 = vunpack.c.h.b16 %v400
        %v790 = vunpack.c.l.b16 %v401
        %v791 = vunpack.c.h.b16 %v401
        %v792 = vunpack.c.l.b16 %v402
        %v793 = vunpack.c.h.b16 %v402
        %v794 = vunpack.c.l.b16 %v403
        %v795 = vunpack.c.h.b16 %v403
        %v796 = vunpack.c.l.b16 %v404
        %v797 = vunpack.c.h.b16 %v404
        %v798 = vunpack.c.l.b16 %v405
        %v799 = vunpack.c.h.b16 %v405
        %v800 = vunpack.c.l.b16 %v406
        %v801 = vunpack.c.h.b16 %v406
        %v802 = vunpack.c.l.b16 %v407
        %v803 = vunpack.c.h.b16 %v407
        %v804 = vunpack.c.l.b16 %v408
        %v805 = vunpack.c.h.b16 %v408
        %v806 = vunpack.c.l.b16 %v409
        %v807 = vunpack.c.h.b16 %v409
        %v808 = vunpack.c.l.b16 %v410
        %v809 = vunpack.c.h.b16 %v410
        %v810 = vunpack.c.l.b16 %v411
        %v811 = vunpack.c.h.b16 %v411
        %v812 = vunpack.c.l.b16 %v412
        %v813 = vunpack.c.h.b16 %v412
        %v814 = vunpack.c.l.b16 %v413
        %v815 = vunpack.c.h.b16 %v413
        %v816 = vunpack.c.l.b16 %v414
        %v817 = vunpack.c.h.b16 %v414
        %v818 = vunpack.c.l.b16 %v415
        %v819 = vunpack.c.h.b16 %v415
        %v820 = vunpack.c.l.b16 %v416
        %v821 = vunpack.c.h.b16 %v416
        %v822 = vunpack.c.l.b16 %v417
        %v823 = vunpack.c.h.b16 %v417
        %v824 = vunpack.c.l.b16 %v418
        %v825 = vunpack.c.h.b16 %v418
        %v826 = vunpack.c.l.b16 %v419
        %v827 = vunpack.c.h.b16 %v419
        %v828 = vunpack.c.l.b16 %v420
        %v829 = vunpack.c.h.b16 %v420
        %v830 = vunpack.c.l.b16 %v421
        %v831 = vunpack.c.h.b16 %v421
        %v832 = vunpack.c.l.b16 %v422
        %v833 = vunpack.c.h.b16 %v422
        %v834 = vunpack.c.l.b16 %v423
        %v835 = vunpack.c.h.b16 %v423
        %v836 = vunpack.c.l.b16 %v424
        %v837 = vunpack.c.h.b16 %v424
        %v838 = vunpack.c.l.b16 %v425
        %v839 = vunpack.c.h.b16 %v425
        %v840 = vunpack.c.l.b16 %v426
        %v841 = vunpack.c.h.b16 %v426
        %v842 = vunpack.c.l.b16 %v427
        %v843 = vunpack.c.h.b16 %v427
        %v844 = vunpack.c.l.b16 %v428
        %v845 = vunpack.c.h.b16 %v428
        %v846 = vunpack.c.l.b16 %v429
        %v847 = vunpack.c.h.b16 %v429
        %v848 = vunpack.c.l.b16 %v430
        %v849 = vunpack.c.h.b16 %v430
        %v850 = vunpack.c.l.b16 %v431
        %v851 = vunpack.c.h.b16 %v431
        %v852 = vunpack.c.l.b16 %v432
        %v853 = vunpack.c.h.b16 %v432
        %v854 = vunpack.c.l.b16 %v433
        %v855 = vunpack.c.h.b16 %v433
        %v856 = vunpack.c.l.b16 %v434
        %v857 = vunpack.c.h.b16 %v434
        %v858 = vunpack.c.l.b16 %v435
        %v859 = vunpack.c.h.b16 %v435
        %v860 = vunpack.c.l.b16 %v436
        %v861 = vunpack.c.h.b16 %v436
        %v862 = vunpack.c.l.b16 %v437
        %v863 = vunpack.c.h.b16 %v437
        %v864 = vunpack.c.l.b16 %v438
        %v865 = vunpack.c.h.b16 %v438
        %v866 = vunpack.c.l.b16 %v439
        %v867 = vunpack.c.h.b16 %v439
        %v868 = vunpack.c.l.b16 %v440
        %v869 = vunpack.c.h.b16 %v440
        %v870 = vunpack.c.l.b16 %v441
        %v871 = vunpack.c.h.b16 %v441
        %v872 = vunpack.c.l.b16 %v442
        %v873 = vunpack.c.h.b16 %v442
        %v874 = vunpack.c.l.b16 %v443
        %v875 = vunpack.c.h.b16 %v443
        %v876 = vunpack.c.l.b16 %v444
        %v877 = vunpack.c.h.b16 %v444
        %v878 = vunpack.c.l.b16 %v445
        %v879 = vunpack.c.h.b16 %v445
        %v880 = vunpack.c.l.b16 %v446
        %v881 = vunpack.c.h.b16 %v446
        %v882 = vunpack.c.l.b16 %v447
        %v883 = vunpack.c.h.b16 %v447
        %v884 = vunpack.c.l.b16 %v448
        %v885 = vunpack.c.h.b16 %v448
        %v886 = vunpack.c.l.b16 %v449
        %v887 = vunpack.c.h.b16 %v449
        %v888 = vunpack.c.l.b16 %v450
        %v889 = vunpack.c.h.b16 %v450
        %v890 = vunpack.c.l.b16 %v451
        %v891 = vunpack.c.h.b16 %v451
        %v892 = vunpack.c.l.b16 %v452
        %v893 = vunpack.c.h.b16 %v452
        %v894 = vunpack.c.l.b16 %v453
        %v895 = vunpack.c.h.b16 %v453
        %v896 = vunpack.c.l.b16 %v454
        %v897 = vunpack.c.h.b16 %v454
        %v898 = vunpack.c.l.b16 %v455
        %v899 = vunpack.c.h.b16 %v455
        %v900 = vunpack.c.l.b16 %v456
        %v901 = vunpack.c.h.b16 %v456
        %v902 = vunpack.c.l.b16 %v457
        %v903 = vunpack.c.h.b16 %v457
        %v904 = vunpack.c.l.b16 %v458
        %v905 = vunpack.c.h.b16 %v458
        %v906 = vunpack.c.l.b16 %v459
        %v907 = vunpack.c.h.b16 %v459
        %v908 = vunpack.c.l.b16 %v460
        %v909 = vunpack.c.h.b16 %v460
        %v910 = vunpack.c.l.b16 %v461
        %v911 = vunpack.c.h.b16 %v461
        %v912 = vunpack.c.l.b16 %v462
        %v913 = vunpack.c.h.b16 %v462
        %v914 = vunpack.c.l.b16 %v463
        %v915 = vunpack.c.h.b16 %v463
        %v916 = vunpack.c.l.b16 %v464
        %v917 = vunpack.c.h.b16 %v464
        %v918 = vunpack.c.l.b16 %v465
        %v919 = vunpack.c.h.b16 %v465
        %v920 = vunpack.c.l.b16 %v466
        %v921 = vunpack.c.h.b16 %v466
        %v922 = vunpack.c.l.b16 %v467
        %v923 = vunpack.c.h.b16 %v467
        %v924 = vunpack.c.l.b16 %v468
        %v925 = vunpack.c.h.b16 %v468
        %v926 = vunpack.c.l.b16 %v469
        %v927 = vunpack.c.h.b16 %v469
        %v928 = vunpack.c.l.b16 %v470
        %v929 = vunpack.c.h.b16 %v470
        %v930 = vunpack.c.l.b16 %v471
        %v931 = vunpack.c.h.b16 %v471
        %v932 = vunpack.c.l.b16 %v472
        %v933 = vunpack.c.h.b16 %v472
        %v934 = vunpack.c.l.b16 %v473
        %v935 = vunpack.c.h.b16 %v473
        %v936 = vunpack.c.l.b16 %v474
        %v937 = vunpack.c.h.b16 %v474
        %v938 = vunpack.c.l.b16 %v475
        %v939 = vunpack.c.h.b16 %v475
        %v940 = vunpack.c.l.b16 %v476
        %v941 = vunpack.c.h.b16 %v476
        %v942 = vunpack.c.l.b16 %v477
        %v943 = vunpack.c.h.b16 %v477
        %v944 = vunpack.c.l.b16 %v478
        %v945 = vunpack.c.h.b16 %v478
        %v946 = vunpack.c.l.b16 %v479
        %v947 = vunpack.c.h.b16 %v479
        %v948 = vunpack.c.l.b16 %v480
        %v949 = vunpack.c.h.b16 %v480
        %v950 = vunpack.c.l.b16 %v481
        %v951 = vunpack.c.h.b16 %v481
        %v952 = vunpack.c.l.b16 %v482
        %v953 = vunpack.c.h.b16 %v482
        %v954 = vunpack.c.l.b16 %v483
        %v955 = vunpack.c.h.b16 %v483
        %v956 = vunpack.c.l.b16 %v484
        %v957 = vunpack.c.h.b16 %v484
        %v958 = vunpack.c.l.b16 %v485
        %v959 = vunpack.c.h.b16 %v485
        %v960 = vunpack.c.l.b16 %v486
        %v961 = vunpack.c.h.b16 %v486
        %v962 = vunpack.c.l.b16 %v487
        %v963 = vunpack.c.h.b16 %v487
        %v964 = vunpack.c.l.b16 %v488
        %v965 = vunpack.c.h.b16 %v488
        %v966 = vunpack.c.l.b16 %v489
        %v967 = vunpack.c.h.b16 %v489
        %v968 = vunpack.c.l.b16 %v490
        %v969 = vunpack.c.h.b16 %v490
        %v970 = vunpack.c.l.b16 %v491
        %v971 = vunpack.c.h.b16 %v491
        %v972 = vunpack.c.l.b16 %v492
        %v973 = vunpack.c.h.b16 %v492
        %v974 = vunpack.c.l.b16 %v493
        %v975 = vunpack.c.h.b16 %v493
        %v976 = vunpack.c.l.b16 %v494
        %v977 = vunpack.c.h.b16 %v494
        %v978 = vunpack.c.l.b16 %v495
        %v979 = vunpack.c.h.b16 %v495
        %v980 = vunpack.c.l.b16 %v496
        %v981 = vunpack.c.h.b16 %v496
        %v982 = vunpack.c.l.b16 %v497
        %v983 = vunpack.c.h.b16 %v497
        %v984 = vunpack.c.l.b16 %v498
        %v985 = vunpack.c.h.b16 %v498
        %v986 = vunpack.c.l.b16 %v499
        %v987 = vunpack.c.h.b16 %v499
        %v988 = vunpack.c.l.b16 %v500
        %v989 = vunpack.c.h.b16 %v500
        %v990 = vunpack.c.l.b16 %v501
        %v991 = vunpack.c.h.b16 %v501
        %v992 = vunpack.c.l.b16 %v502
        %v993 = vunpack.c.h.b16 %v502
        %v994 = vunpack.c.l.b16 %v503
        %v995 = vunpack.c.h.b16 %v503
        %v996 = vunpack.c.l.b16 %v504
        %v997 = vunpack.c.h.b16 %v504
        %v998 = vunpack.c.l.b16 %v505
        %v999 = vunpack.c.h.b16 %v505
        %v1000 = vunpack.c.l.b16 %v506
        %v1001 = vunpack.c.h.b16 %v506
        %v1002 = vunpack.c.l.b16 %v507
        %v1003 = vunpack.c.h.b16 %v507
        %v1004 = vunpack.c.l.b16 %v508
        %v1005 = vunpack.c.h.b16 %v508
        %v1006 = vunpack.c.l.b16 %v509
        %v1007 = vunpack.c.h.b16 %v509
        %v1008 = vunpack.c.l.b16 %v510
        %v1009 = vunpack.c.h.b16 %v510
        %v1010 = vunpack.c.l.b16 %v511
        %v1011 = vunpack.c.h.b16 %v511
        %v1012 = vunpack.c.l.b16 %v512
        %v1013 = vunpack.c.h.b16 %v512
        %v1014 = vunpack.c.l.b16 %v513
        %v1015 = vunpack.c.h.b16 %v513
        %v1016 = vunpack.c.l.b16 %v514
        %v1017 = vunpack.c.h.b16 %v514
        %v1018 = vunpack.c.l.b16 %v515
        %v1019 = vunpack.c.h.b16 %v515
        %v1020 = vunpack.c.l.b16 %v516
        %v1021 = vunpack.c.h.b16 %v516
        %v1022 = vunpack.c.l.b16 %v517
        %v1023 = vunpack.c.h.b16 %v517
        %v1024 = vpack.c.b16 %v776, %v768
        %v1025 = vpack.c.b16 %v777, %v769
        %v1026 = vpack.c.b16 %v778, %v770
        %v1027 = vpack.c.b16 %v779, %v771
        %v1028 = vpack.c.b16 %v780, %v772
        %v1029 = vpack.c.b16 %v781, %v773
        %v1030 = vpack.c.b16 %v782, %v774
        %v1031 = vpack.c.b16 %v783, %v775
        %v1032 = vpack.c.b16 %v792, %v784
        %v1033 = vpack.c.b16 %v793, %v785
        %v1034 = vpack.c.b16 %v794, %v786
        %v1035 = vpack.c.b16 %v795, %v787
        %v1036 = vpack.c.b16 %v796, %v788
        %v1037 = vpack.c.b16 %v797, %v789
        %v1038 = vpack.c.b16 %v798, %v790
        %v1039 = vpack.c.b16 %v799, %v791
        %v1040 = vpack.c.b16 %v808, %v800
        %v1041 = vpack.c.b16 %v809, %v801
        %v1042 = vpack.c.b16 %v810, %v802
        %v1043 = vpack.c.b16 %v811, %v803
        %v1044 = vpack.c.b16 %v812, %v804
        %v1045 = vpack.c.b16 %v813, %v805
        %v1046 = vpack.c.b16 %v814, %v806
        %v1047 = vpack.c.b16 %v815, %v807
        %v1048 = vpack.c.b16 %v824, %v816
        %v1049 = vpack.c.b16 %v825, %v817
        %v1050 = vpack.c.b16 %v826, %v818
        %v1051 = vpack.c.b16 %v827, %v819
        %v1052 = vpack.c.b16 %v828, %v820
        %v1053 = vpack.c.b16 %v829, %v821
        %v1054 = vpack.c.b16 %v830, %v822
        %v1055 = vpack.c.b16 %v831, %v823
        %v1056 = vpack.c.b16 %v840, %v832
        %v1057 = vpack.c.b16 %v841, %v833
        %v1058 = vpack.c.b16 %v842, %v834
        %v1059 = vpack.c.b16 %v843, %v835
        %v1060 = vpack.c.b16 %v844, %v836
        %v1061 = vpack.c.b16 %v845, %v837
        %v1062 = vpack.c.b16 %v846, %v838
        %v1063 = vpack.c.b16 %v847, %v839
        %v1064 = vpack.c.b16 %v856, %v848
        %v1065 = vpack.c.b16 %v857, %v849
        %v1066 = vpack.c.b16 %v858, %v850
        %v1067 = vpack.c.b16 %v859, %v851
        %v1068 = vpack.c.b16 %v860, %v852
        %v1069 = vpack.c.b16 %v861, %v853
        %v1070 = vpack.c.b16 %v862, %v854
        %v1071 = vpack.c.b16 %v863, %v855
        %v1072 = vpack.c.b16 %v872, %v864
        %v1073 = vpack.c.b16 %v873, %v865
        %v1074 = vpack.c.b16 %v874, %v866
        %v1075 = vpack.c.b16 %v875, %v867
        %v1076 = vpack.c.b16 %v876, %v868
        %v1077 = vpack.c.b16 %v877, %v869
        %v1078 = vpack.c.b16 %v878, %v870
        %v1079 = vpack.c.b16 %v879, %v871
        %v1080 = vpack.c.b16 %v888, %v880
        %v1081 = vpack.c.b16 %v889, %v881
        %v1082 = vpack.c.b16 %v890, %v882
        %v1083 = vpack.c.b16 %v891, %v883
        %v1084 = vpack.c.b16 %v892, %v884
        %v1085 = vpack.c.b16 %v893, %v885
        %v1086 = vpack.c.b16 %v894, %v886
        %v1087 = vpack.c.b16 %v895, %v887
        %v1088 = vpack.c.b16 %v904, %v896
        %v1089 = vpack.c.b16 %v905, %v897
        %v1090 = vpack.c.b16 %v906, %v898
        %v1091 = vpack.c.b16 %v907, %v899
        %v1092 = vpack.c.b16 %v908, %v900
        %v1093 = vpack.c.b16 %v909, %v901
        %v1094 = vpack.c.b16 %v910, %v902
        %v1095 = vpack.c.b16 %v911, %v903
        %v1096 = vpack.c.b16 %v920, %v912
        %v1097 = vpack.c.b16 %v921, %v913
        %v1098 = vpack.c.b16 %v922, %v914
        %v1099 = vpack.c.b16 %v923, %v915
        %v1100 = vpack.c.b16 %v924, %v916
        %v1101 = vpack.c.b16 %v925, %v917
        %v1102 = vpack.c.b16 %v926, %v918
        %v1103 = vpack.c.b16 %v927, %v919
        %v1104 = vpack.c.b16 %v936, %v928
        %v1105 = vpack.c.b16 %v937, %v929
        %v1106 = vpack.c.b16 %v938, %v930
        %v1107 = vpack.c.b16 %v939, %v931
        %v1108 = vpack.c.b16 %v940, %v932
        %v1109 = vpack.c.b16 %v941, %v933
        %v1110 = vpack.c.b16 %v942, %v934
        %v1111 = vpack.c.b16 %v943, %v935
        %v1112 = vpack.c.b16 %v952, %v944
        %v1113 = vpack.c.b16 %v953, %v945
        %v1114 = vpack.c.b16 %v954, %v946
        %v1115 = vpack.c.b16 %v955, %v947
        %v1116 = vpack.c.b16 %v956, %v948
        %v1117 = vpack.c.b16 %v957, %v949
        %v1118 = vpack.c.b16 %v958, %v950
        %v1119 = vpack.c.b16 %v959, %v951
        %v1120 = vpack.c.b16 %v968, %v960
        %v1121 = vpack.c.b16 %v969, %v961
        %v1122 = vpack.c.b16 %v970, %v962
        %v1123 = vpack.c.b16 %v971, %v963
        %v1124 = vpack.c.b16 %v972, %v964
        %v1125 = vpack.c.b16 %v973, %v965
        %v1126 = vpack.c.b16 %v974, %v966
        %v1127 = vpack.c.b16 %v975, %v967
        %v1128 = vpack.c.b16 %v984, %v976
        %v1129 = vpack.c.b16 %v985, %v977
        %v1130 = vpack.c.b16 %v986, %v978
        %v1131 = vpack.c.b16 %v987, %v979
        %v1132 = vpack.c.b16 %v988, %v980
        %v1133 = vpack.c.b16 %v989, %v981
        %v1134 = vpack.c.b16 %v990, %v982
        %v1135 = vpack.c.b16 %v991, %v983
        %v1136 = vpack.c.b16 %v1000, %v992
        %v1137 = vpack.c.b16 %v1001, %v993
        %v1138 = vpack.c.b16 %v1002, %v994
        %v1139 = vpack.c.b16 %v1003, %v995
        %v1140 = vpack.c.b16 %v1004, %v996
        %v1141 = vpack.c.b16 %v1005, %v997
        %v1142 = vpack.c.b16 %v1006, %v998
        %v1143 = vpack.c.b16 %v1007, %v999
        %v1144 = vpack.c.b16 %v1016, %v1008
        %v1145 = vpack.c.b16 %v1017, %v1009
        %v1146 = vpack.c.b16 %v1018, %v1010
        %v1147 = vpack.c.b16 %v1019, %v1011
        %v1148 = vpack.c.b16 %v1020, %v1012
        %v1149 = vpack.c.b16 %v1021, %v1013
        %v1150 = vpack.c.b16 %v1022, %v1014
        %v1151 = vpack.c.b16 %v1023, %v1015
        %1280 = vmatprep.subr.bf16.mxu0 %v1025
        %1281 = vmatpush1.bf16.msra.mxu0 %v1024
        %1282 = vmatprep.subr.bf16.mxu0 %v1033
        %1283 = vmatpush1.bf16.msra.mxu0 %v1032
        %1284 = vmatprep.subr.bf16.mxu0 %v1041
        %1285 = vmatpush1.bf16.msra.mxu0 %v1040
        %1286 = vmatprep.subr.bf16.mxu0 %v1049
        %1287 = vmatpush1.bf16.msra.mxu0 %v1048
        %1288 = vmatprep.subr.bf16.mxu0 %v1057
        %1289 = vmatpush1.bf16.msra.mxu0 %v1056
        %1290 = vmatprep.subr.bf16.mxu0 %v1065
        %1291 = vmatpush1.bf16.msra.mxu0 %v1064
        %1292 = vmatprep.subr.bf16.mxu0 %v1073
        %1293 = vmatpush1.bf16.msra.mxu0 %v1072
        %1294 = vmatprep.subr.bf16.mxu0 %v1081
        %1295 = vmatpush1.bf16.msra.mxu0 %v1080
        %1296 = vmatprep.subr.bf16.mxu0 %v1089
        %1297 = vmatpush1.bf16.msra.mxu0 %v1088
        %1298 = vmatprep.subr.bf16.mxu0 %v1097
        %1299 = vmatpush1.bf16.msra.mxu0 %v1096
        %1300 = vmatprep.subr.bf16.mxu0 %v1105
        %1301 = vmatpush1.bf16.msra.mxu0 %v1104
        %1302 = vmatprep.subr.bf16.mxu0 %v1113
        %1303 = vmatpush1.bf16.msra.mxu0 %v1112
        %1304 = vmatprep.subr.bf16.mxu0 %v1121
        %1305 = vmatpush1.bf16.msra.mxu0 %v1120
        %1306 = vmatprep.subr.bf16.mxu0 %v1129
        %1307 = vmatpush1.bf16.msra.mxu0 %v1128
        %1308 = vmatprep.subr.bf16.mxu0 %v1137
        %1309 = vmatpush1.bf16.msra.mxu0 %v1136
        %1310 = vmatprep.subr.bf16.mxu0 %v1145
        %1311 = vmatpush1.bf16.msra.mxu0 %v1144
        %1312 = vmatprep.mubr.bf16.mxu0 %v609
        %1313 = vmatmul.mubr.bf16.gmra.mrb[0].mxu0 %v608
        %v1314 = vpop.f32.mrb[0].mxu0
        %v1315 = vadd.f32 %v523, %v1314
        %v1316 = vpop.f32.mrb[0].mxu0
        %v1317 = vadd.f32 %v527, %v1316
        %v1318 = vpop.f32.mrb[0].mxu0
        %v1319 = vadd.f32 %v523, %v1318
        %v1320 = vpop.f32.mrb[0].mxu0
        %v1321 = vadd.f32 %v527, %v1320
        %1322 = vmatprep.mubr.bf16.mxu0 %v611
        %1323 = vmatmul.mubr.bf16.gmra.mrb[0].mxu0 %v610
        %v1324 = vpop.f32.mrb[0].mxu0
        %v1325 = vadd.f32 %v523, %v1324
        %v1326 = vpop.f32.mrb[0].mxu0
        %v1327 = vadd.f32 %v527, %v1326
        %v1328 = vpop.f32.mrb[0].mxu0
        %v1329 = vadd.f32 %v523, %v1328
        %v1330 = vpop.f32.mrb[0].mxu0
        %v1331 = vadd.f32 %v527, %v1330
        %1332 = vmatprep.mubr.bf16.mxu0 %v613
        %1333 = vmatmul.mubr.bf16.gmra.mrb[0].mxu0 %v612
        %v1334 = vpop.f32.mrb[0].mxu0
        %v1335 = vadd.f32 %v523, %v1334
        %v1336 = vpop.f32.mrb[0].mxu0
        %v1337 = vadd.f32 %v527, %v1336
        %v1338 = vpop.f32.mrb[0].mxu0
        %v1339 = vadd.f32 %v523, %v1338
        %v1340 = vpop.f32.mrb[0].mxu0
        %v1341 = vadd.f32 %v527, %v1340
        %1342 = vmatprep.mubr.bf16.mxu0 %v615
        %1343 = vmatmul.mubr.bf16.gmra.mrb[0].mxu0 %v614
        %v1344 = vpop.f32.mrb[0].mxu0
        %v1345 = vadd.f32 %v523, %v1344
        %v1346 = vpop.f32.mrb[0].mxu0
        %v1347 = vadd.f32 %v527, %v1346
        %v1348 = vpop.f32.mrb[0].mxu0
        %v1349 = vadd.f32 %v523, %v1348
        %v1350 = vpop.f32.mrb[0].mxu0
        %v1351 = vadd.f32 %v527, %v1350
        %1352 = vmatprep.mubr.bf16.mxu0 %v617
        %1353 = vmatmul.mubr.bf16.gmra.mrb[0].mxu0 %v616
        %v1354 = vpop.f32.mrb[0].mxu0
        %v1355 = vadd.f32 %v523, %v1354
        %v1356 = vpop.f32.mrb[0].mxu0
        %v1357 = vadd.f32 %v527, %v1356
        %v1358 = vpop.f32.mrb[0].mxu0
        %v1359 = vadd.f32 %v523, %v1358
        %v1360 = vpop.f32.mrb[0].mxu0
        %v1361 = vadd.f32 %v527, %v1360
        %1362 = vmatprep.mubr.bf16.mxu0 %v619
        %1363 = vmatmul.mubr.bf16.gmra.mrb[0].mxu0 %v618
        %v1364 = vpop.f32.mrb[0].mxu0
        %v1365 = vadd.f32 %v523, %v1364
        %v1366 = vpop.f32.mrb[0].mxu0
        %v1367 = vadd.f32 %v527, %v1366
        %v1368 = vpop.f32.mrb[0].mxu0
        %v1369 = vadd.f32 %v523, %v1368
        %v1370 = vpop.f32.mrb[0].mxu0
        %v1371 = vadd.f32 %v527, %v1370
        %1372 = vmatprep.mubr.bf16.mxu0 %v621
        %1373 = vmatmul.mubr.bf16.gmra.mrb[0].mxu0 %v620
        %v1374 = vpop.f32.mrb[0].mxu0
        %v1375 = vadd.f32 %v523, %v1374
        %v1376 = vpop.f32.mrb[0].mxu0
        %v1377 = vadd.f32 %v527, %v1376
        %v1378 = vpop.f32.mrb[0].mxu0
        %v1379 = vadd.f32 %v523, %v1378
        %v1380 = vpop.f32.mrb[0].mxu0
        %v1381 = vadd.f32 %v527, %v1380
        %1382 = vmatprep.mubr.bf16.mxu0 %v623
        %1383 = vmatmul.mubr.bf16.gmra.mrb[0].mxu0 %v622
        %v1384 = vpop.f32.mrb[0].mxu0
        %v1385 = vadd.f32 %v523, %v1384
        %v1386 = vpop.f32.mrb[0].mxu0
        %v1387 = vadd.f32 %v527, %v1386
        %v1388 = vpop.f32.mrb[0].mxu0
        %v1389 = vadd.f32 %v523, %v1388
        %v1390 = vpop.f32.mrb[0].mxu0
        %v1391 = vadd.f32 %v527, %v1390
        %1392 = vdwg.mxu0
        %1393 = vmatprep.subr.bf16.mxu0 %v1027
        %1394 = vmatpush1.bf16.msra.mxu0 %v1026
        %1395 = vmatprep.subr.bf16.mxu0 %v1035
        %1396 = vmatpush1.bf16.msra.mxu0 %v1034
        %1397 = vmatprep.subr.bf16.mxu0 %v1043
        %1398 = vmatpush1.bf16.msra.mxu0 %v1042
        %1399 = vmatprep.subr.bf16.mxu0 %v1051
        %1400 = vmatpush1.bf16.msra.mxu0 %v1050
        %1401 = vmatprep.subr.bf16.mxu0 %v1059
        %1402 = vmatpush1.bf16.msra.mxu0 %v1058
        %1403 = vmatprep.subr.bf16.mxu0 %v1067
        %1404 = vmatpush1.bf16.msra.mxu0 %v1066
        %1405 = vmatprep.subr.bf16.mxu0 %v1075
        %1406 = vmatpush1.bf16.msra.mxu0 %v1074
        %1407 = vmatprep.subr.bf16.mxu0 %v1083
        %1408 = vmatpush1.bf16.msra.mxu0 %v1082
        %1409 = vmatprep.subr.bf16.mxu0 %v1091
        %1410 = vmatpush1.bf16.msra.mxu0 %v1090
        %1411 = vmatprep.subr.bf16.mxu0 %v1099
        %1412 = vmatpush1.bf16.msra.mxu0 %v1098
        %1413 = vmatprep.subr.bf16.mxu0 %v1107
        %1414 = vmatpush1.bf16.msra.mxu0 %v1106
        %1415 = vmatprep.subr.bf16.mxu0 %v1115
        %1416 = vmatpush1.bf16.msra.mxu0 %v1114
        %1417 = vmatprep.subr.bf16.mxu0 %v1123
        %1418 = vmatpush1.bf16.msra.mxu0 %v1122
        %1419 = vmatprep.subr.bf16.mxu0 %v1131
        %1420 = vmatpush1.bf16.msra.mxu0 %v1130
        %1421 = vmatprep.subr.bf16.mxu0 %v1139
        %1422 = vmatpush1.bf16.msra.mxu0 %v1138
        %1423 = vmatprep.subr.bf16.mxu0 %v1147
        %1424 = vmatpush1.bf16.msra.mxu0 %v1146
        %1425 = vmatprep.mubr.bf16.mxu0 %v609
        %1426 = vmatmul.mubr.bf16.gmra.mrb[0].mxu0 %v608
        %v1427 = vpop.f32.mrb[0].mxu0
        %v1428 = vadd.f32 %v531, %v1427
        %v1429 = vpop.f32.mrb[0].mxu0
        %v1430 = vadd.f32 %v535, %v1429
        %v1431 = vpop.f32.mrb[0].mxu0
        %v1432 = vadd.f32 %v531, %v1431
        %v1433 = vpop.f32.mrb[0].mxu0
        %v1434 = vadd.f32 %v535, %v1433
        %1435 = vmatprep.mubr.bf16.mxu0 %v611
        %1436 = vmatmul.mubr.bf16.gmra.mrb[0].mxu0 %v610
        %v1437 = vpop.f32.mrb[0].mxu0
        %v1438 = vadd.f32 %v531, %v1437
        %v1439 = vpop.f32.mrb[0].mxu0
        %v1440 = vadd.f32 %v535, %v1439
        %v1441 = vpop.f32.mrb[0].mxu0
        %v1442 = vadd.f32 %v531, %v1441
        %v1443 = vpop.f32.mrb[0].mxu0
        %v1444 = vadd.f32 %v535, %v1443
        %1445 = vmatprep.mubr.bf16.mxu0 %v613
        %1446 = vmatmul.mubr.bf16.gmra.mrb[0].mxu0 %v612
        %v1447 = vpop.f32.mrb[0].mxu0
        %v1448 = vadd.f32 %v531, %v1447
        %v1449 = vpop.f32.mrb[0].mxu0
        %v1450 = vadd.f32 %v535, %v1449
        %v1451 = vpop.f32.mrb[0].mxu0
        %v1452 = vadd.f32 %v531, %v1451
        %v1453 = vpop.f32.mrb[0].mxu0
        %v1454 = vadd.f32 %v535, %v1453
        %1455 = vmatprep.mubr.bf16.mxu0 %v615
        %1456 = vmatmul.mubr.bf16.gmra.mrb[0].mxu0 %v614
        %v1457 = vpop.f32.mrb[0].mxu0
        %v1458 = vadd.f32 %v531, %v1457
        %v1459 = vpop.f32.mrb[0].mxu0
        %v1460 = vadd.f32 %v535, %v1459
        %v1461 = vpop.f32.mrb[0].mxu0
        %v1462 = vadd.f32 %v531, %v1461
        %v1463 = vpop.f32.mrb[0].mxu0
        %v1464 = vadd.f32 %v535, %v1463
        %1465 = vmatprep.mubr.bf16.mxu0 %v617
        %1466 = vmatmul.mubr.bf16.gmra.mrb[0].mxu0 %v616
        %v1467 = vpop.f32.mrb[0].mxu0
        %v1468 = vadd.f32 %v531, %v1467
        %v1469 = vpop.f32.mrb[0].mxu0
        %v1470 = vadd.f32 %v535, %v1469
        %v1471 = vpop.f32.mrb[0].mxu0
        %v1472 = vadd.f32 %v531, %v1471
        %v1473 = vpop.f32.mrb[0].mxu0
        %v1474 = vadd.f32 %v535, %v1473
        %1475 = vmatprep.mubr.bf16.mxu0 %v619
        %1476 = vmatmul.mubr.bf16.gmra.mrb[0].mxu0 %v618
        %v1477 = vpop.f32.mrb[0].mxu0
        %v1478 = vadd.f32 %v531, %v1477
        %v1479 = vpop.f32.mrb[0].mxu0
        %v1480 = vadd.f32 %v535, %v1479
        %v1481 = vpop.f32.mrb[0].mxu0
        %v1482 = vadd.f32 %v531, %v1481
        %v1483 = vpop.f32.mrb[0].mxu0
        %v1484 = vadd.f32 %v535, %v1483
        %1485 = vmatprep.mubr.bf16.mxu0 %v621
        %1486 = vmatmul.mubr.bf16.gmra.mrb[0].mxu0 %v620
        %v1487 = vpop.f32.mrb[0].mxu0
        %v1488 = vadd.f32 %v531, %v1487
        %v1489 = vpop.f32.mrb[0].mxu0
        %v1490 = vadd.f32 %v535, %v1489
        %v1491 = vpop.f32.mrb[0].mxu0
        %v1492 = vadd.f32 %v531, %v1491
        %v1493 = vpop.f32.mrb[0].mxu0
        %v1494 = vadd.f32 %v535, %v1493
        %1495 = vmatprep.mubr.bf16.mxu0 %v623
        %1496 = vmatmul.mubr.bf16.gmra.mrb[0].mxu0 %v622
        %v1497 = vpop.f32.mrb[0].mxu0
        %v1498 = vadd.f32 %v531, %v1497
        %v1499 = vpop.f32.mrb[0].mxu0
        %v1500 = vadd.f32 %v535, %v1499
        %v1501 = vpop.f32.mrb[0].mxu0
        %v1502 = vadd.f32 %v531, %v1501
        %v1503 = vpop.f32.mrb[0].mxu0
        %v1504 = vadd.f32 %v535, %v1503
        %1505 = vdwg.mxu0
        %1506 = vmatprep.subr.bf16.mxu0 %v1029
        %1507 = vmatpush1.bf16.msra.mxu0 %v1028
        %1508 = vmatprep.subr.bf16.mxu0 %v1037
        %1509 = vmatpush1.bf16.msra.mxu0 %v1036
        %1510 = vmatprep.subr.bf16.mxu0 %v1045
        %1511 = vmatpush1.bf16.msra.mxu0 %v1044
        %1512 = vmatprep.subr.bf16.mxu0 %v1053
        %1513 = vmatpush1.bf16.msra.mxu0 %v1052
        %1514 = vmatprep.subr.bf16.mxu0 %v1061
        %1515 = vmatpush1.bf16.msra.mxu0 %v1060
        %1516 = vmatprep.subr.bf16.mxu0 %v1069
        %1517 = vmatpush1.bf16.msra.mxu0 %v1068
        %1518 = vmatprep.subr.bf16.mxu0 %v1077
        %1519 = vmatpush1.bf16.msra.mxu0 %v1076
        %1520 = vmatprep.subr.bf16.mxu0 %v1085
        %1521 = vmatpush1.bf16.msra.mxu0 %v1084
        %1522 = vmatprep.subr.bf16.mxu0 %v1093
        %1523 = vmatpush1.bf16.msra.mxu0 %v1092
        %1524 = vmatprep.subr.bf16.mxu0 %v1101
        %1525 = vmatpush1.bf16.msra.mxu0 %v1100
        %1526 = vmatprep.subr.bf16.mxu0 %v1109
        %1527 = vmatpush1.bf16.msra.mxu0 %v1108
        %1528 = vmatprep.subr.bf16.mxu0 %v1117
        %1529 = vmatpush1.bf16.msra.mxu0 %v1116
        %1530 = vmatprep.subr.bf16.mxu0 %v1125
        %1531 = vmatpush1.bf16.msra.mxu0 %v1124
        %1532 = vmatprep.subr.bf16.mxu0 %v1133
        %1533 = vmatpush1.bf16.msra.mxu0 %v1132
        %1534 = vmatprep.subr.bf16.mxu0 %v1141
        %1535 = vmatpush1.bf16.msra.mxu0 %v1140
        %1536 = vmatprep.subr.bf16.mxu0 %v1149
        %1537 = vmatpush1.bf16.msra.mxu0 %v1148
        %1538 = vmatprep.mubr.bf16.mxu0 %v609
        %1539 = vmatmul.mubr.bf16.gmra.mrb[0].mxu0 %v608
        %v1540 = vpop.f32.mrb[0].mxu0
        %v1541 = vadd.f32 %v539, %v1540
        %v1542 = vpop.f32.mrb[0].mxu0
        %v1543 = vadd.f32 %v543, %v1542
        %v1544 = vpop.f32.mrb[0].mxu0
        %v1545 = vadd.f32 %v539, %v1544
        %v1546 = vpop.f32.mrb[0].mxu0
        %v1547 = vadd.f32 %v543, %v1546
        %1548 = vmatprep.mubr.bf16.mxu0 %v611
        %1549 = vmatmul.mubr.bf16.gmra.mrb[0].mxu0 %v610
        %v1550 = vpop.f32.mrb[0].mxu0
        %v1551 = vadd.f32 %v539, %v1550
        %v1552 = vpop.f32.mrb[0].mxu0
        %v1553 = vadd.f32 %v543, %v1552
        %v1554 = vpop.f32.mrb[0].mxu0
        %v1555 = vadd.f32 %v539, %v1554
        %v1556 = vpop.f32.mrb[0].mxu0
        %v1557 = vadd.f32 %v543, %v1556
        %1558 = vmatprep.mubr.bf16.mxu0 %v613
        %1559 = vmatmul.mubr.bf16.gmra.mrb[0].mxu0 %v612
        %v1560 = vpop.f32.mrb[0].mxu0
        %v1561 = vadd.f32 %v539, %v1560
        %v1562 = vpop.f32.mrb[0].mxu0
        %v1563 = vadd.f32 %v543, %v1562
        %v1564 = vpop.f32.mrb[0].mxu0
        %v1565 = vadd.f32 %v539, %v1564
        %v1566 = vpop.f32.mrb[0].mxu0
        %v1567 = vadd.f32 %v543, %v1566
        %1568 = vmatprep.mubr.bf16.mxu0 %v615
        %1569 = vmatmul.mubr.bf16.gmra.mrb[0].mxu0 %v614
        %v1570 = vpop.f32.mrb[0].mxu0
        %v1571 = vadd.f32 %v539, %v1570
        %v1572 = vpop.f32.mrb[0].mxu0
        %v1573 = vadd.f32 %v543, %v1572
        %v1574 = vpop.f32.mrb[0].mxu0
        %v1575 = vadd.f32 %v539, %v1574
        %v1576 = vpop.f32.mrb[0].mxu0
        %v1577 = vadd.f32 %v543, %v1576
        %1578 = vmatprep.mubr.bf16.mxu0 %v617
        %1579 = vmatmul.mubr.bf16.gmra.mrb[0].mxu0 %v616
        %v1580 = vpop.f32.mrb[0].mxu0
        %v1581 = vadd.f32 %v539, %v1580
        %v1582 = vpop.f32.mrb[0].mxu0
        %v1583 = vadd.f32 %v543, %v1582
        %v1584 = vpop.f32.mrb[0].mxu0
        %v1585 = vadd.f32 %v539, %v1584
        %v1586 = vpop.f32.mrb[0].mxu0
        %v1587 = vadd.f32 %v543, %v1586
        %1588 = vmatprep.mubr.bf16.mxu0 %v619
        %1589 = vmatmul.mubr.bf16.gmra.mrb[0].mxu0 %v618
        %v1590 = vpop.f32.mrb[0].mxu0
        %v1591 = vadd.f32 %v539, %v1590
        %v1592 = vpop.f32.mrb[0].mxu0
        %v1593 = vadd.f32 %v543, %v1592
        %v1594 = vpop.f32.mrb[0].mxu0
        %v1595 = vadd.f32 %v539, %v1594
        %v1596 = vpop.f32.mrb[0].mxu0
        %v1597 = vadd.f32 %v543, %v1596
        %1598 = vmatprep.mubr.bf16.mxu0 %v621
        %1599 = vmatmul.mubr.bf16.gmra.mrb[0].mxu0 %v620
        %v1600 = vpop.f32.mrb[0].mxu0
        %v1601 = vadd.f32 %v539, %v1600
        %v1602 = vpop.f32.mrb[0].mxu0
        %v1603 = vadd.f32 %v543, %v1602
        %v1604 = vpop.f32.mrb[0].mxu0
        %v1605 = vadd.f32 %v539, %v1604
        %v1606 = vpop.f32.mrb[0].mxu0
        %v1607 = vadd.f32 %v543, %v1606
        %1608 = vmatprep.mubr.bf16.mxu0 %v623
        %1609 = vmatmul.mubr.bf16.gmra.mrb[0].mxu0 %v622
        %v1610 = vpop.f32.mrb[0].mxu0
        %v1611 = vadd.f32 %v539, %v1610
        %v1612 = vpop.f32.mrb[0].mxu0
        %v1613 = vadd.f32 %v543, %v1612
        %v1614 = vpop.f32.mrb[0].mxu0
        %v1615 = vadd.f32 %v539, %v1614
        %v1616 = vpop.f32.mrb[0].mxu0
        %v1617 = vadd.f32 %v543, %v1616
        %1618 = vdwg.mxu0
        %1619 = vmatprep.subr.bf16.mxu0 %v1031
        %1620 = vmatpush1.bf16.msra.mxu0 %v1030
        %1621 = vmatprep.subr.bf16.mxu0 %v1039
        %1622 = vmatpush1.bf16.msra.mxu0 %v1038
        %1623 = vmatprep.subr.bf16.mxu0 %v1047
        %1624 = vmatpush1.bf16.msra.mxu0 %v1046
        %1625 = vmatprep.subr.bf16.mxu0 %v1055
        %1626 = vmatpush1.bf16.msra.mxu0 %v1054
        %1627 = vmatprep.subr.bf16.mxu0 %v1063
        %1628 = vmatpush1.bf16.msra.mxu0 %v1062
        %1629 = vmatprep.subr.bf16.mxu0 %v1071
        %1630 = vmatpush1.bf16.msra.mxu0 %v1070
        %1631 = vmatprep.subr.bf16.mxu0 %v1079
        %1632 = vmatpush1.bf16.msra.mxu0 %v1078
        %1633 = vmatprep.subr.bf16.mxu0 %v1087
        %1634 = vmatpush1.bf16.msra.mxu0 %v1086
        %1635 = vmatprep.subr.bf16.mxu0 %v1095
        %1636 = vmatpush1.bf16.msra.mxu0 %v1094
        %1637 = vmatprep.subr.bf16.mxu0 %v1103
        %1638 = vmatpush1.bf16.msra.mxu0 %v1102
        %1639 = vmatprep.subr.bf16.mxu0 %v1111
        %1640 = vmatpush1.bf16.msra.mxu0 %v1110
        %1641 = vmatprep.subr.bf16.mxu0 %v1119
        %1642 = vmatpush1.bf16.msra.mxu0 %v1118
        %1643 = vmatprep.subr.bf16.mxu0 %v1127
        %1644 = vmatpush1.bf16.msra.mxu0 %v1126
        %1645 = vmatprep.subr.bf16.mxu0 %v1135
        %1646 = vmatpush1.bf16.msra.mxu0 %v1134
        %1647 = vmatprep.subr.bf16.mxu0 %v1143
        %1648 = vmatpush1.bf16.msra.mxu0 %v1142
        %1649 = vmatprep.subr.bf16.mxu0 %v1151
        %1650 = vmatpush1.bf16.msra.mxu0 %v1150
        %1651 = vmatprep.mubr.bf16.mxu0 %v609
        %1652 = vmatmul.mubr.bf16.gmra.mrb[0].mxu0 %v608
        %v1653 = vpop.f32.mrb[0].mxu0
        %v1654 = vadd.f32 %v547, %v1653
        %v1655 = vpop.f32.mrb[0].mxu0
        %v1656 = vadd.f32 %v551, %v1655
        %v1657 = vpop.f32.mrb[0].mxu0
        %v1658 = vadd.f32 %v547, %v1657
        %v1659 = vpop.f32.mrb[0].mxu0
        %v1660 = vadd.f32 %v551, %v1659
        %1661 = vmatprep.mubr.bf16.mxu0 %v611
        %1662 = vmatmul.mubr.bf16.gmra.mrb[0].mxu0 %v610
        %v1663 = vpop.f32.mrb[0].mxu0
        %v1664 = vadd.f32 %v547, %v1663
        %v1665 = vpop.f32.mrb[0].mxu0
        %v1666 = vadd.f32 %v551, %v1665
        %v1667 = vpop.f32.mrb[0].mxu0
        %v1668 = vadd.f32 %v547, %v1667
        %v1669 = vpop.f32.mrb[0].mxu0
        %v1670 = vadd.f32 %v551, %v1669
        %1671 = vmatprep.mubr.bf16.mxu0 %v613
        %1672 = vmatmul.mubr.bf16.gmra.mrb[0].mxu0 %v612
        %v1673 = vpop.f32.mrb[0].mxu0
        %v1674 = vadd.f32 %v547, %v1673
        %v1675 = vpop.f32.mrb[0].mxu0
        %v1676 = vadd.f32 %v551, %v1675
        %v1677 = vpop.f32.mrb[0].mxu0
        %v1678 = vadd.f32 %v547, %v1677
        %v1679 = vpop.f32.mrb[0].mxu0
        %v1680 = vadd.f32 %v551, %v1679
        %1681 = vmatprep.mubr.bf16.mxu0 %v615
        %1682 = vmatmul.mubr.bf16.gmra.mrb[0].mxu0 %v614
        %v1683 = vpop.f32.mrb[0].mxu0
        %v1684 = vadd.f32 %v547, %v1683
        %v1685 = vpop.f32.mrb[0].mxu0
        %v1686 = vadd.f32 %v551, %v1685
        %v1687 = vpop.f32.mrb[0].mxu0
        %v1688 = vadd.f32 %v547, %v1687
        %v1689 = vpop.f32.mrb[0].mxu0
        %v1690 = vadd.f32 %v551, %v1689
        %1691 = vmatprep.mubr.bf16.mxu0 %v617
        %1692 = vmatmul.mubr.bf16.gmra.mrb[0].mxu0 %v616
        %v1693 = vpop.f32.mrb[0].mxu0
        %v1694 = vadd.f32 %v547, %v1693
        %v1695 = vpop.f32.mrb[0].mxu0
        %v1696 = vadd.f32 %v551, %v1695
        %v1697 = vpop.f32.mrb[0].mxu0
        %v1698 = vadd.f32 %v547, %v1697
        %v1699 = vpop.f32.mrb[0].mxu0
        %v1700 = vadd.f32 %v551, %v1699
        %1701 = vmatprep.mubr.bf16.mxu0 %v619
        %1702 = vmatmul.mubr.bf16.gmra.mrb[0].mxu0 %v618
        %v1703 = vpop.f32.mrb[0].mxu0
        %v1704 = vadd.f32 %v547, %v1703
        %v1705 = vpop.f32.mrb[0].mxu0
        %v1706 = vadd.f32 %v551, %v1705
        %v1707 = vpop.f32.mrb[0].mxu0
        %v1708 = vadd.f32 %v547, %v1707
        %v1709 = vpop.f32.mrb[0].mxu0
        %v1710 = vadd.f32 %v551, %v1709
        %1711 = vmatprep.mubr.bf16.mxu0 %v621
        %1712 = vmatmul.mubr.bf16.gmra.mrb[0].mxu0 %v620
        %v1713 = vpop.f32.mrb[0].mxu0
        %v1714 = vadd.f32 %v547, %v1713
        %v1715 = vpop.f32.mrb[0].mxu0
        %v1716 = vadd.f32 %v551, %v1715
        %v1717 = vpop.f32.mrb[0].mxu0
        %v1718 = vadd.f32 %v547, %v1717
        %v1719 = vpop.f32.mrb[0].mxu0
        %v1720 = vadd.f32 %v551, %v1719
        %1721 = vmatprep.mubr.bf16.mxu0 %v623
        %1722 = vmatmul.mubr.bf16.gmra.mrb[0].mxu0 %v622
        %v1723 = vpop.f32.mrb[0].mxu0
        %v1724 = vadd.f32 %v547, %v1723
        %v1725 = vpop.f32.mrb[0].mxu0
        %v1726 = vadd.f32 %v551, %v1725
        %v1727 = vpop.f32.mrb[0].mxu0
        %v1728 = vadd.f32 %v547, %v1727
        %v1729 = vpop.f32.mrb[0].mxu0
        %v1730 = vadd.f32 %v551, %v1729
        %1731 = vdwg.mxu0
        %v1732 = vmax.f32 %v1315, 0.0
        %v1733 = vmax.f32 %v1317, 0.0
        %v1734 = vmax.f32 %v1428, 0.0
        %v1735 = vmax.f32 %v1430, 0.0
        %v1736 = vmax.f32 %v1541, 0.0
        %v1737 = vmax.f32 %v1543, 0.0
        %v1738 = vmax.f32 %v1654, 0.0
        %v1739 = vmax.f32 %v1656, 0.0
        %v1740 = vmax.f32 %v1319, 0.0
        %v1741 = vmax.f32 %v1321, 0.0
        %v1742 = vmax.f32 %v1432, 0.0
        %v1743 = vmax.f32 %v1434, 0.0
        %v1744 = vmax.f32 %v1545, 0.0
        %v1745 = vmax.f32 %v1547, 0.0
        %v1746 = vmax.f32 %v1658, 0.0
        %v1747 = vmax.f32 %v1660, 0.0
        %v1748 = vmax.f32 %v1325, 0.0
        %v1749 = vmax.f32 %v1327, 0.0
        %v1750 = vmax.f32 %v1438, 0.0
        %v1751 = vmax.f32 %v1440, 0.0
        %v1752 = vmax.f32 %v1551, 0.0
        %v1753 = vmax.f32 %v1553, 0.0
        %v1754 = vmax.f32 %v1664, 0.0
        %v1755 = vmax.f32 %v1666, 0.0
        %v1756 = vmax.f32 %v1329, 0.0
        %v1757 = vmax.f32 %v1331, 0.0
        %v1758 = vmax.f32 %v1442, 0.0
        %v1759 = vmax.f32 %v1444, 0.0
        %v1760 = vmax.f32 %v1555, 0.0
        %v1761 = vmax.f32 %v1557, 0.0
        %v1762 = vmax.f32 %v1668, 0.0
        %v1763 = vmax.f32 %v1670, 0.0
        %v1764 = vmax.f32 %v1335, 0.0
        %v1765 = vmax.f32 %v1337, 0.0
        %v1766 = vmax.f32 %v1448, 0.0
        %v1767 = vmax.f32 %v1450, 0.0
        %v1768 = vmax.f32 %v1561, 0.0
        %v1769 = vmax.f32 %v1563, 0.0
        %v1770 = vmax.f32 %v1674, 0.0
        %v1771 = vmax.f32 %v1676, 0.0
        %v1772 = vmax.f32 %v1339, 0.0
        %v1773 = vmax.f32 %v1341, 0.0
        %v1774 = vmax.f32 %v1452, 0.0
        %v1775 = vmax.f32 %v1454, 0.0
        %v1776 = vmax.f32 %v1565, 0.0
        %v1777 = vmax.f32 %v1567, 0.0
        %v1778 = vmax.f32 %v1678, 0.0
        %v1779 = vmax.f32 %v1680, 0.0
        %v1780 = vmax.f32 %v1345, 0.0
        %v1781 = vmax.f32 %v1347, 0.0
        %v1782 = vmax.f32 %v1458, 0.0
        %v1783 = vmax.f32 %v1460, 0.0
        %v1784 = vmax.f32 %v1571, 0.0
        %v1785 = vmax.f32 %v1573, 0.0
        %v1786 = vmax.f32 %v1684, 0.0
        %v1787 = vmax.f32 %v1686, 0.0
        %v1788 = vmax.f32 %v1349, 0.0
        %v1789 = vmax.f32 %v1351, 0.0
        %v1790 = vmax.f32 %v1462, 0.0
        %v1791 = vmax.f32 %v1464, 0.0
        %v1792 = vmax.f32 %v1575, 0.0
        %v1793 = vmax.f32 %v1577, 0.0
        %v1794 = vmax.f32 %v1688, 0.0
        %v1795 = vmax.f32 %v1690, 0.0
        %v1796 = vmax.f32 %v1355, 0.0
        %v1797 = vmax.f32 %v1357, 0.0
        %v1798 = vmax.f32 %v1468, 0.0
        %v1799 = vmax.f32 %v1470, 0.0
        %v1800 = vmax.f32 %v1581, 0.0
        %v1801 = vmax.f32 %v1583, 0.0
        %v1802 = vmax.f32 %v1694, 0.0
        %v1803 = vmax.f32 %v1696, 0.0
        %v1804 = vmax.f32 %v1359, 0.0
        %v1805 = vmax.f32 %v1361, 0.0
        %v1806 = vmax.f32 %v1472, 0.0
        %v1807 = vmax.f32 %v1474, 0.0
        %v1808 = vmax.f32 %v1585, 0.0
        %v1809 = vmax.f32 %v1587, 0.0
        %v1810 = vmax.f32 %v1698, 0.0
        %v1811 = vmax.f32 %v1700, 0.0
        %v1812 = vmax.f32 %v1365, 0.0
        %v1813 = vmax.f32 %v1367, 0.0
        %v1814 = vmax.f32 %v1478, 0.0
        %v1815 = vmax.f32 %v1480, 0.0
        %v1816 = vmax.f32 %v1591, 0.0
        %v1817 = vmax.f32 %v1593, 0.0
        %v1818 = vmax.f32 %v1704, 0.0
        %v1819 = vmax.f32 %v1706, 0.0
        %v1820 = vmax.f32 %v1369, 0.0
        %v1821 = vmax.f32 %v1371, 0.0
        %v1822 = vmax.f32 %v1482, 0.0
        %v1823 = vmax.f32 %v1484, 0.0
        %v1824 = vmax.f32 %v1595, 0.0
        %v1825 = vmax.f32 %v1597, 0.0
        %v1826 = vmax.f32 %v1708, 0.0
        %v1827 = vmax.f32 %v1710, 0.0
        %v1828 = vmax.f32 %v1375, 0.0
        %v1829 = vmax.f32 %v1377, 0.0
        %v1830 = vmax.f32 %v1488, 0.0
        %v1831 = vmax.f32 %v1490, 0.0
        %v1832 = vmax.f32 %v1601, 0.0
        %v1833 = vmax.f32 %v1603, 0.0
        %v1834 = vmax.f32 %v1714, 0.0
        %v1835 = vmax.f32 %v1716, 0.0
        %v1836 = vmax.f32 %v1379, 0.0
        %v1837 = vmax.f32 %v1381, 0.0
        %v1838 = vmax.f32 %v1492, 0.0
        %v1839 = vmax.f32 %v1494, 0.0
        %v1840 = vmax.f32 %v1605, 0.0
        %v1841 = vmax.f32 %v1607, 0.0
        %v1842 = vmax.f32 %v1718, 0.0
        %v1843 = vmax.f32 %v1720, 0.0
        %v1844 = vmax.f32 %v1385, 0.0
        %v1845 = vmax.f32 %v1387, 0.0
        %v1846 = vmax.f32 %v1498, 0.0
        %v1847 = vmax.f32 %v1500, 0.0
        %v1848 = vmax.f32 %v1611, 0.0
        %v1849 = vmax.f32 %v1613, 0.0
        %v1850 = vmax.f32 %v1724, 0.0
        %v1851 = vmax.f32 %v1726, 0.0
        %v1852 = vmax.f32 %v1389, 0.0
        %v1853 = vmax.f32 %v1391, 0.0
        %v1854 = vmax.f32 %v1502, 0.0
        %v1855 = vmax.f32 %v1504, 0.0
        %v1856 = vmax.f32 %v1615, 0.0
        %v1857 = vmax.f32 %v1617, 0.0
        %v1858 = vmax.f32 %v1728, 0.0
        %v1859 = vmax.f32 %v1730, 0.0
        %v1860 = vpack.c.bf16 %v1740, %v1732
        %v1861 = vpack.c.bf16 %v1741, %v1733
        %v1862 = vpack.c.bf16 %v1742, %v1734
        %v1863 = vpack.c.bf16 %v1743, %v1735
        %v1864 = vpack.c.bf16 %v1744, %v1736
        %v1865 = vpack.c.bf16 %v1745, %v1737
        %v1866 = vpack.c.bf16 %v1746, %v1738
        %v1867 = vpack.c.bf16 %v1747, %v1739
        %v1868 = vpack.c.bf16 %v1756, %v1748
        %v1869 = vpack.c.bf16 %v1757, %v1749
        %v1870 = vpack.c.bf16 %v1758, %v1750
        %v1871 = vpack.c.bf16 %v1759, %v1751
        %v1872 = vpack.c.bf16 %v1760, %v1752
        %v1873 = vpack.c.bf16 %v1761, %v1753
        %v1874 = vpack.c.bf16 %v1762, %v1754
        %v1875 = vpack.c.bf16 %v1763, %v1755
        %v1876 = vpack.c.bf16 %v1772, %v1764
        %v1877 = vpack.c.bf16 %v1773, %v1765
        %v1878 = vpack.c.bf16 %v1774, %v1766
        %v1879 = vpack.c.bf16 %v1775, %v1767
        %v1880 = vpack.c.bf16 %v1776, %v1768
        %v1881 = vpack.c.bf16 %v1777, %v1769
        %v1882 = vpack.c.bf16 %v1778, %v1770
        %v1883 = vpack.c.bf16 %v1779, %v1771
        %v1884 = vpack.c.bf16 %v1788, %v1780
        %v1885 = vpack.c.bf16 %v1789, %v1781
        %v1886 = vpack.c.bf16 %v1790, %v1782
        %v1887 = vpack.c.bf16 %v1791, %v1783
        %v1888 = vpack.c.bf16 %v1792, %v1784
        %v1889 = vpack.c.bf16 %v1793, %v1785
        %v1890 = vpack.c.bf16 %v1794, %v1786
        %v1891 = vpack.c.bf16 %v1795, %v1787
        %v1892 = vpack.c.bf16 %v1804, %v1796
        %v1893 = vpack.c.bf16 %v1805, %v1797
        %v1894 = vpack.c.bf16 %v1806, %v1798
        %v1895 = vpack.c.bf16 %v1807, %v1799
        %v1896 = vpack.c.bf16 %v1808, %v1800
        %v1897 = vpack.c.bf16 %v1809, %v1801
        %v1898 = vpack.c.bf16 %v1810, %v1802
        %v1899 = vpack.c.bf16 %v1811, %v1803
        %v1900 = vpack.c.bf16 %v1820, %v1812
        %v1901 = vpack.c.bf16 %v1821, %v1813
        %v1902 = vpack.c.bf16 %v1822, %v1814
        %v1903 = vpack.c.bf16 %v1823, %v1815
        %v1904 = vpack.c.bf16 %v1824, %v1816
        %v1905 = vpack.c.bf16 %v1825, %v1817
        %v1906 = vpack.c.bf16 %v1826, %v1818
        %v1907 = vpack.c.bf16 %v1827, %v1819
        %v1908 = vpack.c.bf16 %v1836, %v1828
        %v1909 = vpack.c.bf16 %v1837, %v1829
        %v1910 = vpack.c.bf16 %v1838, %v1830
        %v1911 = vpack.c.bf16 %v1839, %v1831
        %v1912 = vpack.c.bf16 %v1840, %v1832
        %v1913 = vpack.c.bf16 %v1841, %v1833
        %v1914 = vpack.c.bf16 %v1842, %v1834
        %v1915 = vpack.c.bf16 %v1843, %v1835
        %v1916 = vpack.c.bf16 %v1852, %v1844
        %v1917 = vpack.c.bf16 %v1853, %v1845
        %v1918 = vpack.c.bf16 %v1854, %v1846
        %v1919 = vpack.c.bf16 %v1855, %v1847
        %v1920 = vpack.c.bf16 %v1856, %v1848
        %v1921 = vpack.c.bf16 %v1857, %v1849
        %v1922 = vpack.c.bf16 %v1858, %v1850
        %v1923 = vpack.c.bf16 %v1859, %v1851
        %v1924 = vld [vmem:[#allocation7] sm:$0xff]
        %v1925 = vld [vmem:[#allocation7 + $0x8] sm:$0xff]
        %v1926 = vld [vmem:[#allocation7 + $0x10] sm:$0xff]
        %v1927 = vld [vmem:[#allocation7 + $0x18] sm:$0xff]
        %v1928 = vld [vmem:[#allocation7 + $0x20] sm:$0xff]
        %v1929 = vld [vmem:[#allocation7 + $0x28] sm:$0xff]
        %v1930 = vld [vmem:[#allocation7 + $0x30] sm:$0xff]
        %v1931 = vld [vmem:[#allocation7 + $0x38] sm:$0xff]
        %v1932 = vld [vmem:[#allocation7 + $0x40] sm:$0xff]
        %v1933 = vld [vmem:[#allocation7 + $0x48] sm:$0xff]
        %v1934 = vld [vmem:[#allocation7 + $0x50] sm:$0xff]
        %v1935 = vld [vmem:[#allocation7 + $0x58] sm:$0xff]
        %v1936 = vld [vmem:[#allocation7 + $0x60] sm:$0xff]
        %v1937 = vld [vmem:[#allocation7 + $0x68] sm:$0xff]
        %v1938 = vld [vmem:[#allocation7 + $0x70] sm:$0xff]
        %v1939 = vld [vmem:[#allocation7 + $0x78] sm:$0xff]
        %v1940 = vld [vmem:[#allocation7 + $0x80] sm:$0xff]
        %v1941 = vld [vmem:[#allocation7 + $0x88] sm:$0xff]
        %v1942 = vld [vmem:[#allocation7 + $0x90] sm:$0xff]
        %v1943 = vld [vmem:[#allocation7 + $0x98] sm:$0xff]
        %v1944 = vld [vmem:[#allocation7 + $0xa0] sm:$0xff]
        %v1945 = vld [vmem:[#allocation7 + $0xa8] sm:$0xff]
        %v1946 = vld [vmem:[#allocation7 + $0xb0] sm:$0xff]
        %v1947 = vld [vmem:[#allocation7 + $0xb8] sm:$0xff]
        %v1948 = vld [vmem:[#allocation7 + $0xc0] sm:$0xff]
        %v1949 = vld [vmem:[#allocation7 + $0xc8] sm:$0xff]
        %v1950 = vld [vmem:[#allocation7 + $0xd0] sm:$0xff]
        %v1951 = vld [vmem:[#allocation7 + $0xd8] sm:$0xff]
        %v1952 = vld [vmem:[#allocation7 + $0xe0] sm:$0xff]
        %v1953 = vld [vmem:[#allocation7 + $0xe8] sm:$0xff]
        %v1954 = vld [vmem:[#allocation7 + $0xf0] sm:$0xff]
        %v1955 = vld [vmem:[#allocation7 + $0xf8] sm:$0xff]
        %v1956 = vld [vmem:[#allocation7 + $0x100] sm:$0xff]
        %v1957 = vld [vmem:[#allocation7 + $0x108] sm:$0xff]
        %v1958 = vld [vmem:[#allocation7 + $0x110] sm:$0xff]
        %v1959 = vld [vmem:[#allocation7 + $0x118] sm:$0xff]
        %v1960 = vld [vmem:[#allocation7 + $0x120] sm:$0xff]
        %v1961 = vld [vmem:[#allocation7 + $0x128] sm:$0xff]
        %v1962 = vld [vmem:[#allocation7 + $0x130] sm:$0xff]
        %v1963 = vld [vmem:[#allocation7 + $0x138] sm:$0xff]
        %v1964 = vld [vmem:[#allocation7 + $0x140] sm:$0xff]
        %v1965 = vld [vmem:[#allocation7 + $0x148] sm:$0xff]
        %v1966 = vld [vmem:[#allocation7 + $0x150] sm:$0xff]
        %v1967 = vld [vmem:[#allocation7 + $0x158] sm:$0xff]
        %v1968 = vld [vmem:[#allocation7 + $0x160] sm:$0xff]
        %v1969 = vld [vmem:[#allocation7 + $0x168] sm:$0xff]
        %v1970 = vld [vmem:[#allocation7 + $0x170] sm:$0xff]
        %v1971 = vld [vmem:[#allocation7 + $0x178] sm:$0xff]
        %v1972 = vld [vmem:[#allocation7 + $0x180] sm:$0xff]
        %v1973 = vld [vmem:[#allocation7 + $0x188] sm:$0xff]
        %v1974 = vld [vmem:[#allocation7 + $0x190] sm:$0xff]
        %v1975 = vld [vmem:[#allocation7 + $0x198] sm:$0xff]
        %v1976 = vld [vmem:[#allocation7 + $0x1a0] sm:$0xff]
        %v1977 = vld [vmem:[#allocation7 + $0x1a8] sm:$0xff]
        %v1978 = vld [vmem:[#allocation7 + $0x1b0] sm:$0xff]
        %v1979 = vld [vmem:[#allocation7 + $0x1b8] sm:$0xff]
        %v1980 = vld [vmem:[#allocation7 + $0x1c0] sm:$0xff]
        %v1981 = vld [vmem:[#allocation7 + $0x1c8] sm:$0xff]
        %v1982 = vld [vmem:[#allocation7 + $0x1d0] sm:$0xff]
        %v1983 = vld [vmem:[#allocation7 + $0x1d8] sm:$0xff]
        %v1984 = vld [vmem:[#allocation7 + $0x1e0] sm:$0xff]
        %v1985 = vld [vmem:[#allocation7 + $0x1e8] sm:$0xff]
        %v1986 = vld [vmem:[#allocation7 + $0x1f0] sm:$0xff]
        %v1987 = vld [vmem:[#allocation7 + $0x1f8] sm:$0xff]
        %v1988 = vld [vmem:[#allocation7 + $0x200] sm:$0xff]
        %v1989 = vld [vmem:[#allocation7 + $0x208] sm:$0xff]
        %v1990 = vld [vmem:[#allocation7 + $0x210] sm:$0xff]
        %v1991 = vld [vmem:[#allocation7 + $0x218] sm:$0xff]
        %v1992 = vld [vmem:[#allocation7 + $0x220] sm:$0xff]
        %v1993 = vld [vmem:[#allocation7 + $0x228] sm:$0xff]
        %v1994 = vld [vmem:[#allocation7 + $0x230] sm:$0xff]
        %v1995 = vld [vmem:[#allocation7 + $0x238] sm:$0xff]
        %v1996 = vld [vmem:[#allocation7 + $0x240] sm:$0xff]
        %v1997 = vld [vmem:[#allocation7 + $0x248] sm:$0xff]
        %v1998 = vld [vmem:[#allocation7 + $0x250] sm:$0xff]
        %v1999 = vld [vmem:[#allocation7 + $0x258] sm:$0xff]
        %v2000 = vld [vmem:[#allocation7 + $0x260] sm:$0xff]
        %v2001 = vld [vmem:[#allocation7 + $0x268] sm:$0xff]
        %v2002 = vld [vmem:[#allocation7 + $0x270] sm:$0xff]
        %v2003 = vld [vmem:[#allocation7 + $0x278] sm:$0xff]
        %v2004 = vld [vmem:[#allocation7 + $0x280] sm:$0xff]
        %v2005 = vld [vmem:[#allocation7 + $0x288] sm:$0xff]
        %v2006 = vld [vmem:[#allocation7 + $0x290] sm:$0xff]
        %v2007 = vld [vmem:[#allocation7 + $0x298] sm:$0xff]
        %v2008 = vld [vmem:[#allocation7 + $0x2a0] sm:$0xff]
        %v2009 = vld [vmem:[#allocation7 + $0x2a8] sm:$0xff]
        %v2010 = vld [vmem:[#allocation7 + $0x2b0] sm:$0xff]
        %v2011 = vld [vmem:[#allocation7 + $0x2b8] sm:$0xff]
        %v2012 = vld [vmem:[#allocation7 + $0x2c0] sm:$0xff]
        %v2013 = vld [vmem:[#allocation7 + $0x2c8] sm:$0xff]
        %v2014 = vld [vmem:[#allocation7 + $0x2d0] sm:$0xff]
        %v2015 = vld [vmem:[#allocation7 + $0x2d8] sm:$0xff]
        %v2016 = vld [vmem:[#allocation7 + $0x2e0] sm:$0xff]
        %v2017 = vld [vmem:[#allocation7 + $0x2e8] sm:$0xff]
        %v2018 = vld [vmem:[#allocation7 + $0x2f0] sm:$0xff]
        %v2019 = vld [vmem:[#allocation7 + $0x2f8] sm:$0xff]
        %v2020 = vld [vmem:[#allocation7 + $0x300] sm:$0xff]
        %v2021 = vld [vmem:[#allocation7 + $0x308] sm:$0xff]
        %v2022 = vld [vmem:[#allocation7 + $0x310] sm:$0xff]
        %v2023 = vld [vmem:[#allocation7 + $0x318] sm:$0xff]
        %v2024 = vld [vmem:[#allocation7 + $0x320] sm:$0xff]
        %v2025 = vld [vmem:[#allocation7 + $0x328] sm:$0xff]
        %v2026 = vld [vmem:[#allocation7 + $0x330] sm:$0xff]
        %v2027 = vld [vmem:[#allocation7 + $0x338] sm:$0xff]
        %v2028 = vld [vmem:[#allocation7 + $0x340] sm:$0xff]
        %v2029 = vld [vmem:[#allocation7 + $0x348] sm:$0xff]
        %v2030 = vld [vmem:[#allocation7 + $0x350] sm:$0xff]
        %v2031 = vld [vmem:[#allocation7 + $0x358] sm:$0xff]
        %v2032 = vld [vmem:[#allocation7 + $0x360] sm:$0xff]
        %v2033 = vld [vmem:[#allocation7 + $0x368] sm:$0xff]
        %v2034 = vld [vmem:[#allocation7 + $0x370] sm:$0xff]
        %v2035 = vld [vmem:[#allocation7 + $0x378] sm:$0xff]
        %v2036 = vld [vmem:[#allocation7 + $0x380] sm:$0xff]
        %v2037 = vld [vmem:[#allocation7 + $0x388] sm:$0xff]
        %v2038 = vld [vmem:[#allocation7 + $0x390] sm:$0xff]
        %v2039 = vld [vmem:[#allocation7 + $0x398] sm:$0xff]
        %v2040 = vld [vmem:[#allocation7 + $0x3a0] sm:$0xff]
        %v2041 = vld [vmem:[#allocation7 + $0x3a8] sm:$0xff]
        %v2042 = vld [vmem:[#allocation7 + $0x3b0] sm:$0xff]
        %v2043 = vld [vmem:[#allocation7 + $0x3b8] sm:$0xff]
        %v2044 = vld [vmem:[#allocation7 + $0x3c0] sm:$0xff]
        %v2045 = vld [vmem:[#allocation7 + $0x3c8] sm:$0xff]
        %v2046 = vld [vmem:[#allocation7 + $0x3d0] sm:$0xff]
        %v2047 = vld [vmem:[#allocation7 + $0x3d8] sm:$0xff]
        %v2048 = vld [vmem:[#allocation7 + $0x3e0] sm:$0xff]
        %v2049 = vld [vmem:[#allocation7 + $0x3e8] sm:$0xff]
        %v2050 = vld [vmem:[#allocation7 + $0x3f0] sm:$0xff]
        %v2051 = vld [vmem:[#allocation7 + $0x3f8] sm:$0xff]
        %v2052 = vld [vmem:[#allocation7 + $0x400] sm:$0xff]
        %v2053 = vld [vmem:[#allocation7 + $0x408] sm:$0xff]
        %v2054 = vld [vmem:[#allocation7 + $0x410] sm:$0xff]
        %v2055 = vld [vmem:[#allocation7 + $0x418] sm:$0xff]
        %v2056 = vld [vmem:[#allocation7 + $0x420] sm:$0xff]
        %v2057 = vld [vmem:[#allocation7 + $0x428] sm:$0xff]
        %v2058 = vld [vmem:[#allocation7 + $0x430] sm:$0xff]
        %v2059 = vld [vmem:[#allocation7 + $0x438] sm:$0xff]
        %v2060 = vld [vmem:[#allocation7 + $0x440] sm:$0xff]
        %v2061 = vld [vmem:[#allocation7 + $0x448] sm:$0xff]
        %v2062 = vld [vmem:[#allocation7 + $0x450] sm:$0xff]
        %v2063 = vld [vmem:[#allocation7 + $0x458] sm:$0xff]
        %v2064 = vld [vmem:[#allocation7 + $0x460] sm:$0xff]
        %v2065 = vld [vmem:[#allocation7 + $0x468] sm:$0xff]
        %v2066 = vld [vmem:[#allocation7 + $0x470] sm:$0xff]
        %v2067 = vld [vmem:[#allocation7 + $0x478] sm:$0xff]
        %v2068 = vld [vmem:[#allocation7 + $0x480] sm:$0xff]
        %v2069 = vld [vmem:[#allocation7 + $0x488] sm:$0xff]
        %v2070 = vld [vmem:[#allocation7 + $0x490] sm:$0xff]
        %v2071 = vld [vmem:[#allocation7 + $0x498] sm:$0xff]
        %v2072 = vld [vmem:[#allocation7 + $0x4a0] sm:$0xff]
        %v2073 = vld [vmem:[#allocation7 + $0x4a8] sm:$0xff]
        %v2074 = vld [vmem:[#allocation7 + $0x4b0] sm:$0xff]
        %v2075 = vld [vmem:[#allocation7 + $0x4b8] sm:$0xff]
        %v2076 = vld [vmem:[#allocation7 + $0x4c0] sm:$0xff]
        %v2077 = vld [vmem:[#allocation7 + $0x4c8] sm:$0xff]
        %v2078 = vld [vmem:[#allocation7 + $0x4d0] sm:$0xff]
        %v2079 = vld [vmem:[#allocation7 + $0x4d8] sm:$0xff]
        %v2080 = vld [vmem:[#allocation7 + $0x4e0] sm:$0xff]
        %v2081 = vld [vmem:[#allocation7 + $0x4e8] sm:$0xff]
        %v2082 = vld [vmem:[#allocation7 + $0x4f0] sm:$0xff]
        %v2083 = vld [vmem:[#allocation7 + $0x4f8] sm:$0xff]
        %v2084 = vld [vmem:[#allocation7 + $0x500] sm:$0xff]
        %v2085 = vld [vmem:[#allocation7 + $0x508] sm:$0xff]
        %v2086 = vld [vmem:[#allocation7 + $0x510] sm:$0xff]
        %v2087 = vld [vmem:[#allocation7 + $0x518] sm:$0xff]
        %v2088 = vld [vmem:[#allocation7 + $0x520] sm:$0xff]
        %v2089 = vld [vmem:[#allocation7 + $0x528] sm:$0xff]
        %v2090 = vld [vmem:[#allocation7 + $0x530] sm:$0xff]
        %v2091 = vld [vmem:[#allocation7 + $0x538] sm:$0xff]
        %v2092 = vld [vmem:[#allocation7 + $0x540] sm:$0xff]
        %v2093 = vld [vmem:[#allocation7 + $0x548] sm:$0xff]
        %v2094 = vld [vmem:[#allocation7 + $0x550] sm:$0xff]
        %v2095 = vld [vmem:[#allocation7 + $0x558] sm:$0xff]
        %v2096 = vld [vmem:[#allocation7 + $0x560] sm:$0xff]
        %v2097 = vld [vmem:[#allocation7 + $0x568] sm:$0xff]
        %v2098 = vld [vmem:[#allocation7 + $0x570] sm:$0xff]
        %v2099 = vld [vmem:[#allocation7 + $0x578] sm:$0xff]
        %v2100 = vld [vmem:[#allocation7 + $0x580] sm:$0xff]
        %v2101 = vld [vmem:[#allocation7 + $0x588] sm:$0xff]
        %v2102 = vld [vmem:[#allocation7 + $0x590] sm:$0xff]
        %v2103 = vld [vmem:[#allocation7 + $0x598] sm:$0xff]
        %v2104 = vld [vmem:[#allocation7 + $0x5a0] sm:$0xff]
        %v2105 = vld [vmem:[#allocation7 + $0x5a8] sm:$0xff]
        %v2106 = vld [vmem:[#allocation7 + $0x5b0] sm:$0xff]
        %v2107 = vld [vmem:[#allocation7 + $0x5b8] sm:$0xff]
        %v2108 = vld [vmem:[#allocation7 + $0x5c0] sm:$0xff]
        %v2109 = vld [vmem:[#allocation7 + $0x5c8] sm:$0xff]
        %v2110 = vld [vmem:[#allocation7 + $0x5d0] sm:$0xff]
        %v2111 = vld [vmem:[#allocation7 + $0x5d8] sm:$0xff]
        %v2112 = vld [vmem:[#allocation7 + $0x5e0] sm:$0xff]
        %v2113 = vld [vmem:[#allocation7 + $0x5e8] sm:$0xff]
        %v2114 = vld [vmem:[#allocation7 + $0x5f0] sm:$0xff]
        %v2115 = vld [vmem:[#allocation7 + $0x5f8] sm:$0xff]
        %v2116 = vld [vmem:[#allocation7 + $0x600] sm:$0xff]
        %v2117 = vld [vmem:[#allocation7 + $0x608] sm:$0xff]
        %v2118 = vld [vmem:[#allocation7 + $0x610] sm:$0xff]
        %v2119 = vld [vmem:[#allocation7 + $0x618] sm:$0xff]
        %v2120 = vld [vmem:[#allocation7 + $0x620] sm:$0xff]
        %v2121 = vld [vmem:[#allocation7 + $0x628] sm:$0xff]
        %v2122 = vld [vmem:[#allocation7 + $0x630] sm:$0xff]
        %v2123 = vld [vmem:[#allocation7 + $0x638] sm:$0xff]
        %v2124 = vld [vmem:[#allocation7 + $0x640] sm:$0xff]
        %v2125 = vld [vmem:[#allocation7 + $0x648] sm:$0xff]
        %v2126 = vld [vmem:[#allocation7 + $0x650] sm:$0xff]
        %v2127 = vld [vmem:[#allocation7 + $0x658] sm:$0xff]
        %v2128 = vld [vmem:[#allocation7 + $0x660] sm:$0xff]
        %v2129 = vld [vmem:[#allocation7 + $0x668] sm:$0xff]
        %v2130 = vld [vmem:[#allocation7 + $0x670] sm:$0xff]
        %v2131 = vld [vmem:[#allocation7 + $0x678] sm:$0xff]
        %v2132 = vld [vmem:[#allocation7 + $0x680] sm:$0xff]
        %v2133 = vld [vmem:[#allocation7 + $0x688] sm:$0xff]
        %v2134 = vld [vmem:[#allocation7 + $0x690] sm:$0xff]
        %v2135 = vld [vmem:[#allocation7 + $0x698] sm:$0xff]
        %v2136 = vld [vmem:[#allocation7 + $0x6a0] sm:$0xff]
        %v2137 = vld [vmem:[#allocation7 + $0x6a8] sm:$0xff]
        %v2138 = vld [vmem:[#allocation7 + $0x6b0] sm:$0xff]
        %v2139 = vld [vmem:[#allocation7 + $0x6b8] sm:$0xff]
        %v2140 = vld [vmem:[#allocation7 + $0x6c0] sm:$0xff]
        %v2141 = vld [vmem:[#allocation7 + $0x6c8] sm:$0xff]
        %v2142 = vld [vmem:[#allocation7 + $0x6d0] sm:$0xff]
        %v2143 = vld [vmem:[#allocation7 + $0x6d8] sm:$0xff]
        %v2144 = vld [vmem:[#allocation7 + $0x6e0] sm:$0xff]
        %v2145 = vld [vmem:[#allocation7 + $0x6e8] sm:$0xff]
        %v2146 = vld [vmem:[#allocation7 + $0x6f0] sm:$0xff]
        %v2147 = vld [vmem:[#allocation7 + $0x6f8] sm:$0xff]
        %v2148 = vld [vmem:[#allocation7 + $0x700] sm:$0xff]
        %v2149 = vld [vmem:[#allocation7 + $0x708] sm:$0xff]
        %v2150 = vld [vmem:[#allocation7 + $0x710] sm:$0xff]
        %v2151 = vld [vmem:[#allocation7 + $0x718] sm:$0xff]
        %v2152 = vld [vmem:[#allocation7 + $0x720] sm:$0xff]
        %v2153 = vld [vmem:[#allocation7 + $0x728] sm:$0xff]
        %v2154 = vld [vmem:[#allocation7 + $0x730] sm:$0xff]
        %v2155 = vld [vmem:[#allocation7 + $0x738] sm:$0xff]
        %v2156 = vld [vmem:[#allocation7 + $0x740] sm:$0xff]
        %v2157 = vld [vmem:[#allocation7 + $0x748] sm:$0xff]
        %v2158 = vld [vmem:[#allocation7 + $0x750] sm:$0xff]
        %v2159 = vld [vmem:[#allocation7 + $0x758] sm:$0xff]
        %v2160 = vld [vmem:[#allocation7 + $0x760] sm:$0xff]
        %v2161 = vld [vmem:[#allocation7 + $0x768] sm:$0xff]
        %v2162 = vld [vmem:[#allocation7 + $0x770] sm:$0xff]
        %v2163 = vld [vmem:[#allocation7 + $0x778] sm:$0xff]
        %v2164 = vld [vmem:[#allocation7 + $0x780] sm:$0xff]
        %v2165 = vld [vmem:[#allocation7 + $0x788] sm:$0xff]
        %v2166 = vld [vmem:[#allocation7 + $0x790] sm:$0xff]
        %v2167 = vld [vmem:[#allocation7 + $0x798] sm:$0xff]
        %v2168 = vld [vmem:[#allocation7 + $0x7a0] sm:$0xff]
        %v2169 = vld [vmem:[#allocation7 + $0x7a8] sm:$0xff]
        %v2170 = vld [vmem:[#allocation7 + $0x7b0] sm:$0xff]
        %v2171 = vld [vmem:[#allocation7 + $0x7b8] sm:$0xff]
        %v2172 = vld [vmem:[#allocation7 + $0x7c0] sm:$0xff]
        %v2173 = vld [vmem:[#allocation7 + $0x7c8] sm:$0xff]
        %v2174 = vld [vmem:[#allocation7 + $0x7d0] sm:$0xff]
        %v2175 = vld [vmem:[#allocation7 + $0x7d8] sm:$0xff]
        %v2176 = vld [vmem:[#allocation7 + $0x7e0] sm:$0xff]
        %v2177 = vld [vmem:[#allocation7 + $0x7e8] sm:$0xff]
        %v2178 = vld [vmem:[#allocation7 + $0x7f0] sm:$0xff]
        %v2179 = vld [vmem:[#allocation7 + $0x7f8] sm:$0xff]
        %v2180 = vld [vmem:[%s6 + $0x8] sm:$0xf]
        %v2182 = vlaneseq
        %v2183 = vshrl.u32 %v2182, 7
        %v2184 = vsub.s32 0, %v2183
        %v2185 = vrot.slane %v2180, %v2184
        %v2186 = vlaneseq
        %v2187 = vshrl.u32 %v2186, 7
        %v2188 = vsub.s32 1, %v2187
        %v2189 = vrot.slane %v2180, %v2188
        %v2190 = vlaneseq
        %v2191 = vshrl.u32 %v2190, 7
        %v2192 = vsub.s32 2, %v2191
        %v2193 = vrot.slane %v2180, %v2192
        %v2194 = vlaneseq
        %v2195 = vshrl.u32 %v2194, 7
        %v2196 = vsub.s32 3, %v2195
        %v2197 = vrot.slane %v2180, %v2196
        %v2458 = vunpack.c.l.b16 %v1924
        %v2459 = vunpack.c.h.b16 %v1924
        %v2460 = vunpack.c.l.b16 %v1925
        %v2461 = vunpack.c.h.b16 %v1925
        %v2462 = vunpack.c.l.b16 %v1926
        %v2463 = vunpack.c.h.b16 %v1926
        %v2464 = vunpack.c.l.b16 %v1927
        %v2465 = vunpack.c.h.b16 %v1927
        %v2466 = vunpack.c.l.b16 %v1928
        %v2467 = vunpack.c.h.b16 %v1928
        %v2468 = vunpack.c.l.b16 %v1929
        %v2469 = vunpack.c.h.b16 %v1929
        %v2470 = vunpack.c.l.b16 %v1930
        %v2471 = vunpack.c.h.b16 %v1930
        %v2472 = vunpack.c.l.b16 %v1931
        %v2473 = vunpack.c.h.b16 %v1931
        %v2474 = vunpack.c.l.b16 %v1932
        %v2475 = vunpack.c.h.b16 %v1932
        %v2476 = vunpack.c.l.b16 %v1933
        %v2477 = vunpack.c.h.b16 %v1933
        %v2478 = vunpack.c.l.b16 %v1934
        %v2479 = vunpack.c.h.b16 %v1934
        %v2480 = vunpack.c.l.b16 %v1935
        %v2481 = vunpack.c.h.b16 %v1935
        %v2482 = vunpack.c.l.b16 %v1936
        %v2483 = vunpack.c.h.b16 %v1936
        %v2484 = vunpack.c.l.b16 %v1937
        %v2485 = vunpack.c.h.b16 %v1937
        %v2486 = vunpack.c.l.b16 %v1938
        %v2487 = vunpack.c.h.b16 %v1938
        %v2488 = vunpack.c.l.b16 %v1939
        %v2489 = vunpack.c.h.b16 %v1939
        %v2490 = vunpack.c.l.b16 %v1940
        %v2491 = vunpack.c.h.b16 %v1940
        %v2492 = vunpack.c.l.b16 %v1941
        %v2493 = vunpack.c.h.b16 %v1941
        %v2494 = vunpack.c.l.b16 %v1942
        %v2495 = vunpack.c.h.b16 %v1942
        %v2496 = vunpack.c.l.b16 %v1943
        %v2497 = vunpack.c.h.b16 %v1943
        %v2498 = vunpack.c.l.b16 %v1944
        %v2499 = vunpack.c.h.b16 %v1944
        %v2500 = vunpack.c.l.b16 %v1945
        %v2501 = vunpack.c.h.b16 %v1945
        %v2502 = vunpack.c.l.b16 %v1946
        %v2503 = vunpack.c.h.b16 %v1946
        %v2504 = vunpack.c.l.b16 %v1947
        %v2505 = vunpack.c.h.b16 %v1947
        %v2506 = vunpack.c.l.b16 %v1948
        %v2507 = vunpack.c.h.b16 %v1948
        %v2508 = vunpack.c.l.b16 %v1949
        %v2509 = vunpack.c.h.b16 %v1949
        %v2510 = vunpack.c.l.b16 %v1950
        %v2511 = vunpack.c.h.b16 %v1950
        %v2512 = vunpack.c.l.b16 %v1951
        %v2513 = vunpack.c.h.b16 %v1951
        %v2514 = vunpack.c.l.b16 %v1952
        %v2515 = vunpack.c.h.b16 %v1952
        %v2516 = vunpack.c.l.b16 %v1953
        %v2517 = vunpack.c.h.b16 %v1953
        %v2518 = vunpack.c.l.b16 %v1954
        %v2519 = vunpack.c.h.b16 %v1954
        %v2520 = vunpack.c.l.b16 %v1955
        %v2521 = vunpack.c.h.b16 %v1955
        %v2522 = vunpack.c.l.b16 %v1956
        %v2523 = vunpack.c.h.b16 %v1956
        %v2524 = vunpack.c.l.b16 %v1957
        %v2525 = vunpack.c.h.b16 %v1957
        %v2526 = vunpack.c.l.b16 %v1958
        %v2527 = vunpack.c.h.b16 %v1958
        %v2528 = vunpack.c.l.b16 %v1959
        %v2529 = vunpack.c.h.b16 %v1959
        %v2530 = vunpack.c.l.b16 %v1960
        %v2531 = vunpack.c.h.b16 %v1960
        %v2532 = vunpack.c.l.b16 %v1961
        %v2533 = vunpack.c.h.b16 %v1961
        %v2534 = vunpack.c.l.b16 %v1962
        %v2535 = vunpack.c.h.b16 %v1962
        %v2536 = vunpack.c.l.b16 %v1963
        %v2537 = vunpack.c.h.b16 %v1963
        %v2538 = vunpack.c.l.b16 %v1964
        %v2539 = vunpack.c.h.b16 %v1964
        %v2540 = vunpack.c.l.b16 %v1965
        %v2541 = vunpack.c.h.b16 %v1965
        %v2542 = vunpack.c.l.b16 %v1966
        %v2543 = vunpack.c.h.b16 %v1966
        %v2544 = vunpack.c.l.b16 %v1967
        %v2545 = vunpack.c.h.b16 %v1967
        %v2546 = vunpack.c.l.b16 %v1968
        %v2547 = vunpack.c.h.b16 %v1968
        %v2548 = vunpack.c.l.b16 %v1969
        %v2549 = vunpack.c.h.b16 %v1969
        %v2550 = vunpack.c.l.b16 %v1970
        %v2551 = vunpack.c.h.b16 %v1970
        %v2552 = vunpack.c.l.b16 %v1971
        %v2553 = vunpack.c.h.b16 %v1971
        %v2554 = vunpack.c.l.b16 %v1972
        %v2555 = vunpack.c.h.b16 %v1972
        %v2556 = vunpack.c.l.b16 %v1973
        %v2557 = vunpack.c.h.b16 %v1973
        %v2558 = vunpack.c.l.b16 %v1974
        %v2559 = vunpack.c.h.b16 %v1974
        %v2560 = vunpack.c.l.b16 %v1975
        %v2561 = vunpack.c.h.b16 %v1975
        %v2562 = vunpack.c.l.b16 %v1976
        %v2563 = vunpack.c.h.b16 %v1976
        %v2564 = vunpack.c.l.b16 %v1977
        %v2565 = vunpack.c.h.b16 %v1977
        %v2566 = vunpack.c.l.b16 %v1978
        %v2567 = vunpack.c.h.b16 %v1978
        %v2568 = vunpack.c.l.b16 %v1979
        %v2569 = vunpack.c.h.b16 %v1979
        %v2570 = vunpack.c.l.b16 %v1980
        %v2571 = vunpack.c.h.b16 %v1980
        %v2572 = vunpack.c.l.b16 %v1981
        %v2573 = vunpack.c.h.b16 %v1981
        %v2574 = vunpack.c.l.b16 %v1982
        %v2575 = vunpack.c.h.b16 %v1982
        %v2576 = vunpack.c.l.b16 %v1983
        %v2577 = vunpack.c.h.b16 %v1983
        %v2578 = vunpack.c.l.b16 %v1984
        %v2579 = vunpack.c.h.b16 %v1984
        %v2580 = vunpack.c.l.b16 %v1985
        %v2581 = vunpack.c.h.b16 %v1985
        %v2582 = vunpack.c.l.b16 %v1986
        %v2583 = vunpack.c.h.b16 %v1986
        %v2584 = vunpack.c.l.b16 %v1987
        %v2585 = vunpack.c.h.b16 %v1987
        %v2586 = vunpack.c.l.b16 %v1988
        %v2587 = vunpack.c.h.b16 %v1988
        %v2588 = vunpack.c.l.b16 %v1989
        %v2589 = vunpack.c.h.b16 %v1989
        %v2590 = vunpack.c.l.b16 %v1990
        %v2591 = vunpack.c.h.b16 %v1990
        %v2592 = vunpack.c.l.b16 %v1991
        %v2593 = vunpack.c.h.b16 %v1991
        %v2594 = vunpack.c.l.b16 %v1992
        %v2595 = vunpack.c.h.b16 %v1992
        %v2596 = vunpack.c.l.b16 %v1993
        %v2597 = vunpack.c.h.b16 %v1993
        %v2598 = vunpack.c.l.b16 %v1994
        %v2599 = vunpack.c.h.b16 %v1994
        %v2600 = vunpack.c.l.b16 %v1995
        %v2601 = vunpack.c.h.b16 %v1995
        %v2602 = vunpack.c.l.b16 %v1996
        %v2603 = vunpack.c.h.b16 %v1996
        %v2604 = vunpack.c.l.b16 %v1997
        %v2605 = vunpack.c.h.b16 %v1997
        %v2606 = vunpack.c.l.b16 %v1998
        %v2607 = vunpack.c.h.b16 %v1998
        %v2608 = vunpack.c.l.b16 %v1999
        %v2609 = vunpack.c.h.b16 %v1999
        %v2610 = vunpack.c.l.b16 %v2000
        %v2611 = vunpack.c.h.b16 %v2000
        %v2612 = vunpack.c.l.b16 %v2001
        %v2613 = vunpack.c.h.b16 %v2001
        %v2614 = vunpack.c.l.b16 %v2002
        %v2615 = vunpack.c.h.b16 %v2002
        %v2616 = vunpack.c.l.b16 %v2003
        %v2617 = vunpack.c.h.b16 %v2003
        %v2618 = vunpack.c.l.b16 %v2004
        %v2619 = vunpack.c.h.b16 %v2004
        %v2620 = vunpack.c.l.b16 %v2005
        %v2621 = vunpack.c.h.b16 %v2005
        %v2622 = vunpack.c.l.b16 %v2006
        %v2623 = vunpack.c.h.b16 %v2006
        %v2624 = vunpack.c.l.b16 %v2007
        %v2625 = vunpack.c.h.b16 %v2007
        %v2626 = vunpack.c.l.b16 %v2008
        %v2627 = vunpack.c.h.b16 %v2008
        %v2628 = vunpack.c.l.b16 %v2009
        %v2629 = vunpack.c.h.b16 %v2009
        %v2630 = vunpack.c.l.b16 %v2010
        %v2631 = vunpack.c.h.b16 %v2010
        %v2632 = vunpack.c.l.b16 %v2011
        %v2633 = vunpack.c.h.b16 %v2011
        %v2634 = vunpack.c.l.b16 %v2012
        %v2635 = vunpack.c.h.b16 %v2012
        %v2636 = vunpack.c.l.b16 %v2013
        %v2637 = vunpack.c.h.b16 %v2013
        %v2638 = vunpack.c.l.b16 %v2014
        %v2639 = vunpack.c.h.b16 %v2014
        %v2640 = vunpack.c.l.b16 %v2015
        %v2641 = vunpack.c.h.b16 %v2015
        %v2642 = vunpack.c.l.b16 %v2016
        %v2643 = vunpack.c.h.b16 %v2016
        %v2644 = vunpack.c.l.b16 %v2017
        %v2645 = vunpack.c.h.b16 %v2017
        %v2646 = vunpack.c.l.b16 %v2018
        %v2647 = vunpack.c.h.b16 %v2018
        %v2648 = vunpack.c.l.b16 %v2019
        %v2649 = vunpack.c.h.b16 %v2019
        %v2650 = vunpack.c.l.b16 %v2020
        %v2651 = vunpack.c.h.b16 %v2020
        %v2652 = vunpack.c.l.b16 %v2021
        %v2653 = vunpack.c.h.b16 %v2021
        %v2654 = vunpack.c.l.b16 %v2022
        %v2655 = vunpack.c.h.b16 %v2022
        %v2656 = vunpack.c.l.b16 %v2023
        %v2657 = vunpack.c.h.b16 %v2023
        %v2658 = vunpack.c.l.b16 %v2024
        %v2659 = vunpack.c.h.b16 %v2024
        %v2660 = vunpack.c.l.b16 %v2025
        %v2661 = vunpack.c.h.b16 %v2025
        %v2662 = vunpack.c.l.b16 %v2026
        %v2663 = vunpack.c.h.b16 %v2026
        %v2664 = vunpack.c.l.b16 %v2027
        %v2665 = vunpack.c.h.b16 %v2027
        %v2666 = vunpack.c.l.b16 %v2028
        %v2667 = vunpack.c.h.b16 %v2028
        %v2668 = vunpack.c.l.b16 %v2029
        %v2669 = vunpack.c.h.b16 %v2029
        %v2670 = vunpack.c.l.b16 %v2030
        %v2671 = vunpack.c.h.b16 %v2030
        %v2672 = vunpack.c.l.b16 %v2031
        %v2673 = vunpack.c.h.b16 %v2031
        %v2674 = vunpack.c.l.b16 %v2032
        %v2675 = vunpack.c.h.b16 %v2032
        %v2676 = vunpack.c.l.b16 %v2033
        %v2677 = vunpack.c.h.b16 %v2033
        %v2678 = vunpack.c.l.b16 %v2034
        %v2679 = vunpack.c.h.b16 %v2034
        %v2680 = vunpack.c.l.b16 %v2035
        %v2681 = vunpack.c.h.b16 %v2035
        %v2682 = vunpack.c.l.b16 %v2036
        %v2683 = vunpack.c.h.b16 %v2036
        %v2684 = vunpack.c.l.b16 %v2037
        %v2685 = vunpack.c.h.b16 %v2037
        %v2686 = vunpack.c.l.b16 %v2038
        %v2687 = vunpack.c.h.b16 %v2038
        %v2688 = vunpack.c.l.b16 %v2039
        %v2689 = vunpack.c.h.b16 %v2039
        %v2690 = vunpack.c.l.b16 %v2040
        %v2691 = vunpack.c.h.b16 %v2040
        %v2692 = vunpack.c.l.b16 %v2041
        %v2693 = vunpack.c.h.b16 %v2041
        %v2694 = vunpack.c.l.b16 %v2042
        %v2695 = vunpack.c.h.b16 %v2042
        %v2696 = vunpack.c.l.b16 %v2043
        %v2697 = vunpack.c.h.b16 %v2043
        %v2698 = vunpack.c.l.b16 %v2044
        %v2699 = vunpack.c.h.b16 %v2044
        %v2700 = vunpack.c.l.b16 %v2045
        %v2701 = vunpack.c.h.b16 %v2045
        %v2702 = vunpack.c.l.b16 %v2046
        %v2703 = vunpack.c.h.b16 %v2046
        %v2704 = vunpack.c.l.b16 %v2047
        %v2705 = vunpack.c.h.b16 %v2047
        %v2706 = vunpack.c.l.b16 %v2048
        %v2707 = vunpack.c.h.b16 %v2048
        %v2708 = vunpack.c.l.b16 %v2049
        %v2709 = vunpack.c.h.b16 %v2049
        %v2710 = vunpack.c.l.b16 %v2050
        %v2711 = vunpack.c.h.b16 %v2050
        %v2712 = vunpack.c.l.b16 %v2051
        %v2713 = vunpack.c.h.b16 %v2051
        %v2714 = vunpack.c.l.b16 %v2052
        %v2715 = vunpack.c.h.b16 %v2052
        %v2716 = vunpack.c.l.b16 %v2053
        %v2717 = vunpack.c.h.b16 %v2053
        %v2718 = vunpack.c.l.b16 %v2054
        %v2719 = vunpack.c.h.b16 %v2054
        %v2720 = vunpack.c.l.b16 %v2055
        %v2721 = vunpack.c.h.b16 %v2055
        %v2722 = vunpack.c.l.b16 %v2056
        %v2723 = vunpack.c.h.b16 %v2056
        %v2724 = vunpack.c.l.b16 %v2057
        %v2725 = vunpack.c.h.b16 %v2057
        %v2726 = vunpack.c.l.b16 %v2058
        %v2727 = vunpack.c.h.b16 %v2058
        %v2728 = vunpack.c.l.b16 %v2059
        %v2729 = vunpack.c.h.b16 %v2059
        %v2730 = vunpack.c.l.b16 %v2060
        %v2731 = vunpack.c.h.b16 %v2060
        %v2732 = vunpack.c.l.b16 %v2061
        %v2733 = vunpack.c.h.b16 %v2061
        %v2734 = vunpack.c.l.b16 %v2062
        %v2735 = vunpack.c.h.b16 %v2062
        %v2736 = vunpack.c.l.b16 %v2063
        %v2737 = vunpack.c.h.b16 %v2063
        %v2738 = vunpack.c.l.b16 %v2064
        %v2739 = vunpack.c.h.b16 %v2064
        %v2740 = vunpack.c.l.b16 %v2065
        %v2741 = vunpack.c.h.b16 %v2065
        %v2742 = vunpack.c.l.b16 %v2066
        %v2743 = vunpack.c.h.b16 %v2066
        %v2744 = vunpack.c.l.b16 %v2067
        %v2745 = vunpack.c.h.b16 %v2067
        %v2746 = vunpack.c.l.b16 %v2068
        %v2747 = vunpack.c.h.b16 %v2068
        %v2748 = vunpack.c.l.b16 %v2069
        %v2749 = vunpack.c.h.b16 %v2069
        %v2750 = vunpack.c.l.b16 %v2070
        %v2751 = vunpack.c.h.b16 %v2070
        %v2752 = vunpack.c.l.b16 %v2071
        %v2753 = vunpack.c.h.b16 %v2071
        %v2754 = vunpack.c.l.b16 %v2072
        %v2755 = vunpack.c.h.b16 %v2072
        %v2756 = vunpack.c.l.b16 %v2073
        %v2757 = vunpack.c.h.b16 %v2073
        %v2758 = vunpack.c.l.b16 %v2074
        %v2759 = vunpack.c.h.b16 %v2074
        %v2760 = vunpack.c.l.b16 %v2075
        %v2761 = vunpack.c.h.b16 %v2075
        %v2762 = vunpack.c.l.b16 %v2076
        %v2763 = vunpack.c.h.b16 %v2076
        %v2764 = vunpack.c.l.b16 %v2077
        %v2765 = vunpack.c.h.b16 %v2077
        %v2766 = vunpack.c.l.b16 %v2078
        %v2767 = vunpack.c.h.b16 %v2078
        %v2768 = vunpack.c.l.b16 %v2079
        %v2769 = vunpack.c.h.b16 %v2079
        %v2770 = vunpack.c.l.b16 %v2080
        %v2771 = vunpack.c.h.b16 %v2080
        %v2772 = vunpack.c.l.b16 %v2081
        %v2773 = vunpack.c.h.b16 %v2081
        %v2774 = vunpack.c.l.b16 %v2082
        %v2775 = vunpack.c.h.b16 %v2082
        %v2776 = vunpack.c.l.b16 %v2083
        %v2777 = vunpack.c.h.b16 %v2083
        %v2778 = vunpack.c.l.b16 %v2084
        %v2779 = vunpack.c.h.b16 %v2084
        %v2780 = vunpack.c.l.b16 %v2085
        %v2781 = vunpack.c.h.b16 %v2085
        %v2782 = vunpack.c.l.b16 %v2086
        %v2783 = vunpack.c.h.b16 %v2086
        %v2784 = vunpack.c.l.b16 %v2087
        %v2785 = vunpack.c.h.b16 %v2087
        %v2786 = vunpack.c.l.b16 %v2088
        %v2787 = vunpack.c.h.b16 %v2088
        %v2788 = vunpack.c.l.b16 %v2089
        %v2789 = vunpack.c.h.b16 %v2089
        %v2790 = vunpack.c.l.b16 %v2090
        %v2791 = vunpack.c.h.b16 %v2090
        %v2792 = vunpack.c.l.b16 %v2091
        %v2793 = vunpack.c.h.b16 %v2091
        %v2794 = vunpack.c.l.b16 %v2092
        %v2795 = vunpack.c.h.b16 %v2092
        %v2796 = vunpack.c.l.b16 %v2093
        %v2797 = vunpack.c.h.b16 %v2093
        %v2798 = vunpack.c.l.b16 %v2094
        %v2799 = vunpack.c.h.b16 %v2094
        %v2800 = vunpack.c.l.b16 %v2095
        %v2801 = vunpack.c.h.b16 %v2095
        %v2802 = vunpack.c.l.b16 %v2096
        %v2803 = vunpack.c.h.b16 %v2096
        %v2804 = vunpack.c.l.b16 %v2097
        %v2805 = vunpack.c.h.b16 %v2097
        %v2806 = vunpack.c.l.b16 %v2098
        %v2807 = vunpack.c.h.b16 %v2098
        %v2808 = vunpack.c.l.b16 %v2099
        %v2809 = vunpack.c.h.b16 %v2099
        %v2810 = vunpack.c.l.b16 %v2100
        %v2811 = vunpack.c.h.b16 %v2100
        %v2812 = vunpack.c.l.b16 %v2101
        %v2813 = vunpack.c.h.b16 %v2101
        %v2814 = vunpack.c.l.b16 %v2102
        %v2815 = vunpack.c.h.b16 %v2102
        %v2816 = vunpack.c.l.b16 %v2103
        %v2817 = vunpack.c.h.b16 %v2103
        %v2818 = vunpack.c.l.b16 %v2104
        %v2819 = vunpack.c.h.b16 %v2104
        %v2820 = vunpack.c.l.b16 %v2105
        %v2821 = vunpack.c.h.b16 %v2105
        %v2822 = vunpack.c.l.b16 %v2106
        %v2823 = vunpack.c.h.b16 %v2106
        %v2824 = vunpack.c.l.b16 %v2107
        %v2825 = vunpack.c.h.b16 %v2107
        %v2826 = vunpack.c.l.b16 %v2108
        %v2827 = vunpack.c.h.b16 %v2108
        %v2828 = vunpack.c.l.b16 %v2109
        %v2829 = vunpack.c.h.b16 %v2109
        %v2830 = vunpack.c.l.b16 %v2110
        %v2831 = vunpack.c.h.b16 %v2110
        %v2832 = vunpack.c.l.b16 %v2111
        %v2833 = vunpack.c.h.b16 %v2111
        %v2834 = vunpack.c.l.b16 %v2112
        %v2835 = vunpack.c.h.b16 %v2112
        %v2836 = vunpack.c.l.b16 %v2113
        %v2837 = vunpack.c.h.b16 %v2113
        %v2838 = vunpack.c.l.b16 %v2114
        %v2839 = vunpack.c.h.b16 %v2114
        %v2840 = vunpack.c.l.b16 %v2115
        %v2841 = vunpack.c.h.b16 %v2115
        %v2842 = vunpack.c.l.b16 %v2116
        %v2843 = vunpack.c.h.b16 %v2116
        %v2844 = vunpack.c.l.b16 %v2117
        %v2845 = vunpack.c.h.b16 %v2117
        %v2846 = vunpack.c.l.b16 %v2118
        %v2847 = vunpack.c.h.b16 %v2118
        %v2848 = vunpack.c.l.b16 %v2119
        %v2849 = vunpack.c.h.b16 %v2119
        %v2850 = vunpack.c.l.b16 %v2120
        %v2851 = vunpack.c.h.b16 %v2120
        %v2852 = vunpack.c.l.b16 %v2121
        %v2853 = vunpack.c.h.b16 %v2121
        %v2854 = vunpack.c.l.b16 %v2122
        %v2855 = vunpack.c.h.b16 %v2122
        %v2856 = vunpack.c.l.b16 %v2123
        %v2857 = vunpack.c.h.b16 %v2123
        %v2858 = vunpack.c.l.b16 %v2124
        %v2859 = vunpack.c.h.b16 %v2124
        %v2860 = vunpack.c.l.b16 %v2125
        %v2861 = vunpack.c.h.b16 %v2125
        %v2862 = vunpack.c.l.b16 %v2126
        %v2863 = vunpack.c.h.b16 %v2126
        %v2864 = vunpack.c.l.b16 %v2127
        %v2865 = vunpack.c.h.b16 %v2127
        %v2866 = vunpack.c.l.b16 %v2128
        %v2867 = vunpack.c.h.b16 %v2128
        %v2868 = vunpack.c.l.b16 %v2129
        %v2869 = vunpack.c.h.b16 %v2129
        %v2870 = vunpack.c.l.b16 %v2130
        %v2871 = vunpack.c.h.b16 %v2130
        %v2872 = vunpack.c.l.b16 %v2131
        %v2873 = vunpack.c.h.b16 %v2131
        %v2874 = vunpack.c.l.b16 %v2132
        %v2875 = vunpack.c.h.b16 %v2132
        %v2876 = vunpack.c.l.b16 %v2133
        %v2877 = vunpack.c.h.b16 %v2133
        %v2878 = vunpack.c.l.b16 %v2134
        %v2879 = vunpack.c.h.b16 %v2134
        %v2880 = vunpack.c.l.b16 %v2135
        %v2881 = vunpack.c.h.b16 %v2135
        %v2882 = vunpack.c.l.b16 %v2136
        %v2883 = vunpack.c.h.b16 %v2136
        %v2884 = vunpack.c.l.b16 %v2137
        %v2885 = vunpack.c.h.b16 %v2137
        %v2886 = vunpack.c.l.b16 %v2138
        %v2887 = vunpack.c.h.b16 %v2138
        %v2888 = vunpack.c.l.b16 %v2139
        %v2889 = vunpack.c.h.b16 %v2139
        %v2890 = vunpack.c.l.b16 %v2140
        %v2891 = vunpack.c.h.b16 %v2140
        %v2892 = vunpack.c.l.b16 %v2141
        %v2893 = vunpack.c.h.b16 %v2141
        %v2894 = vunpack.c.l.b16 %v2142
        %v2895 = vunpack.c.h.b16 %v2142
        %v2896 = vunpack.c.l.b16 %v2143
        %v2897 = vunpack.c.h.b16 %v2143
        %v2898 = vunpack.c.l.b16 %v2144
        %v2899 = vunpack.c.h.b16 %v2144
        %v2900 = vunpack.c.l.b16 %v2145
        %v2901 = vunpack.c.h.b16 %v2145
        %v2902 = vunpack.c.l.b16 %v2146
        %v2903 = vunpack.c.h.b16 %v2146
        %v2904 = vunpack.c.l.b16 %v2147
        %v2905 = vunpack.c.h.b16 %v2147
        %v2906 = vunpack.c.l.b16 %v2148
        %v2907 = vunpack.c.h.b16 %v2148
        %v2908 = vunpack.c.l.b16 %v2149
        %v2909 = vunpack.c.h.b16 %v2149
        %v2910 = vunpack.c.l.b16 %v2150
        %v2911 = vunpack.c.h.b16 %v2150
        %v2912 = vunpack.c.l.b16 %v2151
        %v2913 = vunpack.c.h.b16 %v2151
        %v2914 = vunpack.c.l.b16 %v2152
        %v2915 = vunpack.c.h.b16 %v2152
        %v2916 = vunpack.c.l.b16 %v2153
        %v2917 = vunpack.c.h.b16 %v2153
        %v2918 = vunpack.c.l.b16 %v2154
        %v2919 = vunpack.c.h.b16 %v2154
        %v2920 = vunpack.c.l.b16 %v2155
        %v2921 = vunpack.c.h.b16 %v2155
        %v2922 = vunpack.c.l.b16 %v2156
        %v2923 = vunpack.c.h.b16 %v2156
        %v2924 = vunpack.c.l.b16 %v2157
        %v2925 = vunpack.c.h.b16 %v2157
        %v2926 = vunpack.c.l.b16 %v2158
        %v2927 = vunpack.c.h.b16 %v2158
        %v2928 = vunpack.c.l.b16 %v2159
        %v2929 = vunpack.c.h.b16 %v2159
        %v2930 = vunpack.c.l.b16 %v2160
        %v2931 = vunpack.c.h.b16 %v2160
        %v2932 = vunpack.c.l.b16 %v2161
        %v2933 = vunpack.c.h.b16 %v2161
        %v2934 = vunpack.c.l.b16 %v2162
        %v2935 = vunpack.c.h.b16 %v2162
        %v2936 = vunpack.c.l.b16 %v2163
        %v2937 = vunpack.c.h.b16 %v2163
        %v2938 = vunpack.c.l.b16 %v2164
        %v2939 = vunpack.c.h.b16 %v2164
        %v2940 = vunpack.c.l.b16 %v2165
        %v2941 = vunpack.c.h.b16 %v2165
        %v2942 = vunpack.c.l.b16 %v2166
        %v2943 = vunpack.c.h.b16 %v2166
        %v2944 = vunpack.c.l.b16 %v2167
        %v2945 = vunpack.c.h.b16 %v2167
        %v2946 = vunpack.c.l.b16 %v2168
        %v2947 = vunpack.c.h.b16 %v2168
        %v2948 = vunpack.c.l.b16 %v2169
        %v2949 = vunpack.c.h.b16 %v2169
        %v2950 = vunpack.c.l.b16 %v2170
        %v2951 = vunpack.c.h.b16 %v2170
        %v2952 = vunpack.c.l.b16 %v2171
        %v2953 = vunpack.c.h.b16 %v2171
        %v2954 = vunpack.c.l.b16 %v2172
        %v2955 = vunpack.c.h.b16 %v2172
        %v2956 = vunpack.c.l.b16 %v2173
        %v2957 = vunpack.c.h.b16 %v2173
        %v2958 = vunpack.c.l.b16 %v2174
        %v2959 = vunpack.c.h.b16 %v2174
        %v2960 = vunpack.c.l.b16 %v2175
        %v2961 = vunpack.c.h.b16 %v2175
        %v2962 = vunpack.c.l.b16 %v2176
        %v2963 = vunpack.c.h.b16 %v2176
        %v2964 = vunpack.c.l.b16 %v2177
        %v2965 = vunpack.c.h.b16 %v2177
        %v2966 = vunpack.c.l.b16 %v2178
        %v2967 = vunpack.c.h.b16 %v2178
        %v2968 = vunpack.c.l.b16 %v2179
        %v2969 = vunpack.c.h.b16 %v2179
        %v2970 = vpack.c.b16 %v2462, %v2458
        %v2971 = vpack.c.b16 %v2463, %v2459
        %v2972 = vpack.c.b16 %v2464, %v2460
        %v2973 = vpack.c.b16 %v2465, %v2461
        %v2974 = vpack.c.b16 %v2470, %v2466
        %v2975 = vpack.c.b16 %v2471, %v2467
        %v2976 = vpack.c.b16 %v2472, %v2468
        %v2977 = vpack.c.b16 %v2473, %v2469
        %v2978 = vpack.c.b16 %v2478, %v2474
        %v2979 = vpack.c.b16 %v2479, %v2475
        %v2980 = vpack.c.b16 %v2480, %v2476
        %v2981 = vpack.c.b16 %v2481, %v2477
        %v2982 = vpack.c.b16 %v2486, %v2482
        %v2983 = vpack.c.b16 %v2487, %v2483
        %v2984 = vpack.c.b16 %v2488, %v2484
        %v2985 = vpack.c.b16 %v2489, %v2485
        %v2986 = vpack.c.b16 %v2494, %v2490
        %v2987 = vpack.c.b16 %v2495, %v2491
        %v2988 = vpack.c.b16 %v2496, %v2492
        %v2989 = vpack.c.b16 %v2497, %v2493
        %v2990 = vpack.c.b16 %v2502, %v2498
        %v2991 = vpack.c.b16 %v2503, %v2499
        %v2992 = vpack.c.b16 %v2504, %v2500
        %v2993 = vpack.c.b16 %v2505, %v2501
        %v2994 = vpack.c.b16 %v2510, %v2506
        %v2995 = vpack.c.b16 %v2511, %v2507
        %v2996 = vpack.c.b16 %v2512, %v2508
        %v2997 = vpack.c.b16 %v2513, %v2509
        %v2998 = vpack.c.b16 %v2518, %v2514
        %v2999 = vpack.c.b16 %v2519, %v2515
        %v3000 = vpack.c.b16 %v2520, %v2516
        %v3001 = vpack.c.b16 %v2521, %v2517
        %v3002 = vpack.c.b16 %v2526, %v2522
        %v3003 = vpack.c.b16 %v2527, %v2523
        %v3004 = vpack.c.b16 %v2528, %v2524
        %v3005 = vpack.c.b16 %v2529, %v2525
        %v3006 = vpack.c.b16 %v2534, %v2530
        %v3007 = vpack.c.b16 %v2535, %v2531
        %v3008 = vpack.c.b16 %v2536, %v2532
        %v3009 = vpack.c.b16 %v2537, %v2533
        %v3010 = vpack.c.b16 %v2542, %v2538
        %v3011 = vpack.c.b16 %v2543, %v2539
        %v3012 = vpack.c.b16 %v2544, %v2540
        %v3013 = vpack.c.b16 %v2545, %v2541
        %v3014 = vpack.c.b16 %v2550, %v2546
        %v3015 = vpack.c.b16 %v2551, %v2547
        %v3016 = vpack.c.b16 %v2552, %v2548
        %v3017 = vpack.c.b16 %v2553, %v2549
        %v3018 = vpack.c.b16 %v2558, %v2554
        %v3019 = vpack.c.b16 %v2559, %v2555
        %v3020 = vpack.c.b16 %v2560, %v2556
        %v3021 = vpack.c.b16 %v2561, %v2557
        %v3022 = vpack.c.b16 %v2566, %v2562
        %v3023 = vpack.c.b16 %v2567, %v2563
        %v3024 = vpack.c.b16 %v2568, %v2564
        %v3025 = vpack.c.b16 %v2569, %v2565
        %v3026 = vpack.c.b16 %v2574, %v2570
        %v3027 = vpack.c.b16 %v2575, %v2571
        %v3028 = vpack.c.b16 %v2576, %v2572
        %v3029 = vpack.c.b16 %v2577, %v2573
        %v3030 = vpack.c.b16 %v2582, %v2578
        %v3031 = vpack.c.b16 %v2583, %v2579
        %v3032 = vpack.c.b16 %v2584, %v2580
        %v3033 = vpack.c.b16 %v2585, %v2581
        %v3034 = vpack.c.b16 %v2590, %v2586
        %v3035 = vpack.c.b16 %v2591, %v2587
        %v3036 = vpack.c.b16 %v2592, %v2588
        %v3037 = vpack.c.b16 %v2593, %v2589
        %v3038 = vpack.c.b16 %v2598, %v2594
        %v3039 = vpack.c.b16 %v2599, %v2595
        %v3040 = vpack.c.b16 %v2600, %v2596
        %v3041 = vpack.c.b16 %v2601, %v2597
        %v3042 = vpack.c.b16 %v2606, %v2602
        %v3043 = vpack.c.b16 %v2607, %v2603
        %v3044 = vpack.c.b16 %v2608, %v2604
        %v3045 = vpack.c.b16 %v2609, %v2605
        %v3046 = vpack.c.b16 %v2614, %v2610
        %v3047 = vpack.c.b16 %v2615, %v2611
        %v3048 = vpack.c.b16 %v2616, %v2612
        %v3049 = vpack.c.b16 %v2617, %v2613
        %v3050 = vpack.c.b16 %v2622, %v2618
        %v3051 = vpack.c.b16 %v2623, %v2619
        %v3052 = vpack.c.b16 %v2624, %v2620
        %v3053 = vpack.c.b16 %v2625, %v2621
        %v3054 = vpack.c.b16 %v2630, %v2626
        %v3055 = vpack.c.b16 %v2631, %v2627
        %v3056 = vpack.c.b16 %v2632, %v2628
        %v3057 = vpack.c.b16 %v2633, %v2629
        %v3058 = vpack.c.b16 %v2638, %v2634
        %v3059 = vpack.c.b16 %v2639, %v2635
        %v3060 = vpack.c.b16 %v2640, %v2636
        %v3061 = vpack.c.b16 %v2641, %v2637
        %v3062 = vpack.c.b16 %v2646, %v2642
        %v3063 = vpack.c.b16 %v2647, %v2643
        %v3064 = vpack.c.b16 %v2648, %v2644
        %v3065 = vpack.c.b16 %v2649, %v2645
        %v3066 = vpack.c.b16 %v2654, %v2650
        %v3067 = vpack.c.b16 %v2655, %v2651
        %v3068 = vpack.c.b16 %v2656, %v2652
        %v3069 = vpack.c.b16 %v2657, %v2653
        %v3070 = vpack.c.b16 %v2662, %v2658
        %v3071 = vpack.c.b16 %v2663, %v2659
        %v3072 = vpack.c.b16 %v2664, %v2660
        %v3073 = vpack.c.b16 %v2665, %v2661
        %v3074 = vpack.c.b16 %v2670, %v2666
        %v3075 = vpack.c.b16 %v2671, %v2667
        %v3076 = vpack.c.b16 %v2672, %v2668
        %v3077 = vpack.c.b16 %v2673, %v2669
        %v3078 = vpack.c.b16 %v2678, %v2674
        %v3079 = vpack.c.b16 %v2679, %v2675
        %v3080 = vpack.c.b16 %v2680, %v2676
        %v3081 = vpack.c.b16 %v2681, %v2677
        %v3082 = vpack.c.b16 %v2686, %v2682
        %v3083 = vpack.c.b16 %v2687, %v2683
        %v3084 = vpack.c.b16 %v2688, %v2684
        %v3085 = vpack.c.b16 %v2689, %v2685
        %v3086 = vpack.c.b16 %v2694, %v2690
        %v3087 = vpack.c.b16 %v2695, %v2691
        %v3088 = vpack.c.b16 %v2696, %v2692
        %v3089 = vpack.c.b16 %v2697, %v2693
        %v3090 = vpack.c.b16 %v2702, %v2698
        %v3091 = vpack.c.b16 %v2703, %v2699
        %v3092 = vpack.c.b16 %v2704, %v2700
        %v3093 = vpack.c.b16 %v2705, %v2701
        %v3094 = vpack.c.b16 %v2710, %v2706
        %v3095 = vpack.c.b16 %v2711, %v2707
        %v3096 = vpack.c.b16 %v2712, %v2708
        %v3097 = vpack.c.b16 %v2713, %v2709
        %v3098 = vpack.c.b16 %v2718, %v2714
        %v3099 = vpack.c.b16 %v2719, %v2715
        %v3100 = vpack.c.b16 %v2720, %v2716
        %v3101 = vpack.c.b16 %v2721, %v2717
        %v3102 = vpack.c.b16 %v2726, %v2722
        %v3103 = vpack.c.b16 %v2727, %v2723
        %v3104 = vpack.c.b16 %v2728, %v2724
        %v3105 = vpack.c.b16 %v2729, %v2725
        %v3106 = vpack.c.b16 %v2734, %v2730
        %v3107 = vpack.c.b16 %v2735, %v2731
        %v3108 = vpack.c.b16 %v2736, %v2732
        %v3109 = vpack.c.b16 %v2737, %v2733
        %v3110 = vpack.c.b16 %v2742, %v2738
        %v3111 = vpack.c.b16 %v2743, %v2739
        %v3112 = vpack.c.b16 %v2744, %v2740
        %v3113 = vpack.c.b16 %v2745, %v2741
        %v3114 = vpack.c.b16 %v2750, %v2746
        %v3115 = vpack.c.b16 %v2751, %v2747
        %v3116 = vpack.c.b16 %v2752, %v2748
        %v3117 = vpack.c.b16 %v2753, %v2749
        %v3118 = vpack.c.b16 %v2758, %v2754
        %v3119 = vpack.c.b16 %v2759, %v2755
        %v3120 = vpack.c.b16 %v2760, %v2756
        %v3121 = vpack.c.b16 %v2761, %v2757
        %v3122 = vpack.c.b16 %v2766, %v2762
        %v3123 = vpack.c.b16 %v2767, %v2763
        %v3124 = vpack.c.b16 %v2768, %v2764
        %v3125 = vpack.c.b16 %v2769, %v2765
        %v3126 = vpack.c.b16 %v2774, %v2770
        %v3127 = vpack.c.b16 %v2775, %v2771
        %v3128 = vpack.c.b16 %v2776, %v2772
        %v3129 = vpack.c.b16 %v2777, %v2773
        %v3130 = vpack.c.b16 %v2782, %v2778
        %v3131 = vpack.c.b16 %v2783, %v2779
        %v3132 = vpack.c.b16 %v2784, %v2780
        %v3133 = vpack.c.b16 %v2785, %v2781
        %v3134 = vpack.c.b16 %v2790, %v2786
        %v3135 = vpack.c.b16 %v2791, %v2787
        %v3136 = vpack.c.b16 %v2792, %v2788
        %v3137 = vpack.c.b16 %v2793, %v2789
        %v3138 = vpack.c.b16 %v2798, %v2794
        %v3139 = vpack.c.b16 %v2799, %v2795
        %v3140 = vpack.c.b16 %v2800, %v2796
        %v3141 = vpack.c.b16 %v2801, %v2797
        %v3142 = vpack.c.b16 %v2806, %v2802
        %v3143 = vpack.c.b16 %v2807, %v2803
        %v3144 = vpack.c.b16 %v2808, %v2804
        %v3145 = vpack.c.b16 %v2809, %v2805
        %v3146 = vpack.c.b16 %v2814, %v2810
        %v3147 = vpack.c.b16 %v2815, %v2811
        %v3148 = vpack.c.b16 %v2816, %v2812
        %v3149 = vpack.c.b16 %v2817, %v2813
        %v3150 = vpack.c.b16 %v2822, %v2818
        %v3151 = vpack.c.b16 %v2823, %v2819
        %v3152 = vpack.c.b16 %v2824, %v2820
        %v3153 = vpack.c.b16 %v2825, %v2821
        %v3154 = vpack.c.b16 %v2830, %v2826
        %v3155 = vpack.c.b16 %v2831, %v2827
        %v3156 = vpack.c.b16 %v2832, %v2828
        %v3157 = vpack.c.b16 %v2833, %v2829
        %v3158 = vpack.c.b16 %v2838, %v2834
        %v3159 = vpack.c.b16 %v2839, %v2835
        %v3160 = vpack.c.b16 %v2840, %v2836
        %v3161 = vpack.c.b16 %v2841, %v2837
        %v3162 = vpack.c.b16 %v2846, %v2842
        %v3163 = vpack.c.b16 %v2847, %v2843
        %v3164 = vpack.c.b16 %v2848, %v2844
        %v3165 = vpack.c.b16 %v2849, %v2845
        %v3166 = vpack.c.b16 %v2854, %v2850
        %v3167 = vpack.c.b16 %v2855, %v2851
        %v3168 = vpack.c.b16 %v2856, %v2852
        %v3169 = vpack.c.b16 %v2857, %v2853
        %v3170 = vpack.c.b16 %v2862, %v2858
        %v3171 = vpack.c.b16 %v2863, %v2859
        %v3172 = vpack.c.b16 %v2864, %v2860
        %v3173 = vpack.c.b16 %v2865, %v2861
        %v3174 = vpack.c.b16 %v2870, %v2866
        %v3175 = vpack.c.b16 %v2871, %v2867
        %v3176 = vpack.c.b16 %v2872, %v2868
        %v3177 = vpack.c.b16 %v2873, %v2869
        %v3178 = vpack.c.b16 %v2878, %v2874
        %v3179 = vpack.c.b16 %v2879, %v2875
        %v3180 = vpack.c.b16 %v2880, %v2876
        %v3181 = vpack.c.b16 %v2881, %v2877
        %v3182 = vpack.c.b16 %v2886, %v2882
        %v3183 = vpack.c.b16 %v2887, %v2883
        %v3184 = vpack.c.b16 %v2888, %v2884
        %v3185 = vpack.c.b16 %v2889, %v2885
        %v3186 = vpack.c.b16 %v2894, %v2890
        %v3187 = vpack.c.b16 %v2895, %v2891
        %v3188 = vpack.c.b16 %v2896, %v2892
        %v3189 = vpack.c.b16 %v2897, %v2893
        %v3190 = vpack.c.b16 %v2902, %v2898
        %v3191 = vpack.c.b16 %v2903, %v2899
        %v3192 = vpack.c.b16 %v2904, %v2900
        %v3193 = vpack.c.b16 %v2905, %v2901
        %v3194 = vpack.c.b16 %v2910, %v2906
        %v3195 = vpack.c.b16 %v2911, %v2907
        %v3196 = vpack.c.b16 %v2912, %v2908
        %v3197 = vpack.c.b16 %v2913, %v2909
        %v3198 = vpack.c.b16 %v2918, %v2914
        %v3199 = vpack.c.b16 %v2919, %v2915
        %v3200 = vpack.c.b16 %v2920, %v2916
        %v3201 = vpack.c.b16 %v2921, %v2917
        %v3202 = vpack.c.b16 %v2926, %v2922
        %v3203 = vpack.c.b16 %v2927, %v2923
        %v3204 = vpack.c.b16 %v2928, %v2924
        %v3205 = vpack.c.b16 %v2929, %v2925
        %v3206 = vpack.c.b16 %v2934, %v2930
        %v3207 = vpack.c.b16 %v2935, %v2931
        %v3208 = vpack.c.b16 %v2936, %v2932
        %v3209 = vpack.c.b16 %v2937, %v2933
        %v3210 = vpack.c.b16 %v2942, %v2938
        %v3211 = vpack.c.b16 %v2943, %v2939
        %v3212 = vpack.c.b16 %v2944, %v2940
        %v3213 = vpack.c.b16 %v2945, %v2941
        %v3214 = vpack.c.b16 %v2950, %v2946
        %v3215 = vpack.c.b16 %v2951, %v2947
        %v3216 = vpack.c.b16 %v2952, %v2948
        %v3217 = vpack.c.b16 %v2953, %v2949
        %v3218 = vpack.c.b16 %v2958, %v2954
        %v3219 = vpack.c.b16 %v2959, %v2955
        %v3220 = vpack.c.b16 %v2960, %v2956
        %v3221 = vpack.c.b16 %v2961, %v2957
        %v3222 = vpack.c.b16 %v2966, %v2962
        %v3223 = vpack.c.b16 %v2967, %v2963
        %v3224 = vpack.c.b16 %v2968, %v2964
        %v3225 = vpack.c.b16 %v2969, %v2965
        %3482 = vmatprep.subr.bf16.mxu0 %v2971
        %3483 = vmatpush1.bf16.msra.mxu0 %v2970
        %3484 = vmatprep.subr.bf16.mxu0 %v2975
        %3485 = vmatpush1.bf16.msra.mxu0 %v2974
        %3486 = vmatprep.subr.bf16.mxu0 %v2979
        %3487 = vmatpush1.bf16.msra.mxu0 %v2978
        %3488 = vmatprep.subr.bf16.mxu0 %v2983
        %3489 = vmatpush1.bf16.msra.mxu0 %v2982
        %3490 = vmatprep.subr.bf16.mxu0 %v2987
        %3491 = vmatpush1.bf16.msra.mxu0 %v2986
        %3492 = vmatprep.subr.bf16.mxu0 %v2991
        %3493 = vmatpush1.bf16.msra.mxu0 %v2990
        %3494 = vmatprep.subr.bf16.mxu0 %v2995
        %3495 = vmatpush1.bf16.msra.mxu0 %v2994
        %3496 = vmatprep.subr.bf16.mxu0 %v2999
        %3497 = vmatpush1.bf16.msra.mxu0 %v2998
        %3498 = vmatprep.subr.bf16.mxu0 %v3003
        %3499 = vmatpush1.bf16.msra.mxu0 %v3002
        %3500 = vmatprep.subr.bf16.mxu0 %v3007
        %3501 = vmatpush1.bf16.msra.mxu0 %v3006
        %3502 = vmatprep.subr.bf16.mxu0 %v3011
        %3503 = vmatpush1.bf16.msra.mxu0 %v3010
        %3504 = vmatprep.subr.bf16.mxu0 %v3015
        %3505 = vmatpush1.bf16.msra.mxu0 %v3014
        %3506 = vmatprep.subr.bf16.mxu0 %v3019
        %3507 = vmatpush1.bf16.msra.mxu0 %v3018
        %3508 = vmatprep.subr.bf16.mxu0 %v3023
        %3509 = vmatpush1.bf16.msra.mxu0 %v3022
        %3510 = vmatprep.subr.bf16.mxu0 %v3027
        %3511 = vmatpush1.bf16.msra.mxu0 %v3026
        %3512 = vmatprep.subr.bf16.mxu0 %v3031
        %3513 = vmatpush1.bf16.msra.mxu0 %v3030
        %3514 = vmatprep.mubr.bf16.mxu0 %v1861
        %3515 = vmatmul.mubr.bf16.gmra.mrb[0].mxu0 %v1860
        %v3516 = vpop.f32.mrb[0].mxu0
        %v3517 = vadd.f32 %v2185, %v3516
        %v3518 = vpop.f32.mrb[0].mxu0
        %v3519 = vadd.f32 %v2189, %v3518
        %v3520 = vpop.f32.mrb[0].mxu0
        %v3521 = vadd.f32 %v2185, %v3520
        %v3522 = vpop.f32.mrb[0].mxu0
        %v3523 = vadd.f32 %v2189, %v3522
        %3524 = vmatprep.mubr.bf16.mxu0 %v1869
        %3525 = vmatmul.mubr.bf16.gmra.mrb[0].mxu0 %v1868
        %v3526 = vpop.f32.mrb[0].mxu0
        %v3527 = vadd.f32 %v2185, %v3526
        %v3528 = vpop.f32.mrb[0].mxu0
        %v3529 = vadd.f32 %v2189, %v3528
        %v3530 = vpop.f32.mrb[0].mxu0
        %v3531 = vadd.f32 %v2185, %v3530
        %v3532 = vpop.f32.mrb[0].mxu0
        %v3533 = vadd.f32 %v2189, %v3532
        %3534 = vmatprep.mubr.bf16.mxu0 %v1877
        %3535 = vmatmul.mubr.bf16.gmra.mrb[0].mxu0 %v1876
        %v3536 = vpop.f32.mrb[0].mxu0
        %v3537 = vadd.f32 %v2185, %v3536
        %v3538 = vpop.f32.mrb[0].mxu0
        %v3539 = vadd.f32 %v2189, %v3538
        %v3540 = vpop.f32.mrb[0].mxu0
        %v3541 = vadd.f32 %v2185, %v3540
        %v3542 = vpop.f32.mrb[0].mxu0
        %v3543 = vadd.f32 %v2189, %v3542
        %3544 = vmatprep.mubr.bf16.mxu0 %v1885
        %3545 = vmatmul.mubr.bf16.gmra.mrb[0].mxu0 %v1884
        %v3546 = vpop.f32.mrb[0].mxu0
        %v3547 = vadd.f32 %v2185, %v3546
        %v3548 = vpop.f32.mrb[0].mxu0
        %v3549 = vadd.f32 %v2189, %v3548
        %v3550 = vpop.f32.mrb[0].mxu0
        %v3551 = vadd.f32 %v2185, %v3550
        %v3552 = vpop.f32.mrb[0].mxu0
        %v3553 = vadd.f32 %v2189, %v3552
        %3554 = vmatprep.mubr.bf16.mxu0 %v1893
        %3555 = vmatmul.mubr.bf16.gmra.mrb[0].mxu0 %v1892
        %v3556 = vpop.f32.mrb[0].mxu0
        %v3557 = vadd.f32 %v2185, %v3556
        %v3558 = vpop.f32.mrb[0].mxu0
        %v3559 = vadd.f32 %v2189, %v3558
        %v3560 = vpop.f32.mrb[0].mxu0
        %v3561 = vadd.f32 %v2185, %v3560
        %v3562 = vpop.f32.mrb[0].mxu0
        %v3563 = vadd.f32 %v2189, %v3562
        %3564 = vmatprep.mubr.bf16.mxu0 %v1901
        %3565 = vmatmul.mubr.bf16.gmra.mrb[0].mxu0 %v1900
        %v3566 = vpop.f32.mrb[0].mxu0
        %v3567 = vadd.f32 %v2185, %v3566
        %v3568 = vpop.f32.mrb[0].mxu0
        %v3569 = vadd.f32 %v2189, %v3568
        %v3570 = vpop.f32.mrb[0].mxu0
        %v3571 = vadd.f32 %v2185, %v3570
        %v3572 = vpop.f32.mrb[0].mxu0
        %v3573 = vadd.f32 %v2189, %v3572
        %3574 = vmatprep.mubr.bf16.mxu0 %v1909
        %3575 = vmatmul.mubr.bf16.gmra.mrb[0].mxu0 %v1908
        %v3576 = vpop.f32.mrb[0].mxu0
        %v3577 = vadd.f32 %v2185, %v3576
        %v3578 = vpop.f32.mrb[0].mxu0
        %v3579 = vadd.f32 %v2189, %v3578
        %v3580 = vpop.f32.mrb[0].mxu0
        %v3581 = vadd.f32 %v2185, %v3580
        %v3582 = vpop.f32.mrb[0].mxu0
        %v3583 = vadd.f32 %v2189, %v3582
        %3584 = vmatprep.mubr.bf16.mxu0 %v1917
        %3585 = vmatmul.mubr.bf16.gmra.mrb[0].mxu0 %v1916
        %v3586 = vpop.f32.mrb[0].mxu0
        %v3587 = vadd.f32 %v2185, %v3586
        %v3588 = vpop.f32.mrb[0].mxu0
        %v3589 = vadd.f32 %v2189, %v3588
        %v3590 = vpop.f32.mrb[0].mxu0
        %v3591 = vadd.f32 %v2185, %v3590
        %v3592 = vpop.f32.mrb[0].mxu0
        %v3593 = vadd.f32 %v2189, %v3592
        %3594 = vdwg.mxu0
        %3595 = vmatprep.subr.bf16.mxu0 %v3035
        %3596 = vmatpush1.bf16.msra.mxu0 %v3034
        %3597 = vmatprep.subr.bf16.mxu0 %v3039
        %3598 = vmatpush1.bf16.msra.mxu0 %v3038
        %3599 = vmatprep.subr.bf16.mxu0 %v3043
        %3600 = vmatpush1.bf16.msra.mxu0 %v3042
        %3601 = vmatprep.subr.bf16.mxu0 %v3047
        %3602 = vmatpush1.bf16.msra.mxu0 %v3046
        %3603 = vmatprep.subr.bf16.mxu0 %v3051
        %3604 = vmatpush1.bf16.msra.mxu0 %v3050
        %3605 = vmatprep.subr.bf16.mxu0 %v3055
        %3606 = vmatpush1.bf16.msra.mxu0 %v3054
        %3607 = vmatprep.subr.bf16.mxu0 %v3059
        %3608 = vmatpush1.bf16.msra.mxu0 %v3058
        %3609 = vmatprep.subr.bf16.mxu0 %v3063
        %3610 = vmatpush1.bf16.msra.mxu0 %v3062
        %3611 = vmatprep.subr.bf16.mxu0 %v3067
        %3612 = vmatpush1.bf16.msra.mxu0 %v3066
        %3613 = vmatprep.subr.bf16.mxu0 %v3071
        %3614 = vmatpush1.bf16.msra.mxu0 %v3070
        %3615 = vmatprep.subr.bf16.mxu0 %v3075
        %3616 = vmatpush1.bf16.msra.mxu0 %v3074
        %3617 = vmatprep.subr.bf16.mxu0 %v3079
        %3618 = vmatpush1.bf16.msra.mxu0 %v3078
        %3619 = vmatprep.subr.bf16.mxu0 %v3083
        %3620 = vmatpush1.bf16.msra.mxu0 %v3082
        %3621 = vmatprep.subr.bf16.mxu0 %v3087
        %3622 = vmatpush1.bf16.msra.mxu0 %v3086
        %3623 = vmatprep.subr.bf16.mxu0 %v3091
        %3624 = vmatpush1.bf16.msra.mxu0 %v3090
        %3625 = vmatprep.subr.bf16.mxu0 %v3095
        %3626 = vmatpush1.bf16.msra.mxu0 %v3094
        %3627 = vmatprep.mubr.bf16.mxu0 %v1863
        %3628 = vmatmul.mubr.bf16.gmra.mrb[0].mxu0 %v1862
        %v3629 = vpop.f32.mrb[0].mxu0
        %v3630 = vadd.f32 %v3517, %v3629
        %v3631 = vpop.f32.mrb[0].mxu0
        %v3632 = vadd.f32 %v3519, %v3631
        %v3633 = vpop.f32.mrb[0].mxu0
        %v3634 = vadd.f32 %v3521, %v3633
        %v3635 = vpop.f32.mrb[0].mxu0
        %v3636 = vadd.f32 %v3523, %v3635
        %3637 = vmatprep.mubr.bf16.mxu0 %v1871
        %3638 = vmatmul.mubr.bf16.gmra.mrb[0].mxu0 %v1870
        %v3639 = vpop.f32.mrb[0].mxu0
        %v3640 = vadd.f32 %v3527, %v3639
        %v3641 = vpop.f32.mrb[0].mxu0
        %v3642 = vadd.f32 %v3529, %v3641
        %v3643 = vpop.f32.mrb[0].mxu0
        %v3644 = vadd.f32 %v3531, %v3643
        %v3645 = vpop.f32.mrb[0].mxu0
        %v3646 = vadd.f32 %v3533, %v3645
        %3647 = vmatprep.mubr.bf16.mxu0 %v1879
        %3648 = vmatmul.mubr.bf16.gmra.mrb[0].mxu0 %v1878
        %v3649 = vpop.f32.mrb[0].mxu0
        %v3650 = vadd.f32 %v3537, %v3649
        %v3651 = vpop.f32.mrb[0].mxu0
        %v3652 = vadd.f32 %v3539, %v3651
        %v3653 = vpop.f32.mrb[0].mxu0
        %v3654 = vadd.f32 %v3541, %v3653
        %v3655 = vpop.f32.mrb[0].mxu0
        %v3656 = vadd.f32 %v3543, %v3655
        %3657 = vmatprep.mubr.bf16.mxu0 %v1887
        %3658 = vmatmul.mubr.bf16.gmra.mrb[0].mxu0 %v1886
        %v3659 = vpop.f32.mrb[0].mxu0
        %v3660 = vadd.f32 %v3547, %v3659
        %v3661 = vpop.f32.mrb[0].mxu0
        %v3662 = vadd.f32 %v3549, %v3661
        %v3663 = vpop.f32.mrb[0].mxu0
        %v3664 = vadd.f32 %v3551, %v3663
        %v3665 = vpop.f32.mrb[0].mxu0
        %v3666 = vadd.f32 %v3553, %v3665
        %3667 = vmatprep.mubr.bf16.mxu0 %v1895
        %3668 = vmatmul.mubr.bf16.gmra.mrb[0].mxu0 %v1894
        %v3669 = vpop.f32.mrb[0].mxu0
        %v3670 = vadd.f32 %v3557, %v3669
        %v3671 = vpop.f32.mrb[0].mxu0
        %v3672 = vadd.f32 %v3559, %v3671
        %v3673 = vpop.f32.mrb[0].mxu0
        %v3674 = vadd.f32 %v3561, %v3673
        %v3675 = vpop.f32.mrb[0].mxu0
        %v3676 = vadd.f32 %v3563, %v3675
        %3677 = vmatprep.mubr.bf16.mxu0 %v1903
        %3678 = vmatmul.mubr.bf16.gmra.mrb[0].mxu0 %v1902
        %v3679 = vpop.f32.mrb[0].mxu0
        %v3680 = vadd.f32 %v3567, %v3679
        %v3681 = vpop.f32.mrb[0].mxu0
        %v3682 = vadd.f32 %v3569, %v3681
        %v3683 = vpop.f32.mrb[0].mxu0
        %v3684 = vadd.f32 %v3571, %v3683
        %v3685 = vpop.f32.mrb[0].mxu0
        %v3686 = vadd.f32 %v3573, %v3685
        %3687 = vmatprep.mubr.bf16.mxu0 %v1911
        %3688 = vmatmul.mubr.bf16.gmra.mrb[0].mxu0 %v1910
        %v3689 = vpop.f32.mrb[0].mxu0
        %v3690 = vadd.f32 %v3577, %v3689
        %v3691 = vpop.f32.mrb[0].mxu0
        %v3692 = vadd.f32 %v3579, %v3691
        %v3693 = vpop.f32.mrb[0].mxu0
        %v3694 = vadd.f32 %v3581, %v3693
        %v3695 = vpop.f32.mrb[0].mxu0
        %v3696 = vadd.f32 %v3583, %v3695
        %3697 = vmatprep.mubr.bf16.mxu0 %v1919
        %3698 = vmatmul.mubr.bf16.gmra.mrb[0].mxu0 %v1918
        %v3699 = vpop.f32.mrb[0].mxu0
        %v3700 = vadd.f32 %v3587, %v3699
        %v3701 = vpop.f32.mrb[0].mxu0
        %v3702 = vadd.f32 %v3589, %v3701
        %v3703 = vpop.f32.mrb[0].mxu0
        %v3704 = vadd.f32 %v3591, %v3703
        %v3705 = vpop.f32.mrb[0].mxu0
        %v3706 = vadd.f32 %v3593, %v3705
        %3707 = vdwg.mxu0
        %3708 = vmatprep.subr.bf16.mxu0 %v3099
        %3709 = vmatpush1.bf16.msra.mxu0 %v3098
        %3710 = vmatprep.subr.bf16.mxu0 %v3103
        %3711 = vmatpush1.bf16.msra.mxu0 %v3102
        %3712 = vmatprep.subr.bf16.mxu0 %v3107
        %3713 = vmatpush1.bf16.msra.mxu0 %v3106
        %3714 = vmatprep.subr.bf16.mxu0 %v3111
        %3715 = vmatpush1.bf16.msra.mxu0 %v3110
        %3716 = vmatprep.subr.bf16.mxu0 %v3115
        %3717 = vmatpush1.bf16.msra.mxu0 %v3114
        %3718 = vmatprep.subr.bf16.mxu0 %v3119
        %3719 = vmatpush1.bf16.msra.mxu0 %v3118
        %3720 = vmatprep.subr.bf16.mxu0 %v3123
        %3721 = vmatpush1.bf16.msra.mxu0 %v3122
        %3722 = vmatprep.subr.bf16.mxu0 %v3127
        %3723 = vmatpush1.bf16.msra.mxu0 %v3126
        %3724 = vmatprep.subr.bf16.mxu0 %v3131
        %3725 = vmatpush1.bf16.msra.mxu0 %v3130
        %3726 = vmatprep.subr.bf16.mxu0 %v3135
        %3727 = vmatpush1.bf16.msra.mxu0 %v3134
        %3728 = vmatprep.subr.bf16.mxu0 %v3139
        %3729 = vmatpush1.bf16.msra.mxu0 %v3138
        %3730 = vmatprep.subr.bf16.mxu0 %v3143
        %3731 = vmatpush1.bf16.msra.mxu0 %v3142
        %3732 = vmatprep.subr.bf16.mxu0 %v3147
        %3733 = vmatpush1.bf16.msra.mxu0 %v3146
        %3734 = vmatprep.subr.bf16.mxu0 %v3151
        %3735 = vmatpush1.bf16.msra.mxu0 %v3150
        %3736 = vmatprep.subr.bf16.mxu0 %v3155
        %3737 = vmatpush1.bf16.msra.mxu0 %v3154
        %3738 = vmatprep.subr.bf16.mxu0 %v3159
        %3739 = vmatpush1.bf16.msra.mxu0 %v3158
        %3740 = vmatprep.mubr.bf16.mxu0 %v1865
        %3741 = vmatmul.mubr.bf16.gmra.mrb[0].mxu0 %v1864
        %v3742 = vpop.f32.mrb[0].mxu0
        %v3743 = vadd.f32 %v3630, %v3742
        %v3744 = vpop.f32.mrb[0].mxu0
        %v3745 = vadd.f32 %v3632, %v3744
        %v3746 = vpop.f32.mrb[0].mxu0
        %v3747 = vadd.f32 %v3634, %v3746
        %v3748 = vpop.f32.mrb[0].mxu0
        %v3749 = vadd.f32 %v3636, %v3748
        %3750 = vmatprep.mubr.bf16.mxu0 %v1873
        %3751 = vmatmul.mubr.bf16.gmra.mrb[0].mxu0 %v1872
        %v3752 = vpop.f32.mrb[0].mxu0
        %v3753 = vadd.f32 %v3640, %v3752
        %v3754 = vpop.f32.mrb[0].mxu0
        %v3755 = vadd.f32 %v3642, %v3754
        %v3756 = vpop.f32.mrb[0].mxu0
        %v3757 = vadd.f32 %v3644, %v3756
        %v3758 = vpop.f32.mrb[0].mxu0
        %v3759 = vadd.f32 %v3646, %v3758
        %3760 = vmatprep.mubr.bf16.mxu0 %v1881
        %3761 = vmatmul.mubr.bf16.gmra.mrb[0].mxu0 %v1880
        %v3762 = vpop.f32.mrb[0].mxu0
        %v3763 = vadd.f32 %v3650, %v3762
        %v3764 = vpop.f32.mrb[0].mxu0
        %v3765 = vadd.f32 %v3652, %v3764
        %v3766 = vpop.f32.mrb[0].mxu0
        %v3767 = vadd.f32 %v3654, %v3766
        %v3768 = vpop.f32.mrb[0].mxu0
        %v3769 = vadd.f32 %v3656, %v3768
        %3770 = vmatprep.mubr.bf16.mxu0 %v1889
        %3771 = vmatmul.mubr.bf16.gmra.mrb[0].mxu0 %v1888
        %v3772 = vpop.f32.mrb[0].mxu0
        %v3773 = vadd.f32 %v3660, %v3772
        %v3774 = vpop.f32.mrb[0].mxu0
        %v3775 = vadd.f32 %v3662, %v3774
        %v3776 = vpop.f32.mrb[0].mxu0
        %v3777 = vadd.f32 %v3664, %v3776
        %v3778 = vpop.f32.mrb[0].mxu0
        %v3779 = vadd.f32 %v3666, %v3778
        %3780 = vmatprep.mubr.bf16.mxu0 %v1897
        %3781 = vmatmul.mubr.bf16.gmra.mrb[0].mxu0 %v1896
        %v3782 = vpop.f32.mrb[0].mxu0
        %v3783 = vadd.f32 %v3670, %v3782
        %v3784 = vpop.f32.mrb[0].mxu0
        %v3785 = vadd.f32 %v3672, %v3784
        %v3786 = vpop.f32.mrb[0].mxu0
        %v3787 = vadd.f32 %v3674, %v3786
        %v3788 = vpop.f32.mrb[0].mxu0
        %v3789 = vadd.f32 %v3676, %v3788
        %3790 = vmatprep.mubr.bf16.mxu0 %v1905
        %3791 = vmatmul.mubr.bf16.gmra.mrb[0].mxu0 %v1904
        %v3792 = vpop.f32.mrb[0].mxu0
        %v3793 = vadd.f32 %v3680, %v3792
        %v3794 = vpop.f32.mrb[0].mxu0
        %v3795 = vadd.f32 %v3682, %v3794
        %v3796 = vpop.f32.mrb[0].mxu0
        %v3797 = vadd.f32 %v3684, %v3796
        %v3798 = vpop.f32.mrb[0].mxu0
        %v3799 = vadd.f32 %v3686, %v3798
        %3800 = vmatprep.mubr.bf16.mxu0 %v1913
        %3801 = vmatmul.mubr.bf16.gmra.mrb[0].mxu0 %v1912
        %v3802 = vpop.f32.mrb[0].mxu0
        %v3803 = vadd.f32 %v3690, %v3802
        %v3804 = vpop.f32.mrb[0].mxu0
        %v3805 = vadd.f32 %v3692, %v3804
        %v3806 = vpop.f32.mrb[0].mxu0
        %v3807 = vadd.f32 %v3694, %v3806
        %v3808 = vpop.f32.mrb[0].mxu0
        %v3809 = vadd.f32 %v3696, %v3808
        %3810 = vmatprep.mubr.bf16.mxu0 %v1921
        %3811 = vmatmul.mubr.bf16.gmra.mrb[0].mxu0 %v1920
        %v3812 = vpop.f32.mrb[0].mxu0
        %v3813 = vadd.f32 %v3700, %v3812
        %v3814 = vpop.f32.mrb[0].mxu0
        %v3815 = vadd.f32 %v3702, %v3814
        %v3816 = vpop.f32.mrb[0].mxu0
        %v3817 = vadd.f32 %v3704, %v3816
        %v3818 = vpop.f32.mrb[0].mxu0
        %v3819 = vadd.f32 %v3706, %v3818
        %3820 = vdwg.mxu0
        %3821 = vmatprep.subr.bf16.mxu0 %v3163
        %3822 = vmatpush1.bf16.msra.mxu0 %v3162
        %3823 = vmatprep.subr.bf16.mxu0 %v3167
        %3824 = vmatpush1.bf16.msra.mxu0 %v3166
        %3825 = vmatprep.subr.bf16.mxu0 %v3171
        %3826 = vmatpush1.bf16.msra.mxu0 %v3170
        %3827 = vmatprep.subr.bf16.mxu0 %v3175
        %3828 = vmatpush1.bf16.msra.mxu0 %v3174
        %3829 = vmatprep.subr.bf16.mxu0 %v3179
        %3830 = vmatpush1.bf16.msra.mxu0 %v3178
        %3831 = vmatprep.subr.bf16.mxu0 %v3183
        %3832 = vmatpush1.bf16.msra.mxu0 %v3182
        %3833 = vmatprep.subr.bf16.mxu0 %v3187
        %3834 = vmatpush1.bf16.msra.mxu0 %v3186
        %3835 = vmatprep.subr.bf16.mxu0 %v3191
        %3836 = vmatpush1.bf16.msra.mxu0 %v3190
        %3837 = vmatprep.subr.bf16.mxu0 %v3195
        %3838 = vmatpush1.bf16.msra.mxu0 %v3194
        %3839 = vmatprep.subr.bf16.mxu0 %v3199
        %3840 = vmatpush1.bf16.msra.mxu0 %v3198
        %3841 = vmatprep.subr.bf16.mxu0 %v3203
        %3842 = vmatpush1.bf16.msra.mxu0 %v3202
        %3843 = vmatprep.subr.bf16.mxu0 %v3207
        %3844 = vmatpush1.bf16.msra.mxu0 %v3206
        %3845 = vmatprep.subr.bf16.mxu0 %v3211
        %3846 = vmatpush1.bf16.msra.mxu0 %v3210
        %3847 = vmatprep.subr.bf16.mxu0 %v3215
        %3848 = vmatpush1.bf16.msra.mxu0 %v3214
        %3849 = vmatprep.subr.bf16.mxu0 %v3219
        %3850 = vmatpush1.bf16.msra.mxu0 %v3218
        %3851 = vmatprep.subr.bf16.mxu0 %v3223
        %3852 = vmatpush1.bf16.msra.mxu0 %v3222
        %3853 = vmatprep.mubr.bf16.mxu0 %v1867
        %3854 = vmatmul.mubr.bf16.gmra.mrb[0].mxu0 %v1866
        %v3855 = vpop.f32.mrb[0].mxu0
        %v3856 = vadd.f32 %v3743, %v3855
        %v3857 = vpop.f32.mrb[0].mxu0
        %v3858 = vadd.f32 %v3745, %v3857
        %v3859 = vpop.f32.mrb[0].mxu0
        %v3860 = vadd.f32 %v3747, %v3859
        %v3861 = vpop.f32.mrb[0].mxu0
        %v3862 = vadd.f32 %v3749, %v3861
        %3863 = vmatprep.mubr.bf16.mxu0 %v1875
        %3864 = vmatmul.mubr.bf16.gmra.mrb[0].mxu0 %v1874
        %v3865 = vpop.f32.mrb[0].mxu0
        %v3866 = vadd.f32 %v3753, %v3865
        %v3867 = vpop.f32.mrb[0].mxu0
        %v3868 = vadd.f32 %v3755, %v3867
        %v3869 = vpop.f32.mrb[0].mxu0
        %v3870 = vadd.f32 %v3757, %v3869
        %v3871 = vpop.f32.mrb[0].mxu0
        %v3872 = vadd.f32 %v3759, %v3871
        %3873 = vmatprep.mubr.bf16.mxu0 %v1883
        %3874 = vmatmul.mubr.bf16.gmra.mrb[0].mxu0 %v1882
        %v3875 = vpop.f32.mrb[0].mxu0
        %v3876 = vadd.f32 %v3763, %v3875
        %v3877 = vpop.f32.mrb[0].mxu0
        %v3878 = vadd.f32 %v3765, %v3877
        %v3879 = vpop.f32.mrb[0].mxu0
        %v3880 = vadd.f32 %v3767, %v3879
        %v3881 = vpop.f32.mrb[0].mxu0
        %v3882 = vadd.f32 %v3769, %v3881
        %3883 = vmatprep.mubr.bf16.mxu0 %v1891
        %3884 = vmatmul.mubr.bf16.gmra.mrb[0].mxu0 %v1890
        %v3885 = vpop.f32.mrb[0].mxu0
        %v3886 = vadd.f32 %v3773, %v3885
        %v3887 = vpop.f32.mrb[0].mxu0
        %v3888 = vadd.f32 %v3775, %v3887
        %v3889 = vpop.f32.mrb[0].mxu0
        %v3890 = vadd.f32 %v3777, %v3889
        %v3891 = vpop.f32.mrb[0].mxu0
        %v3892 = vadd.f32 %v3779, %v3891
        %3893 = vmatprep.mubr.bf16.mxu0 %v1899
        %3894 = vmatmul.mubr.bf16.gmra.mrb[0].mxu0 %v1898
        %v3895 = vpop.f32.mrb[0].mxu0
        %v3896 = vadd.f32 %v3783, %v3895
        %v3897 = vpop.f32.mrb[0].mxu0
        %v3898 = vadd.f32 %v3785, %v3897
        %v3899 = vpop.f32.mrb[0].mxu0
        %v3900 = vadd.f32 %v3787, %v3899
        %v3901 = vpop.f32.mrb[0].mxu0
        %v3902 = vadd.f32 %v3789, %v3901
        %3903 = vmatprep.mubr.bf16.mxu0 %v1907
        %3904 = vmatmul.mubr.bf16.gmra.mrb[0].mxu0 %v1906
        %v3905 = vpop.f32.mrb[0].mxu0
        %v3906 = vadd.f32 %v3793, %v3905
        %v3907 = vpop.f32.mrb[0].mxu0
        %v3908 = vadd.f32 %v3795, %v3907
        %v3909 = vpop.f32.mrb[0].mxu0
        %v3910 = vadd.f32 %v3797, %v3909
        %v3911 = vpop.f32.mrb[0].mxu0
        %v3912 = vadd.f32 %v3799, %v3911
        %3913 = vmatprep.mubr.bf16.mxu0 %v1915
        %3914 = vmatmul.mubr.bf16.gmra.mrb[0].mxu0 %v1914
        %v3915 = vpop.f32.mrb[0].mxu0
        %v3916 = vadd.f32 %v3803, %v3915
        %v3917 = vpop.f32.mrb[0].mxu0
        %v3918 = vadd.f32 %v3805, %v3917
        %v3919 = vpop.f32.mrb[0].mxu0
        %v3920 = vadd.f32 %v3807, %v3919
        %v3921 = vpop.f32.mrb[0].mxu0
        %v3922 = vadd.f32 %v3809, %v3921
        %3923 = vmatprep.mubr.bf16.mxu0 %v1923
        %3924 = vmatmul.mubr.bf16.gmra.mrb[0].mxu0 %v1922
        %v3925 = vpop.f32.mrb[0].mxu0
        %v3926 = vadd.f32 %v3813, %v3925
        %v3927 = vpop.f32.mrb[0].mxu0
        %v3928 = vadd.f32 %v3815, %v3927
        %v3929 = vpop.f32.mrb[0].mxu0
        %v3930 = vadd.f32 %v3817, %v3929
        %v3931 = vpop.f32.mrb[0].mxu0
        %v3932 = vadd.f32 %v3819, %v3931
        %3933 = vdwg.mxu0
        %3934 = vmatprep.subr.bf16.mxu0 %v2973
        %3935 = vmatpush1.bf16.msra.mxu0 %v2972
        %3936 = vmatprep.subr.bf16.mxu0 %v2977
        %3937 = vmatpush1.bf16.msra.mxu0 %v2976
        %3938 = vmatprep.subr.bf16.mxu0 %v2981
        %3939 = vmatpush1.bf16.msra.mxu0 %v2980
        %3940 = vmatprep.subr.bf16.mxu0 %v2985
        %3941 = vmatpush1.bf16.msra.mxu0 %v2984
        %3942 = vmatprep.subr.bf16.mxu0 %v2989
        %3943 = vmatpush1.bf16.msra.mxu0 %v2988
        %3944 = vmatprep.subr.bf16.mxu0 %v2993
        %3945 = vmatpush1.bf16.msra.mxu0 %v2992
        %3946 = vmatprep.subr.bf16.mxu0 %v2997
        %3947 = vmatpush1.bf16.msra.mxu0 %v2996
        %3948 = vmatprep.subr.bf16.mxu0 %v3001
        %3949 = vmatpush1.bf16.msra.mxu0 %v3000
        %3950 = vmatprep.subr.bf16.mxu0 %v3005
        %3951 = vmatpush1.bf16.msra.mxu0 %v3004
        %3952 = vmatprep.subr.bf16.mxu0 %v3009
        %3953 = vmatpush1.bf16.msra.mxu0 %v3008
        %3954 = vmatprep.subr.bf16.mxu0 %v3013
        %3955 = vmatpush1.bf16.msra.mxu0 %v3012
        %3956 = vmatprep.subr.bf16.mxu0 %v3017
        %3957 = vmatpush1.bf16.msra.mxu0 %v3016
        %3958 = vmatprep.subr.bf16.mxu0 %v3021
        %3959 = vmatpush1.bf16.msra.mxu0 %v3020
        %3960 = vmatprep.subr.bf16.mxu0 %v3025
        %3961 = vmatpush1.bf16.msra.mxu0 %v3024
        %3962 = vmatprep.subr.bf16.mxu0 %v3029
        %3963 = vmatpush1.bf16.msra.mxu0 %v3028
        %3964 = vmatprep.subr.bf16.mxu0 %v3033
        %3965 = vmatpush1.bf16.msra.mxu0 %v3032
        %3966 = vmatprep.mubr.bf16.mxu0 %v1861
        %3967 = vmatmul.mubr.bf16.gmra.mrb[0].mxu0 %v1860
        %v3968 = vpop.f32.mrb[0].mxu0
        %v3969 = vadd.f32 %v2193, %v3968
        %v3970 = vpop.f32.mrb[0].mxu0
        %v3971 = vadd.f32 %v2197, %v3970
        %v3972 = vpop.f32.mrb[0].mxu0
        %v3973 = vadd.f32 %v2193, %v3972
        %v3974 = vpop.f32.mrb[0].mxu0
        %v3975 = vadd.f32 %v2197, %v3974
        %3976 = vmatprep.mubr.bf16.mxu0 %v1869
        %3977 = vmatmul.mubr.bf16.gmra.mrb[0].mxu0 %v1868
        %v3978 = vpop.f32.mrb[0].mxu0
        %v3979 = vadd.f32 %v2193, %v3978
        %v3980 = vpop.f32.mrb[0].mxu0
        %v3981 = vadd.f32 %v2197, %v3980
        %v3982 = vpop.f32.mrb[0].mxu0
        %v3983 = vadd.f32 %v2193, %v3982
        %v3984 = vpop.f32.mrb[0].mxu0
        %v3985 = vadd.f32 %v2197, %v3984
        %3986 = vmatprep.mubr.bf16.mxu0 %v1877
        %3987 = vmatmul.mubr.bf16.gmra.mrb[0].mxu0 %v1876
        %v3988 = vpop.f32.mrb[0].mxu0
        %v3989 = vadd.f32 %v2193, %v3988
        %v3990 = vpop.f32.mrb[0].mxu0
        %v3991 = vadd.f32 %v2197, %v3990
        %v3992 = vpop.f32.mrb[0].mxu0
        %v3993 = vadd.f32 %v2193, %v3992
        %v3994 = vpop.f32.mrb[0].mxu0
        %v3995 = vadd.f32 %v2197, %v3994
        %3996 = vmatprep.mubr.bf16.mxu0 %v1885
        %3997 = vmatmul.mubr.bf16.gmra.mrb[0].mxu0 %v1884
        %v3998 = vpop.f32.mrb[0].mxu0
        %v3999 = vadd.f32 %v2193, %v3998
        %v4000 = vpop.f32.mrb[0].mxu0
        %v4001 = vadd.f32 %v2197, %v4000
        %v4002 = vpop.f32.mrb[0].mxu0
        %v4003 = vadd.f32 %v2193, %v4002
        %v4004 = vpop.f32.mrb[0].mxu0
        %v4005 = vadd.f32 %v2197, %v4004
        %4006 = vmatprep.mubr.bf16.mxu0 %v1893
        %4007 = vmatmul.mubr.bf16.gmra.mrb[0].mxu0 %v1892
        %v4008 = vpop.f32.mrb[0].mxu0
        %v4009 = vadd.f32 %v2193, %v4008
        %v4010 = vpop.f32.mrb[0].mxu0
        %v4011 = vadd.f32 %v2197, %v4010
        %v4012 = vpop.f32.mrb[0].mxu0
        %v4013 = vadd.f32 %v2193, %v4012
        %v4014 = vpop.f32.mrb[0].mxu0
        %v4015 = vadd.f32 %v2197, %v4014
        %4016 = vmatprep.mubr.bf16.mxu0 %v1901
        %4017 = vmatmul.mubr.bf16.gmra.mrb[0].mxu0 %v1900
        %v4018 = vpop.f32.mrb[0].mxu0
        %v4019 = vadd.f32 %v2193, %v4018
        %v4020 = vpop.f32.mrb[0].mxu0
        %v4021 = vadd.f32 %v2197, %v4020
        %v4022 = vpop.f32.mrb[0].mxu0
        %v4023 = vadd.f32 %v2193, %v4022
        %v4024 = vpop.f32.mrb[0].mxu0
        %v4025 = vadd.f32 %v2197, %v4024
        %4026 = vmatprep.mubr.bf16.mxu0 %v1909
        %4027 = vmatmul.mubr.bf16.gmra.mrb[0].mxu0 %v1908
        %v4028 = vpop.f32.mrb[0].mxu0
        %v4029 = vadd.f32 %v2193, %v4028
        %v4030 = vpop.f32.mrb[0].mxu0
        %v4031 = vadd.f32 %v2197, %v4030
        %v4032 = vpop.f32.mrb[0].mxu0
        %v4033 = vadd.f32 %v2193, %v4032
        %v4034 = vpop.f32.mrb[0].mxu0
        %v4035 = vadd.f32 %v2197, %v4034
        %4036 = vmatprep.mubr.bf16.mxu0 %v1917
        %4037 = vmatmul.mubr.bf16.gmra.mrb[0].mxu0 %v1916
        %v4038 = vpop.f32.mrb[0].mxu0
        %v4039 = vadd.f32 %v2193, %v4038
        %v4040 = vpop.f32.mrb[0].mxu0
        %v4041 = vadd.f32 %v2197, %v4040
        %v4042 = vpop.f32.mrb[0].mxu0
        %v4043 = vadd.f32 %v2193, %v4042
        %v4044 = vpop.f32.mrb[0].mxu0
        %v4045 = vadd.f32 %v2197, %v4044
        %4046 = vdwg.mxu0
        %4047 = vmatprep.subr.bf16.mxu0 %v3037
        %4048 = vmatpush1.bf16.msra.mxu0 %v3036
        %4049 = vmatprep.subr.bf16.mxu0 %v3041
        %4050 = vmatpush1.bf16.msra.mxu0 %v3040
        %4051 = vmatprep.subr.bf16.mxu0 %v3045
        %4052 = vmatpush1.bf16.msra.mxu0 %v3044
        %4053 = vmatprep.subr.bf16.mxu0 %v3049
        %4054 = vmatpush1.bf16.msra.mxu0 %v3048
        %4055 = vmatprep.subr.bf16.mxu0 %v3053
        %4056 = vmatpush1.bf16.msra.mxu0 %v3052
        %4057 = vmatprep.subr.bf16.mxu0 %v3057
        %4058 = vmatpush1.bf16.msra.mxu0 %v3056
        %4059 = vmatprep.subr.bf16.mxu0 %v3061
        %4060 = vmatpush1.bf16.msra.mxu0 %v3060
        %4061 = vmatprep.subr.bf16.mxu0 %v3065
        %4062 = vmatpush1.bf16.msra.mxu0 %v3064
        %4063 = vmatprep.subr.bf16.mxu0 %v3069
        %4064 = vmatpush1.bf16.msra.mxu0 %v3068
        %4065 = vmatprep.subr.bf16.mxu0 %v3073
        %4066 = vmatpush1.bf16.msra.mxu0 %v3072
        %4067 = vmatprep.subr.bf16.mxu0 %v3077
        %4068 = vmatpush1.bf16.msra.mxu0 %v3076
        %4069 = vmatprep.subr.bf16.mxu0 %v3081
        %4070 = vmatpush1.bf16.msra.mxu0 %v3080
        %4071 = vmatprep.subr.bf16.mxu0 %v3085
        %4072 = vmatpush1.bf16.msra.mxu0 %v3084
        %4073 = vmatprep.subr.bf16.mxu0 %v3089
        %4074 = vmatpush1.bf16.msra.mxu0 %v3088
        %4075 = vmatprep.subr.bf16.mxu0 %v3093
        %4076 = vmatpush1.bf16.msra.mxu0 %v3092
        %4077 = vmatprep.subr.bf16.mxu0 %v3097
        %4078 = vmatpush1.bf16.msra.mxu0 %v3096
        %4079 = vmatprep.mubr.bf16.mxu0 %v1863
        %4080 = vmatmul.mubr.bf16.gmra.mrb[0].mxu0 %v1862
        %v4081 = vpop.f32.mrb[0].mxu0
        %v4082 = vadd.f32 %v3969, %v4081
        %v4083 = vpop.f32.mrb[0].mxu0
        %v4084 = vadd.f32 %v3971, %v4083
        %v4085 = vpop.f32.mrb[0].mxu0
        %v4086 = vadd.f32 %v3973, %v4085
        %v4087 = vpop.f32.mrb[0].mxu0
        %v4088 = vadd.f32 %v3975, %v4087
        %4089 = vmatprep.mubr.bf16.mxu0 %v1871
        %4090 = vmatmul.mubr.bf16.gmra.mrb[0].mxu0 %v1870
        %v4091 = vpop.f32.mrb[0].mxu0
        %v4092 = vadd.f32 %v3979, %v4091
        %v4093 = vpop.f32.mrb[0].mxu0
        %v4094 = vadd.f32 %v3981, %v4093
        %v4095 = vpop.f32.mrb[0].mxu0
        %v4096 = vadd.f32 %v3983, %v4095
        %v4097 = vpop.f32.mrb[0].mxu0
        %v4098 = vadd.f32 %v3985, %v4097
        %4099 = vmatprep.mubr.bf16.mxu0 %v1879
        %4100 = vmatmul.mubr.bf16.gmra.mrb[0].mxu0 %v1878
        %v4101 = vpop.f32.mrb[0].mxu0
        %v4102 = vadd.f32 %v3989, %v4101
        %v4103 = vpop.f32.mrb[0].mxu0
        %v4104 = vadd.f32 %v3991, %v4103
        %v4105 = vpop.f32.mrb[0].mxu0
        %v4106 = vadd.f32 %v3993, %v4105
        %v4107 = vpop.f32.mrb[0].mxu0
        %v4108 = vadd.f32 %v3995, %v4107
        %4109 = vmatprep.mubr.bf16.mxu0 %v1887
        %4110 = vmatmul.mubr.bf16.gmra.mrb[0].mxu0 %v1886
        %v4111 = vpop.f32.mrb[0].mxu0
        %v4112 = vadd.f32 %v3999, %v4111
        %v4113 = vpop.f32.mrb[0].mxu0
        %v4114 = vadd.f32 %v4001, %v4113
        %v4115 = vpop.f32.mrb[0].mxu0
        %v4116 = vadd.f32 %v4003, %v4115
        %v4117 = vpop.f32.mrb[0].mxu0
        %v4118 = vadd.f32 %v4005, %v4117
        %4119 = vmatprep.mubr.bf16.mxu0 %v1895
        %4120 = vmatmul.mubr.bf16.gmra.mrb[0].mxu0 %v1894
        %v4121 = vpop.f32.mrb[0].mxu0
        %v4122 = vadd.f32 %v4009, %v4121
        %v4123 = vpop.f32.mrb[0].mxu0
        %v4124 = vadd.f32 %v4011, %v4123
        %v4125 = vpop.f32.mrb[0].mxu0
        %v4126 = vadd.f32 %v4013, %v4125
        %v4127 = vpop.f32.mrb[0].mxu0
        %v4128 = vadd.f32 %v4015, %v4127
        %4129 = vmatprep.mubr.bf16.mxu0 %v1903
        %4130 = vmatmul.mubr.bf16.gmra.mrb[0].mxu0 %v1902
        %v4131 = vpop.f32.mrb[0].mxu0
        %v4132 = vadd.f32 %v4019, %v4131
        %v4133 = vpop.f32.mrb[0].mxu0
        %v4134 = vadd.f32 %v4021, %v4133
        %v4135 = vpop.f32.mrb[0].mxu0
        %v4136 = vadd.f32 %v4023, %v4135
        %v4137 = vpop.f32.mrb[0].mxu0
        %v4138 = vadd.f32 %v4025, %v4137
        %4139 = vmatprep.mubr.bf16.mxu0 %v1911
        %4140 = vmatmul.mubr.bf16.gmra.mrb[0].mxu0 %v1910
        %v4141 = vpop.f32.mrb[0].mxu0
        %v4142 = vadd.f32 %v4029, %v4141
        %v4143 = vpop.f32.mrb[0].mxu0
        %v4144 = vadd.f32 %v4031, %v4143
        %v4145 = vpop.f32.mrb[0].mxu0
        %v4146 = vadd.f32 %v4033, %v4145
        %v4147 = vpop.f32.mrb[0].mxu0
        %v4148 = vadd.f32 %v4035, %v4147
        %4149 = vmatprep.mubr.bf16.mxu0 %v1919
        %4150 = vmatmul.mubr.bf16.gmra.mrb[0].mxu0 %v1918
        %v4151 = vpop.f32.mrb[0].mxu0
        %v4152 = vadd.f32 %v4039, %v4151
        %v4153 = vpop.f32.mrb[0].mxu0
        %v4154 = vadd.f32 %v4041, %v4153
        %v4155 = vpop.f32.mrb[0].mxu0
        %v4156 = vadd.f32 %v4043, %v4155
        %v4157 = vpop.f32.mrb[0].mxu0
        %v4158 = vadd.f32 %v4045, %v4157
        %4159 = vdwg.mxu0
        %4160 = vmatprep.subr.bf16.mxu0 %v3101
        %4161 = vmatpush1.bf16.msra.mxu0 %v3100
        %4162 = vmatprep.subr.bf16.mxu0 %v3105
        %4163 = vmatpush1.bf16.msra.mxu0 %v3104
        %4164 = vmatprep.subr.bf16.mxu0 %v3109
        %4165 = vmatpush1.bf16.msra.mxu0 %v3108
        %4166 = vmatprep.subr.bf16.mxu0 %v3113
        %4167 = vmatpush1.bf16.msra.mxu0 %v3112
        %4168 = vmatprep.subr.bf16.mxu0 %v3117
        %4169 = vmatpush1.bf16.msra.mxu0 %v3116
        %4170 = vmatprep.subr.bf16.mxu0 %v3121
        %4171 = vmatpush1.bf16.msra.mxu0 %v3120
        %4172 = vmatprep.subr.bf16.mxu0 %v3125
        %4173 = vmatpush1.bf16.msra.mxu0 %v3124
        %4174 = vmatprep.subr.bf16.mxu0 %v3129
        %4175 = vmatpush1.bf16.msra.mxu0 %v3128
        %4176 = vmatprep.subr.bf16.mxu0 %v3133
        %4177 = vmatpush1.bf16.msra.mxu0 %v3132
        %4178 = vmatprep.subr.bf16.mxu0 %v3137
        %4179 = vmatpush1.bf16.msra.mxu0 %v3136
        %4180 = vmatprep.subr.bf16.mxu0 %v3141
        %4181 = vmatpush1.bf16.msra.mxu0 %v3140
        %4182 = vmatprep.subr.bf16.mxu0 %v3145
        %4183 = vmatpush1.bf16.msra.mxu0 %v3144
        %4184 = vmatprep.subr.bf16.mxu0 %v3149
        %4185 = vmatpush1.bf16.msra.mxu0 %v3148
        %4186 = vmatprep.subr.bf16.mxu0 %v3153
        %4187 = vmatpush1.bf16.msra.mxu0 %v3152
        %4188 = vmatprep.subr.bf16.mxu0 %v3157
        %4189 = vmatpush1.bf16.msra.mxu0 %v3156
        %4190 = vmatprep.subr.bf16.mxu0 %v3161
        %4191 = vmatpush1.bf16.msra.mxu0 %v3160
        %4192 = vmatprep.mubr.bf16.mxu0 %v1865
        %4193 = vmatmul.mubr.bf16.gmra.mrb[0].mxu0 %v1864
        %v4194 = vpop.f32.mrb[0].mxu0
        %v4195 = vadd.f32 %v4082, %v4194
        %v4196 = vpop.f32.mrb[0].mxu0
        %v4197 = vadd.f32 %v4084, %v4196
        %v4198 = vpop.f32.mrb[0].mxu0
        %v4199 = vadd.f32 %v4086, %v4198
        %v4200 = vpop.f32.mrb[0].mxu0
        %v4201 = vadd.f32 %v4088, %v4200
        %4202 = vmatprep.mubr.bf16.mxu0 %v1873
        %4203 = vmatmul.mubr.bf16.gmra.mrb[0].mxu0 %v1872
        %v4204 = vpop.f32.mrb[0].mxu0
        %v4205 = vadd.f32 %v4092, %v4204
        %v4206 = vpop.f32.mrb[0].mxu0
        %v4207 = vadd.f32 %v4094, %v4206
        %v4208 = vpop.f32.mrb[0].mxu0
        %v4209 = vadd.f32 %v4096, %v4208
        %v4210 = vpop.f32.mrb[0].mxu0
        %v4211 = vadd.f32 %v4098, %v4210
        %4212 = vmatprep.mubr.bf16.mxu0 %v1881
        %4213 = vmatmul.mubr.bf16.gmra.mrb[0].mxu0 %v1880
        %v4214 = vpop.f32.mrb[0].mxu0
        %v4215 = vadd.f32 %v4102, %v4214
        %v4216 = vpop.f32.mrb[0].mxu0
        %v4217 = vadd.f32 %v4104, %v4216
        %v4218 = vpop.f32.mrb[0].mxu0
        %v4219 = vadd.f32 %v4106, %v4218
        %v4220 = vpop.f32.mrb[0].mxu0
        %v4221 = vadd.f32 %v4108, %v4220
        %4222 = vmatprep.mubr.bf16.mxu0 %v1889
        %4223 = vmatmul.mubr.bf16.gmra.mrb[0].mxu0 %v1888
        %v4224 = vpop.f32.mrb[0].mxu0
        %v4225 = vadd.f32 %v4112, %v4224
        %v4226 = vpop.f32.mrb[0].mxu0
        %v4227 = vadd.f32 %v4114, %v4226
        %v4228 = vpop.f32.mrb[0].mxu0
        %v4229 = vadd.f32 %v4116, %v4228
        %v4230 = vpop.f32.mrb[0].mxu0
        %v4231 = vadd.f32 %v4118, %v4230
        %4232 = vmatprep.mubr.bf16.mxu0 %v1897
        %4233 = vmatmul.mubr.bf16.gmra.mrb[0].mxu0 %v1896
        %v4234 = vpop.f32.mrb[0].mxu0
        %v4235 = vadd.f32 %v4122, %v4234
        %v4236 = vpop.f32.mrb[0].mxu0
        %v4237 = vadd.f32 %v4124, %v4236
        %v4238 = vpop.f32.mrb[0].mxu0
        %v4239 = vadd.f32 %v4126, %v4238
        %v4240 = vpop.f32.mrb[0].mxu0
        %v4241 = vadd.f32 %v4128, %v4240
        %4242 = vmatprep.mubr.bf16.mxu0 %v1905
        %4243 = vmatmul.mubr.bf16.gmra.mrb[0].mxu0 %v1904
        %v4244 = vpop.f32.mrb[0].mxu0
        %v4245 = vadd.f32 %v4132, %v4244
        %v4246 = vpop.f32.mrb[0].mxu0
        %v4247 = vadd.f32 %v4134, %v4246
        %v4248 = vpop.f32.mrb[0].mxu0
        %v4249 = vadd.f32 %v4136, %v4248
        %v4250 = vpop.f32.mrb[0].mxu0
        %v4251 = vadd.f32 %v4138, %v4250
        %4252 = vmatprep.mubr.bf16.mxu0 %v1913
        %4253 = vmatmul.mubr.bf16.gmra.mrb[0].mxu0 %v1912
        %v4254 = vpop.f32.mrb[0].mxu0
        %v4255 = vadd.f32 %v4142, %v4254
        %v4256 = vpop.f32.mrb[0].mxu0
        %v4257 = vadd.f32 %v4144, %v4256
        %v4258 = vpop.f32.mrb[0].mxu0
        %v4259 = vadd.f32 %v4146, %v4258
        %v4260 = vpop.f32.mrb[0].mxu0
        %v4261 = vadd.f32 %v4148, %v4260
        %4262 = vmatprep.mubr.bf16.mxu0 %v1921
        %4263 = vmatmul.mubr.bf16.gmra.mrb[0].mxu0 %v1920
        %v4264 = vpop.f32.mrb[0].mxu0
        %v4265 = vadd.f32 %v4152, %v4264
        %v4266 = vpop.f32.mrb[0].mxu0
        %v4267 = vadd.f32 %v4154, %v4266
        %v4268 = vpop.f32.mrb[0].mxu0
        %v4269 = vadd.f32 %v4156, %v4268
        %v4270 = vpop.f32.mrb[0].mxu0
        %v4271 = vadd.f32 %v4158, %v4270
        %4272 = vdwg.mxu0
        %4273 = vmatprep.subr.bf16.mxu0 %v3165
        %4274 = vmatpush1.bf16.msra.mxu0 %v3164
        %4275 = vmatprep.subr.bf16.mxu0 %v3169
        %4276 = vmatpush1.bf16.msra.mxu0 %v3168
        %4277 = vmatprep.subr.bf16.mxu0 %v3173
        %4278 = vmatpush1.bf16.msra.mxu0 %v3172
        %4279 = vmatprep.subr.bf16.mxu0 %v3177
        %4280 = vmatpush1.bf16.msra.mxu0 %v3176
        %4281 = vmatprep.subr.bf16.mxu0 %v3181
        %4282 = vmatpush1.bf16.msra.mxu0 %v3180
        %4283 = vmatprep.subr.bf16.mxu0 %v3185
        %4284 = vmatpush1.bf16.msra.mxu0 %v3184
        %4285 = vmatprep.subr.bf16.mxu0 %v3189
        %4286 = vmatpush1.bf16.msra.mxu0 %v3188
        %4287 = vmatprep.subr.bf16.mxu0 %v3193
        %4288 = vmatpush1.bf16.msra.mxu0 %v3192
        %4289 = vmatprep.subr.bf16.mxu0 %v3197
        %4290 = vmatpush1.bf16.msra.mxu0 %v3196
        %4291 = vmatprep.subr.bf16.mxu0 %v3201
        %4292 = vmatpush1.bf16.msra.mxu0 %v3200
        %4293 = vmatprep.subr.bf16.mxu0 %v3205
        %4294 = vmatpush1.bf16.msra.mxu0 %v3204
        %4295 = vmatprep.subr.bf16.mxu0 %v3209
        %4296 = vmatpush1.bf16.msra.mxu0 %v3208
        %4297 = vmatprep.subr.bf16.mxu0 %v3213
        %4298 = vmatpush1.bf16.msra.mxu0 %v3212
        %4299 = vmatprep.subr.bf16.mxu0 %v3217
        %4300 = vmatpush1.bf16.msra.mxu0 %v3216
        %4301 = vmatprep.subr.bf16.mxu0 %v3221
        %4302 = vmatpush1.bf16.msra.mxu0 %v3220
        %4303 = vmatprep.subr.bf16.mxu0 %v3225
        %4304 = vmatpush1.bf16.msra.mxu0 %v3224
        %4305 = vmatprep.mubr.bf16.mxu0 %v1867
        %4306 = vmatmul.mubr.bf16.gmra.mrb[0].mxu0 %v1866
        %v4307 = vpop.f32.mrb[0].mxu0
        %v4308 = vadd.f32 %v4195, %v4307
        %v4309 = vpop.f32.mrb[0].mxu0
        %v4310 = vadd.f32 %v4197, %v4309
        %v4311 = vpop.f32.mrb[0].mxu0
        %v4312 = vadd.f32 %v4199, %v4311
        %v4313 = vpop.f32.mrb[0].mxu0
        %v4314 = vadd.f32 %v4201, %v4313
        %4315 = vmatprep.mubr.bf16.mxu0 %v1875
        %4316 = vmatmul.mubr.bf16.gmra.mrb[0].mxu0 %v1874
        %v4317 = vpop.f32.mrb[0].mxu0
        %v4318 = vadd.f32 %v4205, %v4317
        %v4319 = vpop.f32.mrb[0].mxu0
        %v4320 = vadd.f32 %v4207, %v4319
        %v4321 = vpop.f32.mrb[0].mxu0
        %v4322 = vadd.f32 %v4209, %v4321
        %v4323 = vpop.f32.mrb[0].mxu0
        %v4324 = vadd.f32 %v4211, %v4323
        %4325 = vmatprep.mubr.bf16.mxu0 %v1883
        %4326 = vmatmul.mubr.bf16.gmra.mrb[0].mxu0 %v1882
        %v4327 = vpop.f32.mrb[0].mxu0
        %v4328 = vadd.f32 %v4215, %v4327
        %v4329 = vpop.f32.mrb[0].mxu0
        %v4330 = vadd.f32 %v4217, %v4329
        %v4331 = vpop.f32.mrb[0].mxu0
        %v4332 = vadd.f32 %v4219, %v4331
        %v4333 = vpop.f32.mrb[0].mxu0
        %v4334 = vadd.f32 %v4221, %v4333
        %4335 = vmatprep.mubr.bf16.mxu0 %v1891
        %4336 = vmatmul.mubr.bf16.gmra.mrb[0].mxu0 %v1890
        %v4337 = vpop.f32.mrb[0].mxu0
        %v4338 = vadd.f32 %v4225, %v4337
        %v4339 = vpop.f32.mrb[0].mxu0
        %v4340 = vadd.f32 %v4227, %v4339
        %v4341 = vpop.f32.mrb[0].mxu0
        %v4342 = vadd.f32 %v4229, %v4341
        %v4343 = vpop.f32.mrb[0].mxu0
        %v4344 = vadd.f32 %v4231, %v4343
        %4345 = vmatprep.mubr.bf16.mxu0 %v1899
        %4346 = vmatmul.mubr.bf16.gmra.mrb[0].mxu0 %v1898
        %v4347 = vpop.f32.mrb[0].mxu0
        %v4348 = vadd.f32 %v4235, %v4347
        %v4349 = vpop.f32.mrb[0].mxu0
        %v4350 = vadd.f32 %v4237, %v4349
        %v4351 = vpop.f32.mrb[0].mxu0
        %v4352 = vadd.f32 %v4239, %v4351
        %v4353 = vpop.f32.mrb[0].mxu0
        %v4354 = vadd.f32 %v4241, %v4353
        %4355 = vmatprep.mubr.bf16.mxu0 %v1907
        %4356 = vmatmul.mubr.bf16.gmra.mrb[0].mxu0 %v1906
        %v4357 = vpop.f32.mrb[0].mxu0
        %v4358 = vadd.f32 %v4245, %v4357
        %v4359 = vpop.f32.mrb[0].mxu0
        %v4360 = vadd.f32 %v4247, %v4359
        %v4361 = vpop.f32.mrb[0].mxu0
        %v4362 = vadd.f32 %v4249, %v4361
        %v4363 = vpop.f32.mrb[0].mxu0
        %v4364 = vadd.f32 %v4251, %v4363
        %4365 = vmatprep.mubr.bf16.mxu0 %v1915
        %4366 = vmatmul.mubr.bf16.gmra.mrb[0].mxu0 %v1914
        %v4367 = vpop.f32.mrb[0].mxu0
        %v4368 = vadd.f32 %v4255, %v4367
        %v4369 = vpop.f32.mrb[0].mxu0
        %v4370 = vadd.f32 %v4257, %v4369
        %v4371 = vpop.f32.mrb[0].mxu0
        %v4372 = vadd.f32 %v4259, %v4371
        %v4373 = vpop.f32.mrb[0].mxu0
        %v4374 = vadd.f32 %v4261, %v4373
        %4375 = vmatprep.mubr.bf16.mxu0 %v1923
        %4376 = vmatmul.mubr.bf16.gmra.mrb[0].mxu0 %v1922
        %v4377 = vpop.f32.mrb[0].mxu0
        %v4378 = vadd.f32 %v4265, %v4377
        %v4379 = vpop.f32.mrb[0].mxu0
        %v4380 = vadd.f32 %v4267, %v4379
        %v4381 = vpop.f32.mrb[0].mxu0
        %v4382 = vadd.f32 %v4269, %v4381
        %v4383 = vpop.f32.mrb[0].mxu0
        %v4384 = vadd.f32 %v4271, %v4383
        %4385 = vdwg.mxu0
        %v4386 = vmax.f32 %v3856, 0.0
        %v4387 = vmax.f32 %v3858, 0.0
        %v4388 = vmax.f32 %v4308, 0.0
        %v4389 = vmax.f32 %v4310, 0.0
        %v4390 = vmax.f32 %v3860, 0.0
        %v4391 = vmax.f32 %v3862, 0.0
        %v4392 = vmax.f32 %v4312, 0.0
        %v4393 = vmax.f32 %v4314, 0.0
        %v4394 = vmax.f32 %v3866, 0.0
        %v4395 = vmax.f32 %v3868, 0.0
        %v4396 = vmax.f32 %v4318, 0.0
        %v4397 = vmax.f32 %v4320, 0.0
        %v4398 = vmax.f32 %v3870, 0.0
        %v4399 = vmax.f32 %v3872, 0.0
        %v4400 = vmax.f32 %v4322, 0.0
        %v4401 = vmax.f32 %v4324, 0.0
        %v4402 = vmax.f32 %v3876, 0.0
        %v4403 = vmax.f32 %v3878, 0.0
        %v4404 = vmax.f32 %v4328, 0.0
        %v4405 = vmax.f32 %v4330, 0.0
        %v4406 = vmax.f32 %v3880, 0.0
        %v4407 = vmax.f32 %v3882, 0.0
        %v4408 = vmax.f32 %v4332, 0.0
        %v4409 = vmax.f32 %v4334, 0.0
        %v4410 = vmax.f32 %v3886, 0.0
        %v4411 = vmax.f32 %v3888, 0.0
        %v4412 = vmax.f32 %v4338, 0.0
        %v4413 = vmax.f32 %v4340, 0.0
        %v4414 = vmax.f32 %v3890, 0.0
        %v4415 = vmax.f32 %v3892, 0.0
        %v4416 = vmax.f32 %v4342, 0.0
        %v4417 = vmax.f32 %v4344, 0.0
        %v4418 = vmax.f32 %v3896, 0.0
        %v4419 = vmax.f32 %v3898, 0.0
        %v4420 = vmax.f32 %v4348, 0.0
        %v4421 = vmax.f32 %v4350, 0.0
        %v4422 = vmax.f32 %v3900, 0.0
        %v4423 = vmax.f32 %v3902, 0.0
        %v4424 = vmax.f32 %v4352, 0.0
        %v4425 = vmax.f32 %v4354, 0.0
        %v4426 = vmax.f32 %v3906, 0.0
        %v4427 = vmax.f32 %v3908, 0.0
        %v4428 = vmax.f32 %v4358, 0.0
        %v4429 = vmax.f32 %v4360, 0.0
        %v4430 = vmax.f32 %v3910, 0.0
        %v4431 = vmax.f32 %v3912, 0.0
        %v4432 = vmax.f32 %v4362, 0.0
        %v4433 = vmax.f32 %v4364, 0.0
        %v4434 = vmax.f32 %v3916, 0.0
        %v4435 = vmax.f32 %v3918, 0.0
        %v4436 = vmax.f32 %v4368, 0.0
        %v4437 = vmax.f32 %v4370, 0.0
        %v4438 = vmax.f32 %v3920, 0.0
        %v4439 = vmax.f32 %v3922, 0.0
        %v4440 = vmax.f32 %v4372, 0.0
        %v4441 = vmax.f32 %v4374, 0.0
        %v4442 = vmax.f32 %v3926, 0.0
        %v4443 = vmax.f32 %v3928, 0.0
        %v4444 = vmax.f32 %v4378, 0.0
        %v4445 = vmax.f32 %v4380, 0.0
        %v4446 = vmax.f32 %v3930, 0.0
        %v4447 = vmax.f32 %v3932, 0.0
        %v4448 = vmax.f32 %v4382, 0.0
        %v4449 = vmax.f32 %v4384, 0.0
        %v4450 = vpack.c.bf16 %v4390, %v4386
        %v4451 = vpack.c.bf16 %v4391, %v4387
        %v4452 = vpack.c.bf16 %v4392, %v4388
        %v4453 = vpack.c.bf16 %v4393, %v4389
        %v4454 = vpack.c.bf16 %v4398, %v4394
        %v4455 = vpack.c.bf16 %v4399, %v4395
        %v4456 = vpack.c.bf16 %v4400, %v4396
        %v4457 = vpack.c.bf16 %v4401, %v4397
        %v4458 = vpack.c.bf16 %v4406, %v4402
        %v4459 = vpack.c.bf16 %v4407, %v4403
        %v4460 = vpack.c.bf16 %v4408, %v4404
        %v4461 = vpack.c.bf16 %v4409, %v4405
        %v4462 = vpack.c.bf16 %v4414, %v4410
        %v4463 = vpack.c.bf16 %v4415, %v4411
        %v4464 = vpack.c.bf16 %v4416, %v4412
        %v4465 = vpack.c.bf16 %v4417, %v4413
        %v4466 = vpack.c.bf16 %v4422, %v4418
        %v4467 = vpack.c.bf16 %v4423, %v4419
        %v4468 = vpack.c.bf16 %v4424, %v4420
        %v4469 = vpack.c.bf16 %v4425, %v4421
        %v4470 = vpack.c.bf16 %v4430, %v4426
        %v4471 = vpack.c.bf16 %v4431, %v4427
        %v4472 = vpack.c.bf16 %v4432, %v4428
        %v4473 = vpack.c.bf16 %v4433, %v4429
        %v4474 = vpack.c.bf16 %v4438, %v4434
        %v4475 = vpack.c.bf16 %v4439, %v4435
        %v4476 = vpack.c.bf16 %v4440, %v4436
        %v4477 = vpack.c.bf16 %v4441, %v4437
        %v4478 = vpack.c.bf16 %v4446, %v4442
        %v4479 = vpack.c.bf16 %v4447, %v4443
        %v4480 = vpack.c.bf16 %v4448, %v4444
        %v4481 = vpack.c.bf16 %v4449, %v4445
        %v4482 = vld [vmem:[#allocation8] sm:$0xff]
        %v4483 = vld [vmem:[#allocation8 + $0x8] sm:$0xff]
        %v4484 = vld [vmem:[#allocation8 + $0x10] sm:$0xff]
        %v4485 = vld [vmem:[#allocation8 + $0x18] sm:$0xff]
        %v4486 = vld [vmem:[#allocation8 + $0x20] sm:$0xff]
        %v4487 = vld [vmem:[#allocation8 + $0x28] sm:$0xff]
        %v4488 = vld [vmem:[#allocation8 + $0x30] sm:$0xff]
        %v4489 = vld [vmem:[#allocation8 + $0x38] sm:$0xff]
        %v4490 = vld [vmem:[#allocation8 + $0x40] sm:$0xff]
        %v4491 = vld [vmem:[#allocation8 + $0x48] sm:$0xff]
        %v4492 = vld [vmem:[#allocation8 + $0x50] sm:$0xff]
        %v4493 = vld [vmem:[#allocation8 + $0x58] sm:$0xff]
        %v4494 = vld [vmem:[#allocation8 + $0x60] sm:$0xff]
        %v4495 = vld [vmem:[#allocation8 + $0x68] sm:$0xff]
        %v4496 = vld [vmem:[#allocation8 + $0x70] sm:$0xff]
        %v4497 = vld [vmem:[#allocation8 + $0x78] sm:$0xff]
        %v4498 = vld [vmem:[#allocation8 + $0x80] sm:$0xff]
        %v4499 = vld [vmem:[#allocation8 + $0x88] sm:$0xff]
        %v4500 = vld [vmem:[#allocation8 + $0x90] sm:$0xff]
        %v4501 = vld [vmem:[#allocation8 + $0x98] sm:$0xff]
        %v4502 = vld [vmem:[#allocation8 + $0xa0] sm:$0xff]
        %v4503 = vld [vmem:[#allocation8 + $0xa8] sm:$0xff]
        %v4504 = vld [vmem:[#allocation8 + $0xb0] sm:$0xff]
        %v4505 = vld [vmem:[#allocation8 + $0xb8] sm:$0xff]
        %v4506 = vld [vmem:[#allocation8 + $0xc0] sm:$0xff]
        %v4507 = vld [vmem:[#allocation8 + $0xc8] sm:$0xff]
        %v4508 = vld [vmem:[#allocation8 + $0xd0] sm:$0xff]
        %v4509 = vld [vmem:[#allocation8 + $0xd8] sm:$0xff]
        %v4510 = vld [vmem:[#allocation8 + $0xe0] sm:$0xff]
        %v4511 = vld [vmem:[#allocation8 + $0xe8] sm:$0xff]
        %v4512 = vld [vmem:[#allocation8 + $0xf0] sm:$0xff]
        %v4513 = vld [vmem:[#allocation8 + $0xf8] sm:$0xff]
        %v4514 = vld [vmem:[#allocation8 + $0x100] sm:$0xff]
        %v4515 = vld [vmem:[#allocation8 + $0x108] sm:$0xff]
        %v4516 = vld [vmem:[#allocation8 + $0x110] sm:$0xff]
        %v4517 = vld [vmem:[#allocation8 + $0x118] sm:$0xff]
        %v4518 = vld [vmem:[#allocation8 + $0x120] sm:$0xff]
        %v4519 = vld [vmem:[#allocation8 + $0x128] sm:$0xff]
        %v4520 = vld [vmem:[#allocation8 + $0x130] sm:$0xff]
        %v4521 = vld [vmem:[#allocation8 + $0x138] sm:$0xff]
        %v4522 = vld [vmem:[#allocation8 + $0x140] sm:$0xff]
        %v4523 = vld [vmem:[#allocation8 + $0x148] sm:$0xff]
        %v4524 = vld [vmem:[#allocation8 + $0x150] sm:$0xff]
        %v4525 = vld [vmem:[#allocation8 + $0x158] sm:$0xff]
        %v4526 = vld [vmem:[#allocation8 + $0x160] sm:$0xff]
        %v4527 = vld [vmem:[#allocation8 + $0x168] sm:$0xff]
        %v4528 = vld [vmem:[#allocation8 + $0x170] sm:$0xff]
        %v4529 = vld [vmem:[#allocation8 + $0x178] sm:$0xff]
        %v4530 = vld [vmem:[#allocation8 + $0x180] sm:$0xff]
        %v4531 = vld [vmem:[#allocation8 + $0x188] sm:$0xff]
        %v4532 = vld [vmem:[#allocation8 + $0x190] sm:$0xff]
        %v4533 = vld [vmem:[#allocation8 + $0x198] sm:$0xff]
        %v4534 = vld [vmem:[#allocation8 + $0x1a0] sm:$0xff]
        %v4535 = vld [vmem:[#allocation8 + $0x1a8] sm:$0xff]
        %v4536 = vld [vmem:[#allocation8 + $0x1b0] sm:$0xff]
        %v4537 = vld [vmem:[#allocation8 + $0x1b8] sm:$0xff]
        %v4538 = vld [vmem:[#allocation8 + $0x1c0] sm:$0xff]
        %v4539 = vld [vmem:[#allocation8 + $0x1c8] sm:$0xff]
        %v4540 = vld [vmem:[#allocation8 + $0x1d0] sm:$0xff]
        %v4541 = vld [vmem:[#allocation8 + $0x1d8] sm:$0xff]
        %v4542 = vld [vmem:[#allocation8 + $0x1e0] sm:$0xff]
        %v4543 = vld [vmem:[#allocation8 + $0x1e8] sm:$0xff]
        %v4544 = vld [vmem:[#allocation8 + $0x1f0] sm:$0xff]
        %v4545 = vld [vmem:[#allocation8 + $0x1f8] sm:$0xff]
        %v4546 = vld [vmem:[%s6 + $0xc] sm:$0x3]
        %v4548 = vlaneseq
        %v4549 = vshrl.u32 %v4548, 7
        %v4550 = vsub.s32 0, %v4549
        %v4551 = vrot.slane %v4546, %v4550
        %v4552 = vlaneseq
        %v4553 = vshrl.u32 %v4552, 7
        %v4554 = vsub.s32 1, %v4553
        %v4555 = vrot.slane %v4546, %v4554
        %v4622 = vunpack.c.l.b16 %v4482
        %v4623 = vunpack.c.h.b16 %v4482
        %v4624 = vunpack.c.l.b16 %v4483
        %v4625 = vunpack.c.h.b16 %v4483
        %v4626 = vunpack.c.l.b16 %v4484
        %v4627 = vunpack.c.h.b16 %v4484
        %v4628 = vunpack.c.l.b16 %v4485
        %v4629 = vunpack.c.h.b16 %v4485
        %v4630 = vunpack.c.l.b16 %v4486
        %v4631 = vunpack.c.h.b16 %v4486
        %v4632 = vunpack.c.l.b16 %v4487
        %v4633 = vunpack.c.h.b16 %v4487
        %v4634 = vunpack.c.l.b16 %v4488
        %v4635 = vunpack.c.h.b16 %v4488
        %v4636 = vunpack.c.l.b16 %v4489
        %v4637 = vunpack.c.h.b16 %v4489
        %v4638 = vunpack.c.l.b16 %v4490
        %v4639 = vunpack.c.h.b16 %v4490
        %v4640 = vunpack.c.l.b16 %v4491
        %v4641 = vunpack.c.h.b16 %v4491
        %v4642 = vunpack.c.l.b16 %v4492
        %v4643 = vunpack.c.h.b16 %v4492
        %v4644 = vunpack.c.l.b16 %v4493
        %v4645 = vunpack.c.h.b16 %v4493
        %v4646 = vunpack.c.l.b16 %v4494
        %v4647 = vunpack.c.h.b16 %v4494
        %v4648 = vunpack.c.l.b16 %v4495
        %v4649 = vunpack.c.h.b16 %v4495
        %v4650 = vunpack.c.l.b16 %v4496
        %v4651 = vunpack.c.h.b16 %v4496
        %v4652 = vunpack.c.l.b16 %v4497
        %v4653 = vunpack.c.h.b16 %v4497
        %v4654 = vunpack.c.l.b16 %v4498
        %v4655 = vunpack.c.h.b16 %v4498
        %v4656 = vunpack.c.l.b16 %v4499
        %v4657 = vunpack.c.h.b16 %v4499
        %v4658 = vunpack.c.l.b16 %v4500
        %v4659 = vunpack.c.h.b16 %v4500
        %v4660 = vunpack.c.l.b16 %v4501
        %v4661 = vunpack.c.h.b16 %v4501
        %v4662 = vunpack.c.l.b16 %v4502
        %v4663 = vunpack.c.h.b16 %v4502
        %v4664 = vunpack.c.l.b16 %v4503
        %v4665 = vunpack.c.h.b16 %v4503
        %v4666 = vunpack.c.l.b16 %v4504
        %v4667 = vunpack.c.h.b16 %v4504
        %v4668 = vunpack.c.l.b16 %v4505
        %v4669 = vunpack.c.h.b16 %v4505
        %v4670 = vunpack.c.l.b16 %v4506
        %v4671 = vunpack.c.h.b16 %v4506
        %v4672 = vunpack.c.l.b16 %v4507
        %v4673 = vunpack.c.h.b16 %v4507
        %v4674 = vunpack.c.l.b16 %v4508
        %v4675 = vunpack.c.h.b16 %v4508
        %v4676 = vunpack.c.l.b16 %v4509
        %v4677 = vunpack.c.h.b16 %v4509
        %v4678 = vunpack.c.l.b16 %v4510
        %v4679 = vunpack.c.h.b16 %v4510
        %v4680 = vunpack.c.l.b16 %v4511
        %v4681 = vunpack.c.h.b16 %v4511
        %v4682 = vunpack.c.l.b16 %v4512
        %v4683 = vunpack.c.h.b16 %v4512
        %v4684 = vunpack.c.l.b16 %v4513
        %v4685 = vunpack.c.h.b16 %v4513
        %v4686 = vunpack.c.l.b16 %v4514
        %v4687 = vunpack.c.h.b16 %v4514
        %v4688 = vunpack.c.l.b16 %v4515
        %v4689 = vunpack.c.h.b16 %v4515
        %v4690 = vunpack.c.l.b16 %v4516
        %v4691 = vunpack.c.h.b16 %v4516
        %v4692 = vunpack.c.l.b16 %v4517
        %v4693 = vunpack.c.h.b16 %v4517
        %v4694 = vunpack.c.l.b16 %v4518
        %v4695 = vunpack.c.h.b16 %v4518
        %v4696 = vunpack.c.l.b16 %v4519
        %v4697 = vunpack.c.h.b16 %v4519
        %v4698 = vunpack.c.l.b16 %v4520
        %v4699 = vunpack.c.h.b16 %v4520
        %v4700 = vunpack.c.l.b16 %v4521
        %v4701 = vunpack.c.h.b16 %v4521
        %v4702 = vunpack.c.l.b16 %v4522
        %v4703 = vunpack.c.h.b16 %v4522
        %v4704 = vunpack.c.l.b16 %v4523
        %v4705 = vunpack.c.h.b16 %v4523
        %v4706 = vunpack.c.l.b16 %v4524
        %v4707 = vunpack.c.h.b16 %v4524
        %v4708 = vunpack.c.l.b16 %v4525
        %v4709 = vunpack.c.h.b16 %v4525
        %v4710 = vunpack.c.l.b16 %v4526
        %v4711 = vunpack.c.h.b16 %v4526
        %v4712 = vunpack.c.l.b16 %v4527
        %v4713 = vunpack.c.h.b16 %v4527
        %v4714 = vunpack.c.l.b16 %v4528
        %v4715 = vunpack.c.h.b16 %v4528
        %v4716 = vunpack.c.l.b16 %v4529
        %v4717 = vunpack.c.h.b16 %v4529
        %v4718 = vunpack.c.l.b16 %v4530
        %v4719 = vunpack.c.h.b16 %v4530
        %v4720 = vunpack.c.l.b16 %v4531
        %v4721 = vunpack.c.h.b16 %v4531
        %v4722 = vunpack.c.l.b16 %v4532
        %v4723 = vunpack.c.h.b16 %v4532
        %v4724 = vunpack.c.l.b16 %v4533
        %v4725 = vunpack.c.h.b16 %v4533
        %v4726 = vunpack.c.l.b16 %v4534
        %v4727 = vunpack.c.h.b16 %v4534
        %v4728 = vunpack.c.l.b16 %v4535
        %v4729 = vunpack.c.h.b16 %v4535
        %v4730 = vunpack.c.l.b16 %v4536
        %v4731 = vunpack.c.h.b16 %v4536
        %v4732 = vunpack.c.l.b16 %v4537
        %v4733 = vunpack.c.h.b16 %v4537
        %v4734 = vunpack.c.l.b16 %v4538
        %v4735 = vunpack.c.h.b16 %v4538
        %v4736 = vunpack.c.l.b16 %v4539
        %v4737 = vunpack.c.h.b16 %v4539
        %v4738 = vunpack.c.l.b16 %v4540
        %v4739 = vunpack.c.h.b16 %v4540
        %v4740 = vunpack.c.l.b16 %v4541
        %v4741 = vunpack.c.h.b16 %v4541
        %v4742 = vunpack.c.l.b16 %v4542
        %v4743 = vunpack.c.h.b16 %v4542
        %v4744 = vunpack.c.l.b16 %v4543
        %v4745 = vunpack.c.h.b16 %v4543
        %v4746 = vunpack.c.l.b16 %v4544
        %v4747 = vunpack.c.h.b16 %v4544
        %v4748 = vunpack.c.l.b16 %v4545
        %v4749 = vunpack.c.h.b16 %v4545
        %v4750 = vpack.c.b16 %v4624, %v4622
        %v4751 = vpack.c.b16 %v4625, %v4623
        %v4752 = vpack.c.b16 %v4628, %v4626
        %v4753 = vpack.c.b16 %v4629, %v4627
        %v4754 = vpack.c.b16 %v4632, %v4630
        %v4755 = vpack.c.b16 %v4633, %v4631
        %v4756 = vpack.c.b16 %v4636, %v4634
        %v4757 = vpack.c.b16 %v4637, %v4635
        %v4758 = vpack.c.b16 %v4640, %v4638
        %v4759 = vpack.c.b16 %v4641, %v4639
        %v4760 = vpack.c.b16 %v4644, %v4642
        %v4761 = vpack.c.b16 %v4645, %v4643
        %v4762 = vpack.c.b16 %v4648, %v4646
        %v4763 = vpack.c.b16 %v4649, %v4647
        %v4764 = vpack.c.b16 %v4652, %v4650
        %v4765 = vpack.c.b16 %v4653, %v4651
        %v4766 = vpack.c.b16 %v4656, %v4654
        %v4767 = vpack.c.b16 %v4657, %v4655
        %v4768 = vpack.c.b16 %v4660, %v4658
        %v4769 = vpack.c.b16 %v4661, %v4659
        %v4770 = vpack.c.b16 %v4664, %v4662
        %v4771 = vpack.c.b16 %v4665, %v4663
        %v4772 = vpack.c.b16 %v4668, %v4666
        %v4773 = vpack.c.b16 %v4669, %v4667
        %v4774 = vpack.c.b16 %v4672, %v4670
        %v4775 = vpack.c.b16 %v4673, %v4671
        %v4776 = vpack.c.b16 %v4676, %v4674
        %v4777 = vpack.c.b16 %v4677, %v4675
        %v4778 = vpack.c.b16 %v4680, %v4678
        %v4779 = vpack.c.b16 %v4681, %v4679
        %v4780 = vpack.c.b16 %v4684, %v4682
        %v4781 = vpack.c.b16 %v4685, %v4683
        %v4782 = vpack.c.b16 %v4688, %v4686
        %v4783 = vpack.c.b16 %v4689, %v4687
        %v4784 = vpack.c.b16 %v4692, %v4690
        %v4785 = vpack.c.b16 %v4693, %v4691
        %v4786 = vpack.c.b16 %v4696, %v4694
        %v4787 = vpack.c.b16 %v4697, %v4695
        %v4788 = vpack.c.b16 %v4700, %v4698
        %v4789 = vpack.c.b16 %v4701, %v4699
        %v4790 = vpack.c.b16 %v4704, %v4702
        %v4791 = vpack.c.b16 %v4705, %v4703
        %v4792 = vpack.c.b16 %v4708, %v4706
        %v4793 = vpack.c.b16 %v4709, %v4707
        %v4794 = vpack.c.b16 %v4712, %v4710
        %v4795 = vpack.c.b16 %v4713, %v4711
        %v4796 = vpack.c.b16 %v4716, %v4714
        %v4797 = vpack.c.b16 %v4717, %v4715
        %v4798 = vpack.c.b16 %v4720, %v4718
        %v4799 = vpack.c.b16 %v4721, %v4719
        %v4800 = vpack.c.b16 %v4724, %v4722
        %v4801 = vpack.c.b16 %v4725, %v4723
        %v4802 = vpack.c.b16 %v4728, %v4726
        %v4803 = vpack.c.b16 %v4729, %v4727
        %v4804 = vpack.c.b16 %v4732, %v4730
        %v4805 = vpack.c.b16 %v4733, %v4731
        %v4806 = vpack.c.b16 %v4736, %v4734
        %v4807 = vpack.c.b16 %v4737, %v4735
        %v4808 = vpack.c.b16 %v4740, %v4738
        %v4809 = vpack.c.b16 %v4741, %v4739
        %v4810 = vpack.c.b16 %v4744, %v4742
        %v4811 = vpack.c.b16 %v4745, %v4743
        %v4812 = vpack.c.b16 %v4748, %v4746
        %v4813 = vpack.c.b16 %v4749, %v4747
        %4878 = vmatprep.subr.bf16.mxu0 %v4751
        %4879 = vmatpush1.bf16.msra.mxu0 %v4750
        %4880 = vmatprep.subr.bf16.mxu0 %v4753
        %4881 = vmatpush1.bf16.msra.mxu0 %v4752
        %4882 = vmatprep.subr.bf16.mxu0 %v4755
        %4883 = vmatpush1.bf16.msra.mxu0 %v4754
        %4884 = vmatprep.subr.bf16.mxu0 %v4757
        %4885 = vmatpush1.bf16.msra.mxu0 %v4756
        %4886 = vmatprep.subr.bf16.mxu0 %v4759
        %4887 = vmatpush1.bf16.msra.mxu0 %v4758
        %4888 = vmatprep.subr.bf16.mxu0 %v4761
        %4889 = vmatpush1.bf16.msra.mxu0 %v4760
        %4890 = vmatprep.subr.bf16.mxu0 %v4763
        %4891 = vmatpush1.bf16.msra.mxu0 %v4762
        %4892 = vmatprep.subr.bf16.mxu0 %v4765
        %4893 = vmatpush1.bf16.msra.mxu0 %v4764
        %4894 = vmatprep.subr.bf16.mxu0 %v4767
        %4895 = vmatpush1.bf16.msra.mxu0 %v4766
        %4896 = vmatprep.subr.bf16.mxu0 %v4769
        %4897 = vmatpush1.bf16.msra.mxu0 %v4768
        %4898 = vmatprep.subr.bf16.mxu0 %v4771
        %4899 = vmatpush1.bf16.msra.mxu0 %v4770
        %4900 = vmatprep.subr.bf16.mxu0 %v4773
        %4901 = vmatpush1.bf16.msra.mxu0 %v4772
        %4902 = vmatprep.subr.bf16.mxu0 %v4775
        %4903 = vmatpush1.bf16.msra.mxu0 %v4774
        %4904 = vmatprep.subr.bf16.mxu0 %v4777
        %4905 = vmatpush1.bf16.msra.mxu0 %v4776
        %4906 = vmatprep.subr.bf16.mxu0 %v4779
        %4907 = vmatpush1.bf16.msra.mxu0 %v4778
        %4908 = vmatprep.subr.bf16.mxu0 %v4781
        %4909 = vmatpush1.bf16.msra.mxu0 %v4780
        %4910 = vmatprep.mubr.bf16.mxu0 %v4451
        %4911 = vmatmul.mubr.bf16.gmra.mrb[0].mxu0 %v4450
        %v4912 = vpop.f32.mrb[0].mxu0
        %v4913 = vadd.f32 %v4551, %v4912
        %v4914 = vpop.f32.mrb[0].mxu0
        %v4915 = vadd.f32 %v4555, %v4914
        %v4916 = vpop.f32.mrb[0].mxu0
        %v4917 = vadd.f32 %v4551, %v4916
        %v4918 = vpop.f32.mrb[0].mxu0
        %v4919 = vadd.f32 %v4555, %v4918
        %4920 = vmatprep.mubr.bf16.mxu0 %v4455
        %4921 = vmatmul.mubr.bf16.gmra.mrb[0].mxu0 %v4454
        %v4922 = vpop.f32.mrb[0].mxu0
        %v4923 = vadd.f32 %v4551, %v4922
        %v4924 = vpop.f32.mrb[0].mxu0
        %v4925 = vadd.f32 %v4555, %v4924
        %v4926 = vpop.f32.mrb[0].mxu0
        %v4927 = vadd.f32 %v4551, %v4926
        %v4928 = vpop.f32.mrb[0].mxu0
        %v4929 = vadd.f32 %v4555, %v4928
        %4930 = vmatprep.mubr.bf16.mxu0 %v4459
        %4931 = vmatmul.mubr.bf16.gmra.mrb[0].mxu0 %v4458
        %v4932 = vpop.f32.mrb[0].mxu0
        %v4933 = vadd.f32 %v4551, %v4932
        %v4934 = vpop.f32.mrb[0].mxu0
        %v4935 = vadd.f32 %v4555, %v4934
        %v4936 = vpop.f32.mrb[0].mxu0
        %v4937 = vadd.f32 %v4551, %v4936
        %v4938 = vpop.f32.mrb[0].mxu0
        %v4939 = vadd.f32 %v4555, %v4938
        %4940 = vmatprep.mubr.bf16.mxu0 %v4463
        %4941 = vmatmul.mubr.bf16.gmra.mrb[0].mxu0 %v4462
        %v4942 = vpop.f32.mrb[0].mxu0
        %v4943 = vadd.f32 %v4551, %v4942
        %v4944 = vpop.f32.mrb[0].mxu0
        %v4945 = vadd.f32 %v4555, %v4944
        %v4946 = vpop.f32.mrb[0].mxu0
        %v4947 = vadd.f32 %v4551, %v4946
        %v4948 = vpop.f32.mrb[0].mxu0
        %v4949 = vadd.f32 %v4555, %v4948
        %4950 = vmatprep.mubr.bf16.mxu0 %v4467
        %4951 = vmatmul.mubr.bf16.gmra.mrb[0].mxu0 %v4466
        %v4952 = vpop.f32.mrb[0].mxu0
        %v4953 = vadd.f32 %v4551, %v4952
        %v4954 = vpop.f32.mrb[0].mxu0
        %v4955 = vadd.f32 %v4555, %v4954
        %v4956 = vpop.f32.mrb[0].mxu0
        %v4957 = vadd.f32 %v4551, %v4956
        %v4958 = vpop.f32.mrb[0].mxu0
        %v4959 = vadd.f32 %v4555, %v4958
        %4960 = vmatprep.mubr.bf16.mxu0 %v4471
        %4961 = vmatmul.mubr.bf16.gmra.mrb[0].mxu0 %v4470
        %v4962 = vpop.f32.mrb[0].mxu0
        %v4963 = vadd.f32 %v4551, %v4962
        %v4964 = vpop.f32.mrb[0].mxu0
        %v4965 = vadd.f32 %v4555, %v4964
        %v4966 = vpop.f32.mrb[0].mxu0
        %v4967 = vadd.f32 %v4551, %v4966
        %v4968 = vpop.f32.mrb[0].mxu0
        %v4969 = vadd.f32 %v4555, %v4968
        %4970 = vmatprep.mubr.bf16.mxu0 %v4475
        %4971 = vmatmul.mubr.bf16.gmra.mrb[0].mxu0 %v4474
        %v4972 = vpop.f32.mrb[0].mxu0
        %v4973 = vadd.f32 %v4551, %v4972
        %v4974 = vpop.f32.mrb[0].mxu0
        %v4975 = vadd.f32 %v4555, %v4974
        %v4976 = vpop.f32.mrb[0].mxu0
        %v4977 = vadd.f32 %v4551, %v4976
        %v4978 = vpop.f32.mrb[0].mxu0
        %v4979 = vadd.f32 %v4555, %v4978
        %4980 = vmatprep.mubr.bf16.mxu0 %v4479
        %4981 = vmatmul.mubr.bf16.gmra.mrb[0].mxu0 %v4478
        %v4982 = vpop.f32.mrb[0].mxu0
        %v4983 = vadd.f32 %v4551, %v4982
        %v4984 = vpop.f32.mrb[0].mxu0
        %v4985 = vadd.f32 %v4555, %v4984
        %v4986 = vpop.f32.mrb[0].mxu0
        %v4987 = vadd.f32 %v4551, %v4986
        %v4988 = vpop.f32.mrb[0].mxu0
        %v4989 = vadd.f32 %v4555, %v4988
        %4990 = vdwg.mxu0
        %4991 = vmatprep.subr.bf16.mxu0 %v4783
        %4992 = vmatpush1.bf16.msra.mxu0 %v4782
        %4993 = vmatprep.subr.bf16.mxu0 %v4785
        %4994 = vmatpush1.bf16.msra.mxu0 %v4784
        %4995 = vmatprep.subr.bf16.mxu0 %v4787
        %4996 = vmatpush1.bf16.msra.mxu0 %v4786
        %4997 = vmatprep.subr.bf16.mxu0 %v4789
        %4998 = vmatpush1.bf16.msra.mxu0 %v4788
        %4999 = vmatprep.subr.bf16.mxu0 %v4791
        %5000 = vmatpush1.bf16.msra.mxu0 %v4790
        %5001 = vmatprep.subr.bf16.mxu0 %v4793
        %5002 = vmatpush1.bf16.msra.mxu0 %v4792
        %5003 = vmatprep.subr.bf16.mxu0 %v4795
        %5004 = vmatpush1.bf16.msra.mxu0 %v4794
        %5005 = vmatprep.subr.bf16.mxu0 %v4797
        %5006 = vmatpush1.bf16.msra.mxu0 %v4796
        %5007 = vmatprep.subr.bf16.mxu0 %v4799
        %5008 = vmatpush1.bf16.msra.mxu0 %v4798
        %5009 = vmatprep.subr.bf16.mxu0 %v4801
        %5010 = vmatpush1.bf16.msra.mxu0 %v4800
        %5011 = vmatprep.subr.bf16.mxu0 %v4803
        %5012 = vmatpush1.bf16.msra.mxu0 %v4802
        %5013 = vmatprep.subr.bf16.mxu0 %v4805
        %5014 = vmatpush1.bf16.msra.mxu0 %v4804
        %5015 = vmatprep.subr.bf16.mxu0 %v4807
        %5016 = vmatpush1.bf16.msra.mxu0 %v4806
        %5017 = vmatprep.subr.bf16.mxu0 %v4809
        %5018 = vmatpush1.bf16.msra.mxu0 %v4808
        %5019 = vmatprep.subr.bf16.mxu0 %v4811
        %5020 = vmatpush1.bf16.msra.mxu0 %v4810
        %5021 = vmatprep.subr.bf16.mxu0 %v4813
        %5022 = vmatpush1.bf16.msra.mxu0 %v4812
        %5023 = vmatprep.mubr.bf16.mxu0 %v4453
        %5024 = vmatmul.mubr.bf16.gmra.mrb[0].mxu0 %v4452
        %v5025 = vpop.f32.mrb[0].mxu0
        %v5026 = vadd.f32 %v4913, %v5025
        %v5027 = vpop.f32.mrb[0].mxu0
        %v5028 = vadd.f32 %v4915, %v5027
        %v5029 = vpop.f32.mrb[0].mxu0
        %v5030 = vadd.f32 %v4917, %v5029
        %v5031 = vpop.f32.mrb[0].mxu0
        %v5032 = vadd.f32 %v4919, %v5031
        %5033 = vmatprep.mubr.bf16.mxu0 %v4457
        %5034 = vmatmul.mubr.bf16.gmra.mrb[0].mxu0 %v4456
        %v5035 = vpop.f32.mrb[0].mxu0
        %v5036 = vadd.f32 %v4923, %v5035
        %v5037 = vpop.f32.mrb[0].mxu0
        %v5038 = vadd.f32 %v4925, %v5037
        %v5039 = vpop.f32.mrb[0].mxu0
        %v5040 = vadd.f32 %v4927, %v5039
        %v5041 = vpop.f32.mrb[0].mxu0
        %v5042 = vadd.f32 %v4929, %v5041
        %5043 = vmatprep.mubr.bf16.mxu0 %v4461
        %5044 = vmatmul.mubr.bf16.gmra.mrb[0].mxu0 %v4460
        %v5045 = vpop.f32.mrb[0].mxu0
        %v5046 = vadd.f32 %v4933, %v5045
        %v5047 = vpop.f32.mrb[0].mxu0
        %v5048 = vadd.f32 %v4935, %v5047
        %v5049 = vpop.f32.mrb[0].mxu0
        %v5050 = vadd.f32 %v4937, %v5049
        %v5051 = vpop.f32.mrb[0].mxu0
        %v5052 = vadd.f32 %v4939, %v5051
        %5053 = vmatprep.mubr.bf16.mxu0 %v4465
        %5054 = vmatmul.mubr.bf16.gmra.mrb[0].mxu0 %v4464
        %v5055 = vpop.f32.mrb[0].mxu0
        %v5056 = vadd.f32 %v4943, %v5055
        %v5057 = vpop.f32.mrb[0].mxu0
        %v5058 = vadd.f32 %v4945, %v5057
        %v5059 = vpop.f32.mrb[0].mxu0
        %v5060 = vadd.f32 %v4947, %v5059
        %v5061 = vpop.f32.mrb[0].mxu0
        %v5062 = vadd.f32 %v4949, %v5061
        %5063 = vmatprep.mubr.bf16.mxu0 %v4469
        %5064 = vmatmul.mubr.bf16.gmra.mrb[0].mxu0 %v4468
        %v5065 = vpop.f32.mrb[0].mxu0
        %v5066 = vadd.f32 %v4953, %v5065
        %v5067 = vpop.f32.mrb[0].mxu0
        %v5068 = vadd.f32 %v4955, %v5067
        %v5069 = vpop.f32.mrb[0].mxu0
        %v5070 = vadd.f32 %v4957, %v5069
        %v5071 = vpop.f32.mrb[0].mxu0
        %v5072 = vadd.f32 %v4959, %v5071
        %5073 = vmatprep.mubr.bf16.mxu0 %v4473
        %5074 = vmatmul.mubr.bf16.gmra.mrb[0].mxu0 %v4472
        %v5075 = vpop.f32.mrb[0].mxu0
        %v5076 = vadd.f32 %v4963, %v5075
        %v5077 = vpop.f32.mrb[0].mxu0
        %v5078 = vadd.f32 %v4965, %v5077
        %v5079 = vpop.f32.mrb[0].mxu0
        %v5080 = vadd.f32 %v4967, %v5079
        %v5081 = vpop.f32.mrb[0].mxu0
        %v5082 = vadd.f32 %v4969, %v5081
        %5083 = vmatprep.mubr.bf16.mxu0 %v4477
        %5084 = vmatmul.mubr.bf16.gmra.mrb[0].mxu0 %v4476
        %v5085 = vpop.f32.mrb[0].mxu0
        %v5086 = vadd.f32 %v4973, %v5085
        %v5087 = vpop.f32.mrb[0].mxu0
        %v5088 = vadd.f32 %v4975, %v5087
        %v5089 = vpop.f32.mrb[0].mxu0
        %v5090 = vadd.f32 %v4977, %v5089
        %v5091 = vpop.f32.mrb[0].mxu0
        %v5092 = vadd.f32 %v4979, %v5091
        %5093 = vmatprep.mubr.bf16.mxu0 %v4481
        %5094 = vmatmul.mubr.bf16.gmra.mrb[0].mxu0 %v4480
        %v5095 = vpop.f32.mrb[0].mxu0
        %v5096 = vadd.f32 %v4983, %v5095
        %v5097 = vpop.f32.mrb[0].mxu0
        %v5098 = vadd.f32 %v4985, %v5097
        %v5099 = vpop.f32.mrb[0].mxu0
        %v5100 = vadd.f32 %v4987, %v5099
        %v5101 = vpop.f32.mrb[0].mxu0
        %v5102 = vadd.f32 %v4989, %v5101
        %5103 = vdwg.mxu0
        %v5104 = vmax.f32 %v5026, 0.0
        %v5105 = vmax.f32 %v5028, 0.0
        %v5106 = vmax.f32 %v5030, 0.0
        %v5107 = vmax.f32 %v5032, 0.0
        %v5108 = vmax.f32 %v5036, 0.0
        %v5109 = vmax.f32 %v5038, 0.0
        %v5110 = vmax.f32 %v5040, 0.0
        %v5111 = vmax.f32 %v5042, 0.0
        %v5112 = vmax.f32 %v5046, 0.0
        %v5113 = vmax.f32 %v5048, 0.0
        %v5114 = vmax.f32 %v5050, 0.0
        %v5115 = vmax.f32 %v5052, 0.0
        %v5116 = vmax.f32 %v5056, 0.0
        %v5117 = vmax.f32 %v5058, 0.0
        %v5118 = vmax.f32 %v5060, 0.0
        %v5119 = vmax.f32 %v5062, 0.0
        %v5120 = vmax.f32 %v5066, 0.0
        %v5121 = vmax.f32 %v5068, 0.0
        %v5122 = vmax.f32 %v5070, 0.0
        %v5123 = vmax.f32 %v5072, 0.0
        %v5124 = vmax.f32 %v5076, 0.0
        %v5125 = vmax.f32 %v5078, 0.0
        %v5126 = vmax.f32 %v5080, 0.0
        %v5127 = vmax.f32 %v5082, 0.0
        %v5128 = vmax.f32 %v5086, 0.0
        %v5129 = vmax.f32 %v5088, 0.0
        %v5130 = vmax.f32 %v5090, 0.0
        %v5131 = vmax.f32 %v5092, 0.0
        %v5132 = vmax.f32 %v5096, 0.0
        %v5133 = vmax.f32 %v5098, 0.0
        %v5134 = vmax.f32 %v5100, 0.0
        %v5135 = vmax.f32 %v5102, 0.0
        %v5136 = vpack.c.bf16 %v5106, %v5104
        %v5137 = vpack.c.bf16 %v5107, %v5105
        %v5138 = vpack.c.bf16 %v5110, %v5108
        %v5139 = vpack.c.bf16 %v5111, %v5109
        %v5140 = vpack.c.bf16 %v5114, %v5112
        %v5141 = vpack.c.bf16 %v5115, %v5113
        %v5142 = vpack.c.bf16 %v5118, %v5116
        %v5143 = vpack.c.bf16 %v5119, %v5117
        %v5144 = vpack.c.bf16 %v5122, %v5120
        %v5145 = vpack.c.bf16 %v5123, %v5121
        %v5146 = vpack.c.bf16 %v5126, %v5124
        %v5147 = vpack.c.bf16 %v5127, %v5125
        %v5148 = vpack.c.bf16 %v5130, %v5128
        %v5149 = vpack.c.bf16 %v5131, %v5129
        %v5150 = vpack.c.bf16 %v5134, %v5132
        %v5151 = vpack.c.bf16 %v5135, %v5133
        %v5152 = vld [vmem:[#allocation10] sm:$0xf]
        %v5153 = vld [vmem:[#allocation10 + $0x4] sm:$0xf]
        %v5154 = vld [vmem:[#allocation10 + $0x8] sm:$0xf]
        %v5155 = vld [vmem:[#allocation10 + $0xc] sm:$0xf]
        %v5156 = vld [vmem:[#allocation10 + $0x10] sm:$0xf]
        %v5157 = vld [vmem:[#allocation10 + $0x14] sm:$0xf]
        %v5158 = vld [vmem:[#allocation10 + $0x18] sm:$0xf]
        %v5159 = vld [vmem:[#allocation10 + $0x1c] sm:$0xf]
        %v5160 = vld [vmem:[#allocation10 + $0x20] sm:$0xf]
        %v5161 = vld [vmem:[#allocation10 + $0x24] sm:$0xf]
        %v5162 = vld [vmem:[#allocation10 + $0x28] sm:$0xf]
        %v5163 = vld [vmem:[#allocation10 + $0x2c] sm:$0xf]
        %v5164 = vld [vmem:[#allocation10 + $0x30] sm:$0xf]
        %v5165 = vld [vmem:[#allocation10 + $0x34] sm:$0xf]
        %v5166 = vld [vmem:[#allocation10 + $0x38] sm:$0xf]
        %v5167 = vld [vmem:[#allocation10 + $0x3c] sm:$0xf]
        %v5168 = vld [vmem:[#allocation10 + $0x40] sm:$0xf]
        %v5169 = vld [vmem:[#allocation10 + $0x44] sm:$0xf]
        %v5170 = vld [vmem:[#allocation10 + $0x48] sm:$0xf]
        %v5171 = vld [vmem:[#allocation10 + $0x4c] sm:$0xf]
        %v5172 = vld [vmem:[#allocation10 + $0x50] sm:$0xf]
        %v5173 = vld [vmem:[#allocation10 + $0x54] sm:$0xf]
        %v5174 = vld [vmem:[#allocation10 + $0x58] sm:$0xf]
        %v5175 = vld [vmem:[#allocation10 + $0x5c] sm:$0xf]
        %v5176 = vld [vmem:[#allocation10 + $0x60] sm:$0xf]
        %v5177 = vld [vmem:[#allocation10 + $0x64] sm:$0xf]
        %v5178 = vld [vmem:[#allocation10 + $0x68] sm:$0xf]
        %v5179 = vld [vmem:[#allocation10 + $0x6c] sm:$0xf]
        %v5180 = vld [vmem:[#allocation10 + $0x70] sm:$0xf]
        %v5181 = vld [vmem:[#allocation10 + $0x74] sm:$0xf]
        %v5182 = vld [vmem:[#allocation10 + $0x78] sm:$0xf]
        %v5183 = vld [vmem:[#allocation10 + $0x7c] sm:$0xf]
        %v5184 = vld [vmem:[%s6 + $0xe] sm:$0x1]
        %v5186 = vlaneseq
        %v5187 = vshrl.u32 %v5186, 7
        %v5188 = vsub.s32 0, %v5187
        %v5189 = vrot.slane %v5184, %v5188
        %v5223 = vunpack.c.l.b16 %v5152
        %v5224 = vunpack.c.l.b16 %v5153
        %v5225 = vunpack.c.l.b16 %v5154
        %v5226 = vunpack.c.l.b16 %v5155
        %v5227 = vunpack.c.l.b16 %v5156
        %v5228 = vunpack.c.l.b16 %v5157
        %v5229 = vunpack.c.l.b16 %v5158
        %v5230 = vunpack.c.l.b16 %v5159
        %v5231 = vunpack.c.l.b16 %v5160
        %v5232 = vunpack.c.l.b16 %v5161
        %v5233 = vunpack.c.l.b16 %v5162
        %v5234 = vunpack.c.l.b16 %v5163
        %v5235 = vunpack.c.l.b16 %v5164
        %v5236 = vunpack.c.l.b16 %v5165
        %v5237 = vunpack.c.l.b16 %v5166
        %v5238 = vunpack.c.l.b16 %v5167
        %v5239 = vunpack.c.l.b16 %v5168
        %v5240 = vunpack.c.l.b16 %v5169
        %v5241 = vunpack.c.l.b16 %v5170
        %v5242 = vunpack.c.l.b16 %v5171
        %v5243 = vunpack.c.l.b16 %v5172
        %v5244 = vunpack.c.l.b16 %v5173
        %v5245 = vunpack.c.l.b16 %v5174
        %v5246 = vunpack.c.l.b16 %v5175
        %v5247 = vunpack.c.l.b16 %v5176
        %v5248 = vunpack.c.l.b16 %v5177
        %v5249 = vunpack.c.l.b16 %v5178
        %v5250 = vunpack.c.l.b16 %v5179
        %v5251 = vunpack.c.l.b16 %v5180
        %v5252 = vunpack.c.l.b16 %v5181
        %v5253 = vunpack.c.l.b16 %v5182
        %v5254 = vunpack.c.l.b16 %v5183
        %v5255 = vpack.c.b16 %v5224, %v5223
        %v5256 = vpack.c.b16 %v5226, %v5225
        %v5257 = vpack.c.b16 %v5228, %v5227
        %v5258 = vpack.c.b16 %v5230, %v5229
        %v5259 = vpack.c.b16 %v5232, %v5231
        %v5260 = vpack.c.b16 %v5234, %v5233
        %v5261 = vpack.c.b16 %v5236, %v5235
        %v5262 = vpack.c.b16 %v5238, %v5237
        %v5263 = vpack.c.b16 %v5240, %v5239
        %v5264 = vpack.c.b16 %v5242, %v5241
        %v5265 = vpack.c.b16 %v5244, %v5243
        %v5266 = vpack.c.b16 %v5246, %v5245
        %v5267 = vpack.c.b16 %v5248, %v5247
        %v5268 = vpack.c.b16 %v5250, %v5249
        %v5269 = vpack.c.b16 %v5252, %v5251
        %v5270 = vpack.c.b16 %v5254, %v5253
        %5287 = vmatprep.subr.bf16.mxu0 0
        %5288 = vmatpush1.bf16.msra.mxu0 %v5255
        %5289 = vmatprep.subr.bf16.mxu0 0
        %5290 = vmatpush1.bf16.msra.mxu0 %v5256
        %5291 = vmatprep.subr.bf16.mxu0 0
        %5292 = vmatpush1.bf16.msra.mxu0 %v5257
        %5293 = vmatprep.subr.bf16.mxu0 0
        %5294 = vmatpush1.bf16.msra.mxu0 %v5258
        %5295 = vmatprep.subr.bf16.mxu0 0
        %5296 = vmatpush1.bf16.msra.mxu0 %v5259
        %5297 = vmatprep.subr.bf16.mxu0 0
        %5298 = vmatpush1.bf16.msra.mxu0 %v5260
        %5299 = vmatprep.subr.bf16.mxu0 0
        %5300 = vmatpush1.bf16.msra.mxu0 %v5261
        %5301 = vmatprep.subr.bf16.mxu0 0
        %5302 = vmatpush1.bf16.msra.mxu0 %v5262
        %5303 = vmatprep.subr.bf16.mxu0 0
        %5304 = vmatpush1.bf16.msra.mxu0 %v5263
        %5305 = vmatprep.subr.bf16.mxu0 0
        %5306 = vmatpush1.bf16.msra.mxu0 %v5264
        %5307 = vmatprep.subr.bf16.mxu0 0
        %5308 = vmatpush1.bf16.msra.mxu0 %v5265
        %5309 = vmatprep.subr.bf16.mxu0 0
        %5310 = vmatpush1.bf16.msra.mxu0 %v5266
        %5311 = vmatprep.subr.bf16.mxu0 0
        %5312 = vmatpush1.bf16.msra.mxu0 %v5267
        %5313 = vmatprep.subr.bf16.mxu0 0
        %5314 = vmatpush1.bf16.msra.mxu0 %v5268
        %5315 = vmatprep.subr.bf16.mxu0 0
        %5316 = vmatpush1.bf16.msra.mxu0 %v5269
        %5317 = vmatprep.subr.bf16.mxu0 0
        %5318 = vmatpush1.bf16.msra.mxu0 %v5270
        %5319 = vmatprep.mubr.bf16.mxu0 %v5137
        %5320 = vmatmul.mubr.bf16.gmra.mrb[0].mxu0 %v5136
        %v5321 = vpop.f32.mrb[0].mxu0
        %v5322 = vadd.f32 %v5189, %v5321
        %v5323 = vpop.f32.mrb[0].mxu0
        %v5324 = vpop.f32.mrb[0].mxu0
        %v5325 = vadd.f32 %v5189, %v5324
        %v5326 = vpop.f32.mrb[0].mxu0
        %5327 = vmatprep.mubr.bf16.mxu0 %v5139
        %5328 = vmatmul.mubr.bf16.gmra.mrb[0].mxu0 %v5138
        %v5329 = vpop.f32.mrb[0].mxu0
        %v5330 = vadd.f32 %v5189, %v5329
        %v5331 = vpop.f32.mrb[0].mxu0
        %v5332 = vpop.f32.mrb[0].mxu0
        %v5333 = vadd.f32 %v5189, %v5332
        %v5334 = vpop.f32.mrb[0].mxu0
        %5335 = vmatprep.mubr.bf16.mxu0 %v5141
        %5336 = vmatmul.mubr.bf16.gmra.mrb[0].mxu0 %v5140
        %v5337 = vpop.f32.mrb[0].mxu0
        %v5338 = vadd.f32 %v5189, %v5337
        %v5339 = vpop.f32.mrb[0].mxu0
        %v5340 = vpop.f32.mrb[0].mxu0
        %v5341 = vadd.f32 %v5189, %v5340
        %v5342 = vpop.f32.mrb[0].mxu0
        %5343 = vmatprep.mubr.bf16.mxu0 %v5143
        %5344 = vmatmul.mubr.bf16.gmra.mrb[0].mxu0 %v5142
        %v5345 = vpop.f32.mrb[0].mxu0
        %v5346 = vadd.f32 %v5189, %v5345
        %v5347 = vpop.f32.mrb[0].mxu0
        %v5348 = vpop.f32.mrb[0].mxu0
        %v5349 = vadd.f32 %v5189, %v5348
        %v5350 = vpop.f32.mrb[0].mxu0
        %5351 = vmatprep.mubr.bf16.mxu0 %v5145
        %5352 = vmatmul.mubr.bf16.gmra.mrb[0].mxu0 %v5144
        %v5353 = vpop.f32.mrb[0].mxu0
        %v5354 = vadd.f32 %v5189, %v5353
        %v5355 = vpop.f32.mrb[0].mxu0
        %v5356 = vpop.f32.mrb[0].mxu0
        %v5357 = vadd.f32 %v5189, %v5356
        %v5358 = vpop.f32.mrb[0].mxu0
        %5359 = vmatprep.mubr.bf16.mxu0 %v5147
        %5360 = vmatmul.mubr.bf16.gmra.mrb[0].mxu0 %v5146
        %v5361 = vpop.f32.mrb[0].mxu0
        %v5362 = vadd.f32 %v5189, %v5361
        %v5363 = vpop.f32.mrb[0].mxu0
        %v5364 = vpop.f32.mrb[0].mxu0
        %v5365 = vadd.f32 %v5189, %v5364
        %v5366 = vpop.f32.mrb[0].mxu0
        %5367 = vmatprep.mubr.bf16.mxu0 %v5149
        %5368 = vmatmul.mubr.bf16.gmra.mrb[0].mxu0 %v5148
        %v5369 = vpop.f32.mrb[0].mxu0
        %v5370 = vadd.f32 %v5189, %v5369
        %v5371 = vpop.f32.mrb[0].mxu0
        %v5372 = vpop.f32.mrb[0].mxu0
        %v5373 = vadd.f32 %v5189, %v5372
        %v5374 = vpop.f32.mrb[0].mxu0
        %5375 = vmatprep.mubr.bf16.mxu0 %v5151
        %5376 = vmatmul.mubr.bf16.gmra.mrb[0].mxu0 %v5150
        %v5377 = vpop.f32.mrb[0].mxu0
        %v5378 = vadd.f32 %v5189, %v5377
        %v5379 = vpop.f32.mrb[0].mxu0
        %v5380 = vpop.f32.mrb[0].mxu0
        %v5381 = vadd.f32 %v5189, %v5380
        %v5382 = vpop.f32.mrb[0].mxu0
        %5383 = vdwg.mxu0
        %v5384 = vmax.f32 %v5322, 0.0
        %v5385 = vmax.f32 %v5325, 0.0
        %v5386 = vmax.f32 %v5330, 0.0
        %v5387 = vmax.f32 %v5333, 0.0
        %v5388 = vmax.f32 %v5338, 0.0
        %v5389 = vmax.f32 %v5341, 0.0
        %v5390 = vmax.f32 %v5346, 0.0
        %v5391 = vmax.f32 %v5349, 0.0
        %v5392 = vmax.f32 %v5354, 0.0
        %v5393 = vmax.f32 %v5357, 0.0
        %v5394 = vmax.f32 %v5362, 0.0
        %v5395 = vmax.f32 %v5365, 0.0
        %v5396 = vmax.f32 %v5370, 0.0
        %v5397 = vmax.f32 %v5373, 0.0
        %v5398 = vmax.f32 %v5378, 0.0
        %v5399 = vmax.f32 %v5381, 0.0
        %v5400 = vpack.c.bf16 %v5385, %v5384
        %v5401 = vpack.c.bf16 %v5387, %v5386
        %v5402 = vpack.c.bf16 %v5389, %v5388
        %v5403 = vpack.c.bf16 %v5391, %v5390
        %v5404 = vpack.c.bf16 %v5393, %v5392
        %v5405 = vpack.c.bf16 %v5395, %v5394
        %v5406 = vpack.c.bf16 %v5397, %v5396
        %v5407 = vpack.c.bf16 %v5399, %v5398
        %v5408 = vld [vmem:[#allocation11] sm:$0xf]
        %v5409 = vld [vmem:[#allocation11 + $0x4] sm:$0xf]
        %v5410 = vld [vmem:[#allocation11 + $0x8] sm:$0xf]
        %v5411 = vld [vmem:[#allocation11 + $0xc] sm:$0xf]
        %v5412 = vld [vmem:[#allocation11 + $0x10] sm:$0xf]
        %v5413 = vld [vmem:[#allocation11 + $0x14] sm:$0xf]
        %v5414 = vld [vmem:[#allocation11 + $0x18] sm:$0xf]
        %v5415 = vld [vmem:[#allocation11 + $0x1c] sm:$0xf]
        %v5416 = vld [vmem:[#allocation11 + $0x20] sm:$0xf]
        %v5417 = vld [vmem:[#allocation11 + $0x24] sm:$0xf]
        %v5418 = vld [vmem:[#allocation11 + $0x28] sm:$0xf]
        %v5419 = vld [vmem:[#allocation11 + $0x2c] sm:$0xf]
        %v5420 = vld [vmem:[#allocation11 + $0x30] sm:$0xf]
        %v5421 = vld [vmem:[#allocation11 + $0x34] sm:$0xf]
        %v5422 = vld [vmem:[#allocation11 + $0x38] sm:$0xf]
        %v5423 = vld [vmem:[#allocation11 + $0x3c] sm:$0xf]
        %v5424 = vld [vmem:[%s6 + $0xf] sm:$0x1]
        %v5426 = vlaneseq
        %v5427 = vshrl.u32 %v5426, 7
        %v5428 = vsub.s32 0, %v5427
        %v5429 = vrot.slane %v5424, %v5428
        %v5447 = vunpack.c.l.b16 %v5408
        %v5448 = vunpack.c.l.b16 %v5409
        %v5449 = vunpack.c.l.b16 %v5410
        %v5450 = vunpack.c.l.b16 %v5411
        %v5451 = vunpack.c.l.b16 %v5412
        %v5452 = vunpack.c.l.b16 %v5413
        %v5453 = vunpack.c.l.b16 %v5414
        %v5454 = vunpack.c.l.b16 %v5415
        %v5455 = vunpack.c.l.b16 %v5416
        %v5456 = vunpack.c.l.b16 %v5417
        %v5457 = vunpack.c.l.b16 %v5418
        %v5458 = vunpack.c.l.b16 %v5419
        %v5459 = vunpack.c.l.b16 %v5420
        %v5460 = vunpack.c.l.b16 %v5421
        %v5461 = vunpack.c.l.b16 %v5422
        %v5462 = vunpack.c.l.b16 %v5423
        %v5463 = vpack.c.b16 %v5448, %v5447
        %v5464 = vpack.c.b16 %v5450, %v5449
        %v5465 = vpack.c.b16 %v5452, %v5451
        %v5466 = vpack.c.b16 %v5454, %v5453
        %v5467 = vpack.c.b16 %v5456, %v5455
        %v5468 = vpack.c.b16 %v5458, %v5457
        %v5469 = vpack.c.b16 %v5460, %v5459
        %v5470 = vpack.c.b16 %v5462, %v5461
        %5479 = vmatprep.subr.bf16.mxu0 0
        %5480 = vmatpush1.bf16.msra.mxu0 %v5463
        %5481 = vmatprep.subr.bf16.mxu0 0
        %5482 = vmatpush1.bf16.msra.mxu0 %v5464
        %5483 = vmatprep.subr.bf16.mxu0 0
        %5484 = vmatpush1.bf16.msra.mxu0 %v5465
        %5485 = vmatprep.subr.bf16.mxu0 0
        %5486 = vmatpush1.bf16.msra.mxu0 %v5466
        %5487 = vmatprep.subr.bf16.mxu0 0
        %5488 = vmatpush1.bf16.msra.mxu0 %v5467
        %5489 = vmatprep.subr.bf16.mxu0 0
        %5490 = vmatpush1.bf16.msra.mxu0 %v5468
        %5491 = vmatprep.subr.bf16.mxu0 0
        %5492 = vmatpush1.bf16.msra.mxu0 %v5469
        %5493 = vmatprep.subr.bf16.mxu0 0
        %5494 = vmatpush1.bf16.msra.mxu0 %v5470
        %5495 = vmatprep.subr.bf16.mxu0 0
        %5496 = vmatpush1.bf16.msra.mxu0 0
        %5497 = vmatprep.subr.bf16.mxu0 0
        %5498 = vmatpush1.bf16.msra.mxu0 0
        %5499 = vmatprep.subr.bf16.mxu0 0
        %5500 = vmatpush1.bf16.msra.mxu0 0
        %5501 = vmatprep.subr.bf16.mxu0 0
        %5502 = vmatpush1.bf16.msra.mxu0 0
        %5503 = vmatprep.subr.bf16.mxu0 0
        %5504 = vmatpush1.bf16.msra.mxu0 0
        %5505 = vmatprep.subr.bf16.mxu0 0
        %5506 = vmatpush1.bf16.msra.mxu0 0
        %5507 = vmatprep.subr.bf16.mxu0 0
        %5508 = vmatpush1.bf16.msra.mxu0 0
        %5509 = vmatprep.subr.bf16.mxu0 0
        %5510 = vmatpush1.bf16.msra.mxu0 0
        %5511 = vmatprep.mubr.bf16.mxu0 0
        %5512 = vmatmul.mubr.bf16.gmra.mrb[0].mxu0 %v5400
        %v5513 = vpop.f32.mrb[0].mxu0
        %v5514 = vadd.f32 %v5429, %v5513
        %v5515 = vpop.f32.mrb[0].mxu0
        %v5516 = vpop.f32.mrb[0].mxu0
        %v5517 = vadd.f32 %v5429, %v5516
        %v5518 = vpop.f32.mrb[0].mxu0
        %5519 = vmatprep.mubr.bf16.mxu0 0
        %5520 = vmatmul.mubr.bf16.gmra.mrb[0].mxu0 %v5401
        %v5521 = vpop.f32.mrb[0].mxu0
        %v5522 = vadd.f32 %v5429, %v5521
        %v5523 = vpop.f32.mrb[0].mxu0
        %v5524 = vpop.f32.mrb[0].mxu0
        %v5525 = vadd.f32 %v5429, %v5524
        %v5526 = vpop.f32.mrb[0].mxu0
        %5527 = vmatprep.mubr.bf16.mxu0 0
        %5528 = vmatmul.mubr.bf16.gmra.mrb[0].mxu0 %v5402
        %v5529 = vpop.f32.mrb[0].mxu0
        %v5530 = vadd.f32 %v5429, %v5529
        %v5531 = vpop.f32.mrb[0].mxu0
        %v5532 = vpop.f32.mrb[0].mxu0
        %v5533 = vadd.f32 %v5429, %v5532
        %v5534 = vpop.f32.mrb[0].mxu0
        %5535 = vmatprep.mubr.bf16.mxu0 0
        %5536 = vmatmul.mubr.bf16.gmra.mrb[0].mxu0 %v5403
        %v5537 = vpop.f32.mrb[0].mxu0
        %v5538 = vadd.f32 %v5429, %v5537
        %v5539 = vpop.f32.mrb[0].mxu0
        %v5540 = vpop.f32.mrb[0].mxu0
        %v5541 = vadd.f32 %v5429, %v5540
        %v5542 = vpop.f32.mrb[0].mxu0
        %5543 = vmatprep.mubr.bf16.mxu0 0
        %5544 = vmatmul.mubr.bf16.gmra.mrb[0].mxu0 %v5404
        %v5545 = vpop.f32.mrb[0].mxu0
        %v5546 = vadd.f32 %v5429, %v5545
        %v5547 = vpop.f32.mrb[0].mxu0
        %v5548 = vpop.f32.mrb[0].mxu0
        %v5549 = vadd.f32 %v5429, %v5548
        %v5550 = vpop.f32.mrb[0].mxu0
        %5551 = vmatprep.mubr.bf16.mxu0 0
        %5552 = vmatmul.mubr.bf16.gmra.mrb[0].mxu0 %v5405
        %v5553 = vpop.f32.mrb[0].mxu0
        %v5554 = vadd.f32 %v5429, %v5553
        %v5555 = vpop.f32.mrb[0].mxu0
        %v5556 = vpop.f32.mrb[0].mxu0
        %v5557 = vadd.f32 %v5429, %v5556
        %v5558 = vpop.f32.mrb[0].mxu0
        %5559 = vmatprep.mubr.bf16.mxu0 0
        %5560 = vmatmul.mubr.bf16.gmra.mrb[0].mxu0 %v5406
        %v5561 = vpop.f32.mrb[0].mxu0
        %v5562 = vadd.f32 %v5429, %v5561
        %v5563 = vpop.f32.mrb[0].mxu0
        %v5564 = vpop.f32.mrb[0].mxu0
        %v5565 = vadd.f32 %v5429, %v5564
        %v5566 = vpop.f32.mrb[0].mxu0
        %5567 = vmatprep.mubr.bf16.mxu0 0
        %5568 = vmatmul.mubr.bf16.gmra.mrb[0].mxu0 %v5407
        %v5569 = vpop.f32.mrb[0].mxu0
        %v5570 = vadd.f32 %v5429, %v5569
        %v5571 = vpop.f32.mrb[0].mxu0
        %v5572 = vpop.f32.mrb[0].mxu0
        %v5573 = vadd.f32 %v5429, %v5572
        %v5574 = vpop.f32.mrb[0].mxu0
        %5575 = vdwg.mxu0
        %5576 = vst [vmem:[%s370] sm:$0xff] %v5514
        %5577 = vst [vmem:[%s370 + $0x8] sm:$0xff] %v5517
        %5578 = vst [vmem:[%s370 + $0x10] sm:$0xff] %v5522
        %5579 = vst [vmem:[%s370 + $0x18] sm:$0xff] %v5525
        %5580 = vst [vmem:[%s370 + $0x20] sm:$0xff] %v5530
        %5581 = vst [vmem:[%s370 + $0x28] sm:$0xff] %v5533
        %5582 = vst [vmem:[%s370 + $0x30] sm:$0xff] %v5538
        %5583 = vst [vmem:[%s370 + $0x38] sm:$0xff] %v5541
        %5584 = vst [vmem:[%s370 + $0x40] sm:$0xff] %v5546
        %5585 = vst [vmem:[%s370 + $0x48] sm:$0xff] %v5549
        %5586 = vst [vmem:[%s370 + $0x50] sm:$0xff] %v5554
        %5587 = vst [vmem:[%s370 + $0x58] sm:$0xff] %v5557
        %5588 = vst [vmem:[%s370 + $0x60] sm:$0xff] %v5562
        %5589 = vst [vmem:[%s370 + $0x68] sm:$0xff] %v5565
        %5590 = vst [vmem:[%s370 + $0x70] sm:$0xff] %v5570
        %5591 = vst [vmem:[%s370 + $0x78] sm:$0xff] %v5573
        %s5592 = sand.u32 %s187, 1
        %s5593 = scalar_lea.sflag [#allocation4], %s5592
        %s5594 = sand.u32 %s187, 1
        %s5595 = smul.addr %s5594, 128
        %s5596 = scalar_lea.vmem [#allocation13], %s5595
        // Predicated region
        $region73: #{tpu_custom_call.1} parent=47 // pred_check
          %p5597 = pneg %p197
        $region74: #{tpu_custom_call.1} parent=47 // pred_check_branch
          %5599 = sbr.rel (%p5597) target = $region76
        $region75: #{tpu_custom_call.1} parent=47 // pred_region
          %s5600 = smul.u32 16, %s27
          %s5602 = ssub.s32 2048, 2048
          %5603 = vsyncadd %s5593, %s5602
          %s5604 = smul.addr %s5600, 128
          %s5605 = scalar_lea.hbm %s7, %s5604
          %s5606 = sshll.u32 %s5596, 4
          %s5607 = int_to_ptr.vmem [resolvable:$true] %s5606
          %5612 = dma.vmem_to_hbm [thread:$0]  %s5607, 2048, %s5605, %s5593, 128, 128, 8
        $region76: #{tpu_custom_call.1} parent=47 // pred_fallthru
          _
      $region48: #{tpu_custom_call.1} parent=5 // pred_fallthru
        _
      %p5613 = scmp.le.s32.totalorder 2, %s22
      // Predicated region
      $region77: #{tpu_custom_call.1} parent=5 // pred_check
        %p5614 = pneg %p5613
      $region78: #{tpu_custom_call.1} parent=5 // pred_check_branch
        %5616 = sbr.rel (%p5614) target = $region80
      $region79: #{tpu_custom_call.1} parent=5 // pred_region
        %s5617 = ssub.s32 %s22, 2
        // Predicated region
        $region81: #{tpu_custom_call.1} parent=79 // pred_check
          %p5618 = pneg %p203
        $region82: #{tpu_custom_call.1} parent=79 // pred_check_branch
          %5620 = sbr.rel (%p5618) target = $region84
        $region83: #{tpu_custom_call.1} parent=79 // pred_region
          %s5621 = sand.u32 %s188, 1
          %s5622 = scalar_lea.sflag [#allocation4], %s5621
          %s5623 = sand.u32 %s188, 1
          %s5624 = smul.addr %s5623, 128
          %s5625 = scalar_lea.vmem [#allocation13], %s5624
          %5626 = dma.done %s5622, 2048
        $region84: #{tpu_custom_call.1} parent=79 // pred_fallthru
          _
      $region80: #{tpu_custom_call.1} parent=5 // pred_fallthru
        _
    $region6: #{tpu_custom_call.1} parent=1 // loop_footer
      %s26 = sadd.s32 1, %s22
    $region7: #{tpu_custom_call.1} parent=1 // loop_footer_branch
      %21 = sbr.rel target = $region3
    $region8: #{tpu_custom_call.1} parent=1 // loop_exit
      _
    %5627 = vsyncpa [#allocation3], 1
    %s5628 = scalar_lea.sflag [#allocation3], 1
    %5629 = vsyncpa %s5628, 1
    %5630 = vsyncpa [#allocation6], 1
    %5631 = vsyncpa [#allocation9], 1
    %5632 = vsyncpa [#allocation12], 1
    %5633 = vsyncpa [#allocation4], 1
    %s5634 = scalar_lea.sflag [#allocation4], 1
    %5635 = vsyncpa %s5634, 1

</llo_original>
